<compile_context>
chip_gen: v7x
topology: tpu7x:2x2x1
jax: 0.10.0
libtpu: 0.0.40
codegen_flags: <defaults>
</compile_context>

<pallas_src>
import functools

import numpy as np
import jax
import jax.numpy as jnp
from jax.experimental import pallas as pl
from jax.experimental.pallas import tpu as pltpu

NUM_FREQ = 10
IN_DIM = 3
OUT_DIM = 2 * NUM_FREQ * IN_DIM          # 60
GROUP = 32                               # original rows packed per lane-dense row
PACK_IN = GROUP * IN_DIM                 # 96
PACK_OUT = GROUP * OUT_DIM               # 1920 = 15 * 128 -> unmasked lane-dense stores


def _build_selection() -> np.ndarray:
    """Exact 0/1 replication matrix for the packed layout (bf16-exact values).

    Packed output column b = r*60 + j reads packed input column a = r*3 + (j % 3),
    so sel[a, b] = 1 there and 0 elsewhere.
    """
    sel = np.zeros((PACK_IN, PACK_OUT), dtype=np.float32)
    for r in range(GROUP):
        for j in range(OUT_DIM):
            sel[r * IN_DIM + (j % IN_DIM), r * OUT_DIM + j] = 1.0
    return sel


def _build_freq_phase():
    """Per-output-lane frequency (f32(2*pi*i), same rounding as the reference)
    and phase offset (0 -> sin columns, pi/2 -> cos columns)."""
    j = np.arange(PACK_OUT) % OUT_DIM
    i = (j % (OUT_DIM // 2)) // IN_DIM
    freq = (2.0 * np.pi * i).astype(np.float32).reshape(1, PACK_OUT)
    phase = np.where(j >= OUT_DIM // 2, 0.5 * np.pi, 0.0).astype(np.float32)
    return freq, phase.reshape(1, PACK_OUT)


_SEL_NP = _build_selection()
_FREQ_NP, _PHASE_NP = _build_freq_phase()


def _pos_embed_kernel(x_ref, sel_ref, freq_ref, phase_ref, o_ref):
    # 3-way bf16 split of x (x == x1 + x2 + x3 to ~27 mantissa bits): three
    # native single-pass bf16 MXU matmuls against the exact 0/1 selection
    # matrix replicate the packed coordinates into the 1920-wide column layout
    # at full f32 fidelity.  Exactly 3 MXU passes (vs up to 6 for an emulated
    # f32xf32 dot), keeping the MXU under the HBM store bound on v5e/v6e.
    x = x_ref[...]                                    # (tm, 96) f32
    x1 = x.astype(jnp.bfloat16)
    r1 = x - x1.astype(jnp.float32)
    x2 = r1.astype(jnp.bfloat16)
    x3 = (r1 - x2.astype(jnp.float32)).astype(jnp.bfloat16)

    sel = sel_ref[...]                                # (96, 1920) bf16, exact 0/1
    rep = jnp.dot(x1, sel, preferred_element_type=jnp.float32)
    rep = rep + jnp.dot(x2, sel, preferred_element_type=jnp.float32)
    rep = rep + jnp.dot(x3, sel, preferred_element_type=jnp.float32)

    # One sin() covers every column since cos(z) == sin(z + pi/2).  freq/phase
    # are precomputed (1, 1920) rows -> no per-step iota/mod chain on the VPU.
    o_ref[...] = jnp.sin(rep * freq_ref[...] + phase_ref[...]).astype(o_ref.dtype)


def _round_up(a: int, b: int) -> int:
    return ((a + b - 1) // b) * b


@functools.partial(jax.jit, static_argnames=("block_rows", "out_dtype"))
def position_embedder(x: jax.Array, block_rows: int = 512,
                      out_dtype=jnp.float32) -> jax.Array:
    """Pallas TPU PositionEmbedder.forward.  x: (N, 3) f32 -> (N, 60).

    When N % 32 == 0 the packed views are pure metadata reshapes (no padding,
    no trailing slice copy).  out_dtype=jnp.bfloat16 halves HBM writeback for
    consumers that tolerate ~1e-3 error (default f32 matches the reference).
    """
    n, d = x.shape
    assert d == IN_DIM, f"expected last dim {IN_DIM}, got {d}"

    # Pad only to a multiple of GROUP (<= 31 rows), never to a multiple of the
    # tile, so general N no longer costs an extra full pass over the output.
    n32 = _round_up(n, GROUP)
    if n32 != n:
        x = jnp.pad(x, ((0, n32 - n), (0, 0)))
    m = n32 // GROUP
    x_packed = x.reshape(m, PACK_IN)                  # lane-dense packed view

    # Tile rows: multiple of 8, aim for >= 4 grid steps (v7x two-TC balance),
    # capped by block_rows.  Ragged last block is masked by Pallas.
    block_rows = max(8, (block_rows // 8) * 8)
    tm = min(block_rows, max(8, _round_up(pl.cdiv(m, 4), 8)))
    if tm > m:
        tm = m                                        # single full-extent block
    grid = (pl.cdiv(m, tm),)

    sel = jnp.asarray(_SEL_NP, dtype=jnp.bfloat16)    # 0/1 -> exact in bf16
    freq = jnp.asarray(_FREQ_NP)
    phase = jnp.asarray(_PHASE_NP)

    out_itemsize = jnp.dtype(out_dtype).itemsize
    cost = pl.CostEstimate(
        flops=6 * m * PACK_IN * PACK_OUT + 4 * m * PACK_OUT,
        transcendentals=m * PACK_OUT,
        bytes_accessed=(m * PACK_IN * 4 + _SEL_NP.size * 2
                        + 2 * PACK_OUT * 4 + m * PACK_OUT * out_itemsize),
    )

    out_packed = pl.pallas_call(
        _pos_embed_kernel,
        out_shape=jax.ShapeDtypeStruct((m, PACK_OUT), out_dtype),
        grid_spec=pltpu.PrefetchScalarGridSpec(
            num_scalar_prefetch=0,
            grid=grid,
            in_specs=[
                pl.BlockSpec((tm, PACK_IN), lambda i: (i, 0)),
                pl.BlockSpec((PACK_IN, PACK_OUT), lambda i: (0, 0)),
                pl.BlockSpec((1, PACK_OUT), lambda i: (0, 0)),
                pl.BlockSpec((1, PACK_OUT), lambda i: (0, 0)),
            ],
            out_specs=pl.BlockSpec((tm, PACK_OUT), lambda i: (i, 0)),
        ),
        compiler_params=pltpu.CompilerParams(
            dimension_semantics=("parallel",),
            vmem_limit_bytes=48 * 1024 * 1024,
        ),
        cost_estimate=cost,
    )(x_packed, sel, freq, phase)

    out = out_packed.reshape(n32, OUT_DIM)            # pure row-major view
    if n32 != n:
        out = out[:n, :]                              # only for N % 32 != 0
    return out


def _reference(x):
    parts = [jnp.sin(2.0 * np.pi * i * x) for i in range(NUM_FREQ)]
    parts += [jnp.cos(2.0 * np.pi * i * x) for i in range(NUM_FREQ)]
    return jnp.concatenate(parts, axis=1)


if __name__ == "__main__":
    key = jax.random.PRNGKey(0)
    keys = jax.random.split(key, 3)

    # n=8: tiny single block; n=96: multiple of 32 (no pad, no trailing slice);
    # n=1000: padded to 1024, 4-step grid, trailing trim.
    for k, n in zip(keys, (8, 96, 1000)):
        x = jax.random.uniform(k, (n, IN_DIM), dtype=jnp.float32)
        out = jax.block_until_ready(position_embedder(x))
        ref = _reference(x)
        assert out.shape == (n, OUT_DIM) and out.dtype == jnp.float32
        assert jnp.allclose(out, ref, atol=5e-5, rtol=1e-5), f"mismatch at n={n}"

    # Optional bf16 writeback path (halves HBM store traffic on v5e/v6e).
    xb = jax.random.uniform(keys[0], (96, IN_DIM), dtype=jnp.float32)
    outb = jax.block_until_ready(position_embedder(xb, out_dtype=jnp.bfloat16))
    assert outb.shape == (96, OUT_DIM) and outb.dtype == jnp.bfloat16
    assert jnp.allclose(outb.astype(jnp.float32), _reference(xb), atol=2e-2)

    print("KERNEL_OK")
</pallas_src>

<mosaic_0001>
module attributes {stable_mosaic.version = 11 : i64} {
  func.func @_pos_embed_kernel(%arg0: i32, %arg1: memref<1x96xf32, #tpu.memory_space<vmem>>, %arg2: memref<96x1920xbf16, #tpu.memory_space<vmem>>, %arg3: memref<1x1920xf32, #tpu.memory_space<vmem>>, %arg4: memref<1x1920xf32, #tpu.memory_space<vmem>>, %arg5: memref<1x1920xf32, #tpu.memory_space<vmem>>) attributes {dimension_semantics = [#tpu.dimension_semantics<parallel>], iteration_bounds = array<i64: 1>, scalar_prefetch = 0 : i64, scratch_operands = 0 : i64, tpu.core_type = #tpu.core_type<tc>, window_params = [{transform_indices = @transform_0, window_bounds = array<i64: 1, 96>}, {pipeline_mode = #tpu.pipeline_mode<synchronous>, transform_indices = @transform_1, window_bounds = array<i64: 96, 1920>}, {pipeline_mode = #tpu.pipeline_mode<synchronous>, transform_indices = @transform_2, window_bounds = array<i64: 1, 1920>}, {pipeline_mode = #tpu.pipeline_mode<synchronous>, transform_indices = @transform_3, window_bounds = array<i64: 1, 1920>}, {transform_indices = @transform_4, window_bounds = array<i64: 1, 1920>}]} {
    %c0 = arith.constant 0 : index
    %c0_0 = arith.constant 0 : index
    %0 = vector.load %arg1[%c0, %c0_0] : memref<1x96xf32, #tpu.memory_space<vmem>>, vector<1x96xf32>
    %1 = arith.truncf %0 : vector<1x96xf32> to vector<1x96xbf16>
    %2 = arith.extf %1 : vector<1x96xbf16> to vector<1x96xf32>
    %3 = arith.subf %0, %2 : vector<1x96xf32>
    %4 = arith.truncf %3 : vector<1x96xf32> to vector<1x96xbf16>
    %5 = arith.extf %4 : vector<1x96xbf16> to vector<1x96xf32>
    %6 = arith.subf %3, %5 : vector<1x96xf32>
    %7 = arith.truncf %6 : vector<1x96xf32> to vector<1x96xbf16>
    %c0_1 = arith.constant 0 : index
    %c0_2 = arith.constant 0 : index
    %8 = vector.load %arg2[%c0_1, %c0_2] : memref<96x1920xbf16, #tpu.memory_space<vmem>>, vector<96x1920xbf16>
    %cst = arith.constant dense<0.000000e+00> : vector<1x1920xf32>
    %9 = tpu.matmul %1, %8, %cst {dimension_numbers = #tpu.dot_dimension_numbers<[1], [0], [0], [1], [0, 0, 1, 1], [], []>} : vector<1x96xbf16>, vector<96x1920xbf16>, vector<1x1920xf32> -> vector<1x1920xf32>
    %cst_3 = arith.constant dense<0.000000e+00> : vector<1x1920xf32>
    %10 = tpu.matmul %4, %8, %cst_3 {dimension_numbers = #tpu.dot_dimension_numbers<[1], [0], [0], [1], [0, 0, 1, 1], [], []>} : vector<1x96xbf16>, vector<96x1920xbf16>, vector<1x1920xf32> -> vector<1x1920xf32>
    %11 = arith.addf %9, %10 : vector<1x1920xf32>
    %cst_4 = arith.constant dense<0.000000e+00> : vector<1x1920xf32>
    %12 = tpu.matmul %7, %8, %cst_4 {dimension_numbers = #tpu.dot_dimension_numbers<[1], [0], [0], [1], [0, 0, 1, 1], [], []>} : vector<1x96xbf16>, vector<96x1920xbf16>, vector<1x1920xf32> -> vector<1x1920xf32>
    %13 = arith.addf %11, %12 : vector<1x1920xf32>
    %c0_5 = arith.constant 0 : index
    %c0_6 = arith.constant 0 : index
    %14 = vector.load %arg3[%c0_5, %c0_6] : memref<1x1920xf32, #tpu.memory_space<vmem>>, vector<1x1920xf32>
    %15 = arith.mulf %13, %14 : vector<1x1920xf32>
    %c0_7 = arith.constant 0 : index
    %c0_8 = arith.constant 0 : index
    %16 = vector.load %arg4[%c0_7, %c0_8] : memref<1x1920xf32, #tpu.memory_space<vmem>>, vector<1x1920xf32>
    %17 = arith.addf %15, %16 : vector<1x1920xf32>
    %18 = math.sin %17 : vector<1x1920xf32>
    %c0_9 = arith.constant 0 : index
    %c0_10 = arith.constant 0 : index
    %19 = vector.load %arg5[%c0_9, %c0_10] : memref<1x1920xf32, #tpu.memory_space<vmem>>, vector<1x1920xf32>
    tpu.vector_store %arg5[%c0_9, %c0_10], %18 {strides = array<i32>} : memref<1x1920xf32, #tpu.memory_space<vmem>>, vector<1x1920xf32>,
    return
  }
  func.func @transform_0(%arg0: i32) -> (i32, i32) {
    %c0_i32 = arith.constant 0 : i32
    %c0_i32_0 = arith.constant 0 : i32
    return %arg0, %c0_i32 : i32, i32
  }
  func.func @transform_1(%arg0: i32) -> (i32, i32) {
    %c0_i32 = arith.constant 0 : i32
    %c0_i32_0 = arith.constant 0 : i32
    %c0_i32_1 = arith.constant 0 : i32
    return %c0_i32, %c0_i32_0 : i32, i32
  }
  func.func @transform_2(%arg0: i32) -> (i32, i32) {
    %c0_i32 = arith.constant 0 : i32
    %c0_i32_0 = arith.constant 0 : i32
    %c0_i32_1 = arith.constant 0 : i32
    return %c0_i32, %c0_i32_0 : i32, i32
  }
  func.func @transform_3(%arg0: i32) -> (i32, i32) {
    %c0_i32 = arith.constant 0 : i32
    %c0_i32_0 = arith.constant 0 : i32
    %c0_i32_1 = arith.constant 0 : i32
    return %c0_i32, %c0_i32_0 : i32, i32
  }
  func.func @transform_4(%arg0: i32) -> (i32, i32) {
    %c0_i32 = arith.constant 0 : i32
    %c0_i32_0 = arith.constant 0 : i32
    return %arg0, %c0_i32 : i32, i32
  }
}

</mosaic_0001>

<llo_original>
// kernel: position_embedder.1
$region0: #{position_embedder.1}
  #allocation0 [shape = 'u32[]', space=smem, size = 0x4, offset = 0x4, fixed_abs, tag = 'smem constant byte address 0x4 - core index']
  #allocation1 [shape = 'u32[144,128]{1,0:T(1,128)}', space=vmem, size = 0x12000, scoped, tag = 'internal scratch']
  %s0 = inlined_call_operand.vmem [shape: f32[1,96], index: 0, kind: input, shape index: {}]
  %s1 = inlined_call_operand.vmem [shape: bf16[96,1920], index: 1, kind: input, shape index: {}]
  %s2 = inlined_call_operand.vmem [shape: f32[1,1920], index: 2, kind: input, shape index: {}]
  %s3 = inlined_call_operand.vmem [shape: f32[1,1920], index: 3, kind: input, shape index: {}]
  %s4 = inlined_call_operand.vmem [shape: f32[1,1920], index: 4, kind: output, shape index: {}]
  %s5 = sld [smem:[#allocation0]]
  $region26: #{position_embedder.1} parent=0
    _
  %s7 = ssub.s32 1, %s5
  %s8 = scalar_select 0, %s7, %s5
  // Predicated region
  $region2: #{position_embedder.1} parent=0 // pred_check
    _
  $region3: #{position_embedder.1} parent=0 // pred_check_branch
    %10 = sbr.rel (0) target = $region5
  $region4: #{position_embedder.1} parent=0 // pred_region
    _
  $region5: #{position_embedder.1} parent=0 // pred_fallthru
    _
  // Predicated region
  $region6: #{position_embedder.1} parent=0 // pred_check
    _
  $region7: #{position_embedder.1} parent=0 // pred_check_branch
    %12 = sbr.rel (0) target = $region9
  $region8: #{position_embedder.1} parent=0 // pred_region
    _
  $region9: #{position_embedder.1} parent=0 // pred_fallthru
    _
  // Predicated region
  $region10: #{position_embedder.1} parent=0 // pred_check
    _
  $region11: #{position_embedder.1} parent=0 // pred_check_branch
    %14 = sbr.rel (0) target = $region13
  $region12: #{position_embedder.1} parent=0 // pred_region
    _
  $region13: #{position_embedder.1} parent=0 // pred_fallthru
    _
  // Predicated region
  $region14: #{position_embedder.1} parent=0 // pred_check
    _
  $region15: #{position_embedder.1} parent=0 // pred_check_branch
    %16 = sbr.rel (0) target = $region17
  $region16: #{position_embedder.1} parent=0 // pred_region
    _
  $region17: #{position_embedder.1} parent=0 // pred_fallthru
    _
  %v18 = vld [vmem:[%s0] sm:$0x1]
  %v19 = vpack.c.bf16 %v18, %v18
  %v20 = vunpack.c.l.bf16 %v19
  %v21 = vsub.f32 %v18, %v20
  %v22 = vpack.c.bf16 %v21, %v21
  %v23 = vunpack.c.l.bf16 %v22
  %v24 = vsub.f32 %v21, %v23
  %v25 = vpack.c.bf16 %v24, %v24
  %v26 = vld [vmem:[%s1] sm:$0xff]
  %v27 = vld [vmem:[%s1 + $0x8] sm:$0xff]
  %v28 = vld [vmem:[%s1 + $0x10] sm:$0xff]
  %v29 = vld [vmem:[%s1 + $0x18] sm:$0xff]
  %v30 = vld [vmem:[%s1 + $0x20] sm:$0xff]
  %v31 = vld [vmem:[%s1 + $0x28] sm:$0xff]
  %v32 = vld [vmem:[%s1 + $0x30] sm:$0xff]
  %v33 = vld [vmem:[%s1 + $0x38] sm:$0xf]
  %v34 = vld [vmem:[%s1 + $0x3c] sm:$0xff]
  %v35 = vld [vmem:[%s1 + $0x44] sm:$0xff]
  %v36 = vld [vmem:[%s1 + $0x4c] sm:$0xff]
  %v37 = vld [vmem:[%s1 + $0x54] sm:$0xff]
  %v38 = vld [vmem:[%s1 + $0x5c] sm:$0xff]
  %v39 = vld [vmem:[%s1 + $0x64] sm:$0xff]
  %v40 = vld [vmem:[%s1 + $0x6c] sm:$0xff]
  %v41 = vld [vmem:[%s1 + $0x74] sm:$0xf]
  %v42 = vld [vmem:[%s1 + $0x78] sm:$0xff]
  %v43 = vld [vmem:[%s1 + $0x80] sm:$0xff]
  %v44 = vld [vmem:[%s1 + $0x88] sm:$0xff]
  %v45 = vld [vmem:[%s1 + $0x90] sm:$0xff]
  %v46 = vld [vmem:[%s1 + $0x98] sm:$0xff]
  %v47 = vld [vmem:[%s1 + $0xa0] sm:$0xff]
  %v48 = vld [vmem:[%s1 + $0xa8] sm:$0xff]
  %v49 = vld [vmem:[%s1 + $0xb0] sm:$0xf]
  %v50 = vld [vmem:[%s1 + $0xb4] sm:$0xff]
  %v51 = vld [vmem:[%s1 + $0xbc] sm:$0xff]
  %v52 = vld [vmem:[%s1 + $0xc4] sm:$0xff]
  %v53 = vld [vmem:[%s1 + $0xcc] sm:$0xff]
  %v54 = vld [vmem:[%s1 + $0xd4] sm:$0xff]
  %v55 = vld [vmem:[%s1 + $0xdc] sm:$0xff]
  %v56 = vld [vmem:[%s1 + $0xe4] sm:$0xff]
  %v57 = vld [vmem:[%s1 + $0xec] sm:$0xf]
  %v58 = vld [vmem:[%s1 + $0xf0] sm:$0xff]
  %v59 = vld [vmem:[%s1 + $0xf8] sm:$0xff]
  %v60 = vld [vmem:[%s1 + $0x100] sm:$0xff]
  %v61 = vld [vmem:[%s1 + $0x108] sm:$0xff]
  %v62 = vld [vmem:[%s1 + $0x110] sm:$0xff]
  %v63 = vld [vmem:[%s1 + $0x118] sm:$0xff]
  %v64 = vld [vmem:[%s1 + $0x120] sm:$0xff]
  %v65 = vld [vmem:[%s1 + $0x128] sm:$0xf]
  %v66 = vld [vmem:[%s1 + $0x12c] sm:$0xff]
  %v67 = vld [vmem:[%s1 + $0x134] sm:$0xff]
  %v68 = vld [vmem:[%s1 + $0x13c] sm:$0xff]
  %v69 = vld [vmem:[%s1 + $0x144] sm:$0xff]
  %v70 = vld [vmem:[%s1 + $0x14c] sm:$0xff]
  %v71 = vld [vmem:[%s1 + $0x154] sm:$0xff]
  %v72 = vld [vmem:[%s1 + $0x15c] sm:$0xff]
  %v73 = vld [vmem:[%s1 + $0x164] sm:$0xf]
  %v74 = vld [vmem:[%s1 + $0x168] sm:$0xff]
  %v75 = vld [vmem:[%s1 + $0x170] sm:$0xff]
  %v76 = vld [vmem:[%s1 + $0x178] sm:$0xff]
  %v77 = vld [vmem:[%s1 + $0x180] sm:$0xff]
  %v78 = vld [vmem:[%s1 + $0x188] sm:$0xff]
  %v79 = vld [vmem:[%s1 + $0x190] sm:$0xff]
  %v80 = vld [vmem:[%s1 + $0x198] sm:$0xff]
  %v81 = vld [vmem:[%s1 + $0x1a0] sm:$0xf]
  %v82 = vld [vmem:[%s1 + $0x1a4] sm:$0xff]
  %v83 = vld [vmem:[%s1 + $0x1ac] sm:$0xff]
  %v84 = vld [vmem:[%s1 + $0x1b4] sm:$0xff]
  %v85 = vld [vmem:[%s1 + $0x1bc] sm:$0xff]
  %v86 = vld [vmem:[%s1 + $0x1c4] sm:$0xff]
  %v87 = vld [vmem:[%s1 + $0x1cc] sm:$0xff]
  %v88 = vld [vmem:[%s1 + $0x1d4] sm:$0xff]
  %v89 = vld [vmem:[%s1 + $0x1dc] sm:$0xf]
  %v90 = vld [vmem:[%s1 + $0x1e0] sm:$0xff]
  %v91 = vld [vmem:[%s1 + $0x1e8] sm:$0xff]
  %v92 = vld [vmem:[%s1 + $0x1f0] sm:$0xff]
  %v93 = vld [vmem:[%s1 + $0x1f8] sm:$0xff]
  %v94 = vld [vmem:[%s1 + $0x200] sm:$0xff]
  %v95 = vld [vmem:[%s1 + $0x208] sm:$0xff]
  %v96 = vld [vmem:[%s1 + $0x210] sm:$0xff]
  %v97 = vld [vmem:[%s1 + $0x218] sm:$0xf]
  %v98 = vld [vmem:[%s1 + $0x21c] sm:$0xff]
  %v99 = vld [vmem:[%s1 + $0x224] sm:$0xff]
  %v100 = vld [vmem:[%s1 + $0x22c] sm:$0xff]
  %v101 = vld [vmem:[%s1 + $0x234] sm:$0xff]
  %v102 = vld [vmem:[%s1 + $0x23c] sm:$0xff]
  %v103 = vld [vmem:[%s1 + $0x244] sm:$0xff]
  %v104 = vld [vmem:[%s1 + $0x24c] sm:$0xff]
  %v105 = vld [vmem:[%s1 + $0x254] sm:$0xf]
  %v106 = vld [vmem:[%s1 + $0x258] sm:$0xff]
  %v107 = vld [vmem:[%s1 + $0x260] sm:$0xff]
  %v108 = vld [vmem:[%s1 + $0x268] sm:$0xff]
  %v109 = vld [vmem:[%s1 + $0x270] sm:$0xff]
  %v110 = vld [vmem:[%s1 + $0x278] sm:$0xff]
  %v111 = vld [vmem:[%s1 + $0x280] sm:$0xff]
  %v112 = vld [vmem:[%s1 + $0x288] sm:$0xff]
  %v113 = vld [vmem:[%s1 + $0x290] sm:$0xf]
  %v114 = vld [vmem:[%s1 + $0x294] sm:$0xff]
  %v115 = vld [vmem:[%s1 + $0x29c] sm:$0xff]
  %v116 = vld [vmem:[%s1 + $0x2a4] sm:$0xff]
  %v117 = vld [vmem:[%s1 + $0x2ac] sm:$0xff]
  %v118 = vld [vmem:[%s1 + $0x2b4] sm:$0xff]
  %v119 = vld [vmem:[%s1 + $0x2bc] sm:$0xff]
  %v120 = vld [vmem:[%s1 + $0x2c4] sm:$0xff]
  %v121 = vld [vmem:[%s1 + $0x2cc] sm:$0xf]
  %v218 = vunpack.c.l.b16 %v26
  %v219 = vunpack.c.h.b16 %v26
  %v220 = vunpack.c.l.b16 %v27
  %v221 = vunpack.c.h.b16 %v27
  %v222 = vunpack.c.l.b16 %v28
  %v223 = vunpack.c.h.b16 %v28
  %v224 = vunpack.c.l.b16 %v29
  %v225 = vunpack.c.h.b16 %v29
  %v226 = vunpack.c.l.b16 %v30
  %v227 = vunpack.c.h.b16 %v30
  %v228 = vunpack.c.l.b16 %v31
  %v229 = vunpack.c.h.b16 %v31
  %v230 = vunpack.c.l.b16 %v32
  %v231 = vunpack.c.h.b16 %v32
  %v232 = vunpack.c.l.b16 %v33
  %v233 = vunpack.c.l.b16 %v34
  %v234 = vunpack.c.h.b16 %v34
  %v235 = vunpack.c.l.b16 %v35
  %v236 = vunpack.c.h.b16 %v35
  %v237 = vunpack.c.l.b16 %v36
  %v238 = vunpack.c.h.b16 %v36
  %v239 = vunpack.c.l.b16 %v37
  %v240 = vunpack.c.h.b16 %v37
  %v241 = vunpack.c.l.b16 %v38
  %v242 = vunpack.c.h.b16 %v38
  %v243 = vunpack.c.l.b16 %v39
  %v244 = vunpack.c.h.b16 %v39
  %v245 = vunpack.c.l.b16 %v40
  %v246 = vunpack.c.h.b16 %v40
  %v247 = vunpack.c.l.b16 %v41
  %v248 = vunpack.c.l.b16 %v42
  %v249 = vunpack.c.h.b16 %v42
  %v250 = vunpack.c.l.b16 %v43
  %v251 = vunpack.c.h.b16 %v43
  %v252 = vunpack.c.l.b16 %v44
  %v253 = vunpack.c.h.b16 %v44
  %v254 = vunpack.c.l.b16 %v45
  %v255 = vunpack.c.h.b16 %v45
  %v256 = vunpack.c.l.b16 %v46
  %v257 = vunpack.c.h.b16 %v46
  %v258 = vunpack.c.l.b16 %v47
  %v259 = vunpack.c.h.b16 %v47
  %v260 = vunpack.c.l.b16 %v48
  %v261 = vunpack.c.h.b16 %v48
  %v262 = vunpack.c.l.b16 %v49
  %v263 = vunpack.c.l.b16 %v50
  %v264 = vunpack.c.h.b16 %v50
  %v265 = vunpack.c.l.b16 %v51
  %v266 = vunpack.c.h.b16 %v51
  %v267 = vunpack.c.l.b16 %v52
  %v268 = vunpack.c.h.b16 %v52
  %v269 = vunpack.c.l.b16 %v53
  %v270 = vunpack.c.h.b16 %v53
  %v271 = vunpack.c.l.b16 %v54
  %v272 = vunpack.c.h.b16 %v54
  %v273 = vunpack.c.l.b16 %v55
  %v274 = vunpack.c.h.b16 %v55
  %v275 = vunpack.c.l.b16 %v56
  %v276 = vunpack.c.h.b16 %v56
  %v277 = vunpack.c.l.b16 %v57
  %v278 = vunpack.c.l.b16 %v58
  %v279 = vunpack.c.h.b16 %v58
  %v280 = vunpack.c.l.b16 %v59
  %v281 = vunpack.c.h.b16 %v59
  %v282 = vunpack.c.l.b16 %v60
  %v283 = vunpack.c.h.b16 %v60
  %v284 = vunpack.c.l.b16 %v61
  %v285 = vunpack.c.h.b16 %v61
  %v286 = vunpack.c.l.b16 %v62
  %v287 = vunpack.c.h.b16 %v62
  %v288 = vunpack.c.l.b16 %v63
  %v289 = vunpack.c.h.b16 %v63
  %v290 = vunpack.c.l.b16 %v64
  %v291 = vunpack.c.h.b16 %v64
  %v292 = vunpack.c.l.b16 %v65
  %v293 = vunpack.c.l.b16 %v66
  %v294 = vunpack.c.h.b16 %v66
  %v295 = vunpack.c.l.b16 %v67
  %v296 = vunpack.c.h.b16 %v67
  %v297 = vunpack.c.l.b16 %v68
  %v298 = vunpack.c.h.b16 %v68
  %v299 = vunpack.c.l.b16 %v69
  %v300 = vunpack.c.h.b16 %v69
  %v301 = vunpack.c.l.b16 %v70
  %v302 = vunpack.c.h.b16 %v70
  %v303 = vunpack.c.l.b16 %v71
  %v304 = vunpack.c.h.b16 %v71
  %v305 = vunpack.c.l.b16 %v72
  %v306 = vunpack.c.h.b16 %v72
  %v307 = vunpack.c.l.b16 %v73
  %v308 = vunpack.c.l.b16 %v74
  %v309 = vunpack.c.h.b16 %v74
  %v310 = vunpack.c.l.b16 %v75
  %v311 = vunpack.c.h.b16 %v75
  %v312 = vunpack.c.l.b16 %v76
  %v313 = vunpack.c.h.b16 %v76
  %v314 = vunpack.c.l.b16 %v77
  %v315 = vunpack.c.h.b16 %v77
  %v316 = vunpack.c.l.b16 %v78
  %v317 = vunpack.c.h.b16 %v78
  %v318 = vunpack.c.l.b16 %v79
  %v319 = vunpack.c.h.b16 %v79
  %v320 = vunpack.c.l.b16 %v80
  %v321 = vunpack.c.h.b16 %v80
  %v322 = vunpack.c.l.b16 %v81
  %v323 = vunpack.c.l.b16 %v82
  %v324 = vunpack.c.h.b16 %v82
  %v325 = vunpack.c.l.b16 %v83
  %v326 = vunpack.c.h.b16 %v83
  %v327 = vunpack.c.l.b16 %v84
  %v328 = vunpack.c.h.b16 %v84
  %v329 = vunpack.c.l.b16 %v85
  %v330 = vunpack.c.h.b16 %v85
  %v331 = vunpack.c.l.b16 %v86
  %v332 = vunpack.c.h.b16 %v86
  %v333 = vunpack.c.l.b16 %v87
  %v334 = vunpack.c.h.b16 %v87
  %v335 = vunpack.c.l.b16 %v88
  %v336 = vunpack.c.h.b16 %v88
  %v337 = vunpack.c.l.b16 %v89
  %v338 = vunpack.c.l.b16 %v90
  %v339 = vunpack.c.h.b16 %v90
  %v340 = vunpack.c.l.b16 %v91
  %v341 = vunpack.c.h.b16 %v91
  %v342 = vunpack.c.l.b16 %v92
  %v343 = vunpack.c.h.b16 %v92
  %v344 = vunpack.c.l.b16 %v93
  %v345 = vunpack.c.h.b16 %v93
  %v346 = vunpack.c.l.b16 %v94
  %v347 = vunpack.c.h.b16 %v94
  %v348 = vunpack.c.l.b16 %v95
  %v349 = vunpack.c.h.b16 %v95
  %v350 = vunpack.c.l.b16 %v96
  %v351 = vunpack.c.h.b16 %v96
  %v352 = vunpack.c.l.b16 %v97
  %v353 = vunpack.c.l.b16 %v98
  %v354 = vunpack.c.h.b16 %v98
  %v355 = vunpack.c.l.b16 %v99
  %v356 = vunpack.c.h.b16 %v99
  %v357 = vunpack.c.l.b16 %v100
  %v358 = vunpack.c.h.b16 %v100
  %v359 = vunpack.c.l.b16 %v101
  %v360 = vunpack.c.h.b16 %v101
  %v361 = vunpack.c.l.b16 %v102
  %v362 = vunpack.c.h.b16 %v102
  %v363 = vunpack.c.l.b16 %v103
  %v364 = vunpack.c.h.b16 %v103
  %v365 = vunpack.c.l.b16 %v104
  %v366 = vunpack.c.h.b16 %v104
  %v367 = vunpack.c.l.b16 %v105
  %v368 = vunpack.c.l.b16 %v106
  %v369 = vunpack.c.h.b16 %v106
  %v370 = vunpack.c.l.b16 %v107
  %v371 = vunpack.c.h.b16 %v107
  %v372 = vunpack.c.l.b16 %v108
  %v373 = vunpack.c.h.b16 %v108
  %v374 = vunpack.c.l.b16 %v109
  %v375 = vunpack.c.h.b16 %v109
  %v376 = vunpack.c.l.b16 %v110
  %v377 = vunpack.c.h.b16 %v110
  %v378 = vunpack.c.l.b16 %v111
  %v379 = vunpack.c.h.b16 %v111
  %v380 = vunpack.c.l.b16 %v112
  %v381 = vunpack.c.h.b16 %v112
  %v382 = vunpack.c.l.b16 %v113
  %v383 = vunpack.c.l.b16 %v114
  %v384 = vunpack.c.h.b16 %v114
  %v385 = vunpack.c.l.b16 %v115
  %v386 = vunpack.c.h.b16 %v115
  %v387 = vunpack.c.l.b16 %v116
  %v388 = vunpack.c.h.b16 %v116
  %v389 = vunpack.c.l.b16 %v117
  %v390 = vunpack.c.h.b16 %v117
  %v391 = vunpack.c.l.b16 %v118
  %v392 = vunpack.c.h.b16 %v118
  %v393 = vunpack.c.l.b16 %v119
  %v394 = vunpack.c.h.b16 %v119
  %v395 = vunpack.c.l.b16 %v120
  %v396 = vunpack.c.h.b16 %v120
  %v397 = vunpack.c.l.b16 %v121
  %v398 = vpack.c.b16 %v233, %v218
  %v399 = vpack.c.b16 %v234, %v219
  %v400 = vpack.c.b16 %v235, %v220
  %v401 = vpack.c.b16 %v236, %v221
  %v402 = vpack.c.b16 %v237, %v222
  %v403 = vpack.c.b16 %v238, %v223
  %v404 = vpack.c.b16 %v239, %v224
  %v405 = vpack.c.b16 %v240, %v225
  %v406 = vpack.c.b16 %v241, %v226
  %v407 = vpack.c.b16 %v242, %v227
  %v408 = vpack.c.b16 %v243, %v228
  %v409 = vpack.c.b16 %v244, %v229
  %v410 = vpack.c.b16 %v245, %v230
  %v411 = vpack.c.b16 %v246, %v231
  %v412 = vpack.c.b16 %v247, %v232
  %v413 = vpack.c.b16 %v263, %v248
  %v414 = vpack.c.b16 %v264, %v249
  %v415 = vpack.c.b16 %v265, %v250
  %v416 = vpack.c.b16 %v266, %v251
  %v417 = vpack.c.b16 %v267, %v252
  %v418 = vpack.c.b16 %v268, %v253
  %v419 = vpack.c.b16 %v269, %v254
  %v420 = vpack.c.b16 %v270, %v255
  %v421 = vpack.c.b16 %v271, %v256
  %v422 = vpack.c.b16 %v272, %v257
  %v423 = vpack.c.b16 %v273, %v258
  %v424 = vpack.c.b16 %v274, %v259
  %v425 = vpack.c.b16 %v275, %v260
  %v426 = vpack.c.b16 %v276, %v261
  %v427 = vpack.c.b16 %v277, %v262
  %v428 = vpack.c.b16 %v293, %v278
  %v429 = vpack.c.b16 %v294, %v279
  %v430 = vpack.c.b16 %v295, %v280
  %v431 = vpack.c.b16 %v296, %v281
  %v432 = vpack.c.b16 %v297, %v282
  %v433 = vpack.c.b16 %v298, %v283
  %v434 = vpack.c.b16 %v299, %v284
  %v435 = vpack.c.b16 %v300, %v285
  %v436 = vpack.c.b16 %v301, %v286
  %v437 = vpack.c.b16 %v302, %v287
  %v438 = vpack.c.b16 %v303, %v288
  %v439 = vpack.c.b16 %v304, %v289
  %v440 = vpack.c.b16 %v305, %v290
  %v441 = vpack.c.b16 %v306, %v291
  %v442 = vpack.c.b16 %v307, %v292
  %v443 = vpack.c.b16 %v323, %v308
  %v444 = vpack.c.b16 %v324, %v309
  %v445 = vpack.c.b16 %v325, %v310
  %v446 = vpack.c.b16 %v326, %v311
  %v447 = vpack.c.b16 %v327, %v312
  %v448 = vpack.c.b16 %v328, %v313
  %v449 = vpack.c.b16 %v329, %v314
  %v450 = vpack.c.b16 %v330, %v315
  %v451 = vpack.c.b16 %v331, %v316
  %v452 = vpack.c.b16 %v332, %v317
  %v453 = vpack.c.b16 %v333, %v318
  %v454 = vpack.c.b16 %v334, %v319
  %v455 = vpack.c.b16 %v335, %v320
  %v456 = vpack.c.b16 %v336, %v321
  %v457 = vpack.c.b16 %v337, %v322
  %v458 = vpack.c.b16 %v353, %v338
  %v459 = vpack.c.b16 %v354, %v339
  %v460 = vpack.c.b16 %v355, %v340
  %v461 = vpack.c.b16 %v356, %v341
  %v462 = vpack.c.b16 %v357, %v342
  %v463 = vpack.c.b16 %v358, %v343
  %v464 = vpack.c.b16 %v359, %v344
  %v465 = vpack.c.b16 %v360, %v345
  %v466 = vpack.c.b16 %v361, %v346
  %v467 = vpack.c.b16 %v362, %v347
  %v468 = vpack.c.b16 %v363, %v348
  %v469 = vpack.c.b16 %v364, %v349
  %v470 = vpack.c.b16 %v365, %v350
  %v471 = vpack.c.b16 %v366, %v351
  %v472 = vpack.c.b16 %v367, %v352
  %v473 = vpack.c.b16 %v383, %v368
  %v474 = vpack.c.b16 %v384, %v369
  %v475 = vpack.c.b16 %v385, %v370
  %v476 = vpack.c.b16 %v386, %v371
  %v477 = vpack.c.b16 %v387, %v372
  %v478 = vpack.c.b16 %v388, %v373
  %v479 = vpack.c.b16 %v389, %v374
  %v480 = vpack.c.b16 %v390, %v375
  %v481 = vpack.c.b16 %v391, %v376
  %v482 = vpack.c.b16 %v392, %v377
  %v483 = vpack.c.b16 %v393, %v378
  %v484 = vpack.c.b16 %v394, %v379
  %v485 = vpack.c.b16 %v395, %v380
  %v486 = vpack.c.b16 %v396, %v381
  %v487 = vpack.c.b16 %v397, %v382
  %vm578 = vcmask 785408
  %v580 = vsel %vm578, %v22, 0
  %582 = vmatprep.subr.bf16.mxu0 %v399
  %583 = vmatpush1.bf16.msra.mxu0 %v398
  %584 = vmatprep.subr.bf16.mxu0 %v414
  %585 = vmatpush1.bf16.msra.mxu0 %v413
  %586 = vmatprep.subr.bf16.mxu0 %v429
  %587 = vmatpush1.bf16.msra.mxu0 %v428
  %588 = vmatprep.subr.bf16.mxu0 %v444
  %589 = vmatpush1.bf16.msra.mxu0 %v443
  %590 = vmatprep.subr.bf16.mxu0 %v459
  %591 = vmatpush1.bf16.msra.mxu0 %v458
  %592 = vmatprep.subr.bf16.mxu0 %v474
  %593 = vmatpush1.bf16.msra.mxu0 %v473
  %594 = vmatprep.subr.bf16.mxu0 0
  %595 = vmatpush1.bf16.msra.mxu0 0
  %596 = vmatprep.subr.bf16.mxu0 0
  %597 = vmatpush1.bf16.msra.mxu0 0
  %598 = vmatprep.subr.bf16.mxu0 0
  %599 = vmatpush1.bf16.msra.mxu0 0
  %600 = vmatprep.subr.bf16.mxu0 0
  %601 = vmatpush1.bf16.msra.mxu0 0
  %602 = vmatprep.subr.bf16.mxu0 0
  %603 = vmatpush1.bf16.msra.mxu0 0
  %604 = vmatprep.subr.bf16.mxu0 0
  %605 = vmatpush1.bf16.msra.mxu0 0
  %606 = vmatprep.subr.bf16.mxu0 0
  %607 = vmatpush1.bf16.msra.mxu0 0
  %608 = vmatprep.subr.bf16.mxu0 0
  %609 = vmatpush1.bf16.msra.mxu0 0
  %610 = vmatprep.subr.bf16.mxu0 0
  %611 = vmatpush1.bf16.msra.mxu0 0
  %612 = vmatprep.subr.bf16.mxu0 0
  %613 = vmatpush1.bf16.msra.mxu0 0
  %614 = vmatprep.mubr.bf16.mxu0 0
  %615 = vmatmul.mubr.bf16.gmra.mrb[0].mxu0 %v580
  %v616 = vpop.f32.mrb[0].mxu0
  %v617 = vadd.f32 0.0, %v616
  %v618 = vpop.f32.mrb[0].mxu0
  %v619 = vadd.f32 0.0, %v618
  %v620 = vpop.f32.mrb[0].mxu0
  %v621 = vpop.f32.mrb[0].mxu0
  %622 = vdwg.mxu0
  %623 = vmatprep.subr.bf16.mxu0 %v401
  %624 = vmatpush1.bf16.msra.mxu0 %v400
  %625 = vmatprep.subr.bf16.mxu0 %v416
  %626 = vmatpush1.bf16.msra.mxu0 %v415
  %627 = vmatprep.subr.bf16.mxu0 %v431
  %628 = vmatpush1.bf16.msra.mxu0 %v430
  %629 = vmatprep.subr.bf16.mxu0 %v446
  %630 = vmatpush1.bf16.msra.mxu0 %v445
  %631 = vmatprep.subr.bf16.mxu0 %v461
  %632 = vmatpush1.bf16.msra.mxu0 %v460
  %633 = vmatprep.subr.bf16.mxu0 %v476
  %634 = vmatpush1.bf16.msra.mxu0 %v475
  %635 = vmatprep.subr.bf16.mxu0 0
  %636 = vmatpush1.bf16.msra.mxu0 0
  %637 = vmatprep.subr.bf16.mxu0 0
  %638 = vmatpush1.bf16.msra.mxu0 0
  %639 = vmatprep.subr.bf16.mxu0 0
  %640 = vmatpush1.bf16.msra.mxu0 0
  %641 = vmatprep.subr.bf16.mxu0 0
  %642 = vmatpush1.bf16.msra.mxu0 0
  %643 = vmatprep.subr.bf16.mxu0 0
  %644 = vmatpush1.bf16.msra.mxu0 0
  %645 = vmatprep.subr.bf16.mxu0 0
  %646 = vmatpush1.bf16.msra.mxu0 0
  %647 = vmatprep.subr.bf16.mxu0 0
  %648 = vmatpush1.bf16.msra.mxu0 0
  %649 = vmatprep.subr.bf16.mxu0 0
  %650 = vmatpush1.bf16.msra.mxu0 0
  %651 = vmatprep.subr.bf16.mxu0 0
  %652 = vmatpush1.bf16.msra.mxu0 0
  %653 = vmatprep.subr.bf16.mxu0 0
  %654 = vmatpush1.bf16.msra.mxu0 0
  %655 = vmatprep.mubr.bf16.mxu0 0
  %656 = vmatmul.mubr.bf16.gmra.mrb[0].mxu0 %v580
  %v657 = vpop.f32.mrb[0].mxu0
  %v658 = vadd.f32 0.0, %v657
  %v659 = vpop.f32.mrb[0].mxu0
  %v660 = vadd.f32 0.0, %v659
  %v661 = vpop.f32.mrb[0].mxu0
  %v662 = vpop.f32.mrb[0].mxu0
  %663 = vdwg.mxu0
  %664 = vmatprep.subr.bf16.mxu0 %v403
  %665 = vmatpush1.bf16.msra.mxu0 %v402
  %666 = vmatprep.subr.bf16.mxu0 %v418
  %667 = vmatpush1.bf16.msra.mxu0 %v417
  %668 = vmatprep.subr.bf16.mxu0 %v433
  %669 = vmatpush1.bf16.msra.mxu0 %v432
  %670 = vmatprep.subr.bf16.mxu0 %v448
  %671 = vmatpush1.bf16.msra.mxu0 %v447
  %672 = vmatprep.subr.bf16.mxu0 %v463
  %673 = vmatpush1.bf16.msra.mxu0 %v462
  %674 = vmatprep.subr.bf16.mxu0 %v478
  %675 = vmatpush1.bf16.msra.mxu0 %v477
  %676 = vmatprep.subr.bf16.mxu0 0
  %677 = vmatpush1.bf16.msra.mxu0 0
  %678 = vmatprep.subr.bf16.mxu0 0
  %679 = vmatpush1.bf16.msra.mxu0 0
  %680 = vmatprep.subr.bf16.mxu0 0
  %681 = vmatpush1.bf16.msra.mxu0 0
  %682 = vmatprep.subr.bf16.mxu0 0
  %683 = vmatpush1.bf16.msra.mxu0 0
  %684 = vmatprep.subr.bf16.mxu0 0
  %685 = vmatpush1.bf16.msra.mxu0 0
  %686 = vmatprep.subr.bf16.mxu0 0
  %687 = vmatpush1.bf16.msra.mxu0 0
  %688 = vmatprep.subr.bf16.mxu0 0
  %689 = vmatpush1.bf16.msra.mxu0 0
  %690 = vmatprep.subr.bf16.mxu0 0
  %691 = vmatpush1.bf16.msra.mxu0 0
  %692 = vmatprep.subr.bf16.mxu0 0
  %693 = vmatpush1.bf16.msra.mxu0 0
  %694 = vmatprep.subr.bf16.mxu0 0
  %695 = vmatpush1.bf16.msra.mxu0 0
  %696 = vmatprep.mubr.bf16.mxu0 0
  %697 = vmatmul.mubr.bf16.gmra.mrb[0].mxu0 %v580
  %v698 = vpop.f32.mrb[0].mxu0
  %v699 = vadd.f32 0.0, %v698
  %v700 = vpop.f32.mrb[0].mxu0
  %v701 = vadd.f32 0.0, %v700
  %v702 = vpop.f32.mrb[0].mxu0
  %v703 = vpop.f32.mrb[0].mxu0
  %704 = vdwg.mxu0
  %705 = vmatprep.subr.bf16.mxu0 %v405
  %706 = vmatpush1.bf16.msra.mxu0 %v404
  %707 = vmatprep.subr.bf16.mxu0 %v420
  %708 = vmatpush1.bf16.msra.mxu0 %v419
  %709 = vmatprep.subr.bf16.mxu0 %v435
  %710 = vmatpush1.bf16.msra.mxu0 %v434
  %711 = vmatprep.subr.bf16.mxu0 %v450
  %712 = vmatpush1.bf16.msra.mxu0 %v449
  %713 = vmatprep.subr.bf16.mxu0 %v465
  %714 = vmatpush1.bf16.msra.mxu0 %v464
  %715 = vmatprep.subr.bf16.mxu0 %v480
  %716 = vmatpush1.bf16.msra.mxu0 %v479
  %717 = vmatprep.subr.bf16.mxu0 0
  %718 = vmatpush1.bf16.msra.mxu0 0
  %719 = vmatprep.subr.bf16.mxu0 0
  %720 = vmatpush1.bf16.msra.mxu0 0
  %721 = vmatprep.subr.bf16.mxu0 0
  %722 = vmatpush1.bf16.msra.mxu0 0
  %723 = vmatprep.subr.bf16.mxu0 0
  %724 = vmatpush1.bf16.msra.mxu0 0
  %725 = vmatprep.subr.bf16.mxu0 0
  %726 = vmatpush1.bf16.msra.mxu0 0
  %727 = vmatprep.subr.bf16.mxu0 0
  %728 = vmatpush1.bf16.msra.mxu0 0
  %729 = vmatprep.subr.bf16.mxu0 0
  %730 = vmatpush1.bf16.msra.mxu0 0
  %731 = vmatprep.subr.bf16.mxu0 0
  %732 = vmatpush1.bf16.msra.mxu0 0
  %733 = vmatprep.subr.bf16.mxu0 0
  %734 = vmatpush1.bf16.msra.mxu0 0
  %735 = vmatprep.subr.bf16.mxu0 0
  %736 = vmatpush1.bf16.msra.mxu0 0
  %737 = vmatprep.mubr.bf16.mxu0 0
  %738 = vmatmul.mubr.bf16.gmra.mrb[0].mxu0 %v580
  %v739 = vpop.f32.mrb[0].mxu0
  %v740 = vadd.f32 0.0, %v739
  %v741 = vpop.f32.mrb[0].mxu0
  %v742 = vadd.f32 0.0, %v741
  %v743 = vpop.f32.mrb[0].mxu0
  %v744 = vpop.f32.mrb[0].mxu0
  %745 = vdwg.mxu0
  %746 = vmatprep.subr.bf16.mxu0 %v407
  %747 = vmatpush1.bf16.msra.mxu0 %v406
  %748 = vmatprep.subr.bf16.mxu0 %v422
  %749 = vmatpush1.bf16.msra.mxu0 %v421
  %750 = vmatprep.subr.bf16.mxu0 %v437
  %751 = vmatpush1.bf16.msra.mxu0 %v436
  %752 = vmatprep.subr.bf16.mxu0 %v452
  %753 = vmatpush1.bf16.msra.mxu0 %v451
  %754 = vmatprep.subr.bf16.mxu0 %v467
  %755 = vmatpush1.bf16.msra.mxu0 %v466
  %756 = vmatprep.subr.bf16.mxu0 %v482
  %757 = vmatpush1.bf16.msra.mxu0 %v481
  %758 = vmatprep.subr.bf16.mxu0 0
  %759 = vmatpush1.bf16.msra.mxu0 0
  %760 = vmatprep.subr.bf16.mxu0 0
  %761 = vmatpush1.bf16.msra.mxu0 0
  %762 = vmatprep.subr.bf16.mxu0 0
  %763 = vmatpush1.bf16.msra.mxu0 0
  %764 = vmatprep.subr.bf16.mxu0 0
  %765 = vmatpush1.bf16.msra.mxu0 0
  %766 = vmatprep.subr.bf16.mxu0 0
  %767 = vmatpush1.bf16.msra.mxu0 0
  %768 = vmatprep.subr.bf16.mxu0 0
  %769 = vmatpush1.bf16.msra.mxu0 0
  %770 = vmatprep.subr.bf16.mxu0 0
  %771 = vmatpush1.bf16.msra.mxu0 0
  %772 = vmatprep.subr.bf16.mxu0 0
  %773 = vmatpush1.bf16.msra.mxu0 0
  %774 = vmatprep.subr.bf16.mxu0 0
  %775 = vmatpush1.bf16.msra.mxu0 0
  %776 = vmatprep.subr.bf16.mxu0 0
  %777 = vmatpush1.bf16.msra.mxu0 0
  %778 = vmatprep.mubr.bf16.mxu0 0
  %779 = vmatmul.mubr.bf16.gmra.mrb[0].mxu0 %v580
  %v780 = vpop.f32.mrb[0].mxu0
  %v781 = vadd.f32 0.0, %v780
  %v782 = vpop.f32.mrb[0].mxu0
  %v783 = vadd.f32 0.0, %v782
  %v784 = vpop.f32.mrb[0].mxu0
  %v785 = vpop.f32.mrb[0].mxu0
  %786 = vdwg.mxu0
  %787 = vmatprep.subr.bf16.mxu0 %v409
  %788 = vmatpush1.bf16.msra.mxu0 %v408
  %789 = vmatprep.subr.bf16.mxu0 %v424
  %790 = vmatpush1.bf16.msra.mxu0 %v423
  %791 = vmatprep.subr.bf16.mxu0 %v439
  %792 = vmatpush1.bf16.msra.mxu0 %v438
  %793 = vmatprep.subr.bf16.mxu0 %v454
  %794 = vmatpush1.bf16.msra.mxu0 %v453
  %795 = vmatprep.subr.bf16.mxu0 %v469
  %796 = vmatpush1.bf16.msra.mxu0 %v468
  %797 = vmatprep.subr.bf16.mxu0 %v484
  %798 = vmatpush1.bf16.msra.mxu0 %v483
  %799 = vmatprep.subr.bf16.mxu0 0
  %800 = vmatpush1.bf16.msra.mxu0 0
  %801 = vmatprep.subr.bf16.mxu0 0
  %802 = vmatpush1.bf16.msra.mxu0 0
  %803 = vmatprep.subr.bf16.mxu0 0
  %804 = vmatpush1.bf16.msra.mxu0 0
  %805 = vmatprep.subr.bf16.mxu0 0
  %806 = vmatpush1.bf16.msra.mxu0 0
  %807 = vmatprep.subr.bf16.mxu0 0
  %808 = vmatpush1.bf16.msra.mxu0 0
  %809 = vmatprep.subr.bf16.mxu0 0
  %810 = vmatpush1.bf16.msra.mxu0 0
  %811 = vmatprep.subr.bf16.mxu0 0
  %812 = vmatpush1.bf16.msra.mxu0 0
  %813 = vmatprep.subr.bf16.mxu0 0
  %814 = vmatpush1.bf16.msra.mxu0 0
  %815 = vmatprep.subr.bf16.mxu0 0
  %816 = vmatpush1.bf16.msra.mxu0 0
  %817 = vmatprep.subr.bf16.mxu0 0
  %818 = vmatpush1.bf16.msra.mxu0 0
  %819 = vmatprep.mubr.bf16.mxu0 0
  %820 = vmatmul.mubr.bf16.gmra.mrb[0].mxu0 %v580
  %v821 = vpop.f32.mrb[0].mxu0
  %v822 = vadd.f32 0.0, %v821
  %v823 = vpop.f32.mrb[0].mxu0
  %v824 = vadd.f32 0.0, %v823
  %v825 = vpop.f32.mrb[0].mxu0
  %v826 = vpop.f32.mrb[0].mxu0
  %827 = vdwg.mxu0
  %828 = vmatprep.subr.bf16.mxu0 %v411
  %829 = vmatpush1.bf16.msra.mxu0 %v410
  %830 = vmatprep.subr.bf16.mxu0 %v426
  %831 = vmatpush1.bf16.msra.mxu0 %v425
  %832 = vmatprep.subr.bf16.mxu0 %v441
  %833 = vmatpush1.bf16.msra.mxu0 %v440
  %834 = vmatprep.subr.bf16.mxu0 %v456
  %835 = vmatpush1.bf16.msra.mxu0 %v455
  %836 = vmatprep.subr.bf16.mxu0 %v471
  %837 = vmatpush1.bf16.msra.mxu0 %v470
  %838 = vmatprep.subr.bf16.mxu0 %v486
  %839 = vmatpush1.bf16.msra.mxu0 %v485
  %840 = vmatprep.subr.bf16.mxu0 0
  %841 = vmatpush1.bf16.msra.mxu0 0
  %842 = vmatprep.subr.bf16.mxu0 0
  %843 = vmatpush1.bf16.msra.mxu0 0
  %844 = vmatprep.subr.bf16.mxu0 0
  %845 = vmatpush1.bf16.msra.mxu0 0
  %846 = vmatprep.subr.bf16.mxu0 0
  %847 = vmatpush1.bf16.msra.mxu0 0
  %848 = vmatprep.subr.bf16.mxu0 0
  %849 = vmatpush1.bf16.msra.mxu0 0
  %850 = vmatprep.subr.bf16.mxu0 0
  %851 = vmatpush1.bf16.msra.mxu0 0
  %852 = vmatprep.subr.bf16.mxu0 0
  %853 = vmatpush1.bf16.msra.mxu0 0
  %854 = vmatprep.subr.bf16.mxu0 0
  %855 = vmatpush1.bf16.msra.mxu0 0
  %856 = vmatprep.subr.bf16.mxu0 0
  %857 = vmatpush1.bf16.msra.mxu0 0
  %858 = vmatprep.subr.bf16.mxu0 0
  %859 = vmatpush1.bf16.msra.mxu0 0
  %860 = vmatprep.mubr.bf16.mxu0 0
  %861 = vmatmul.mubr.bf16.gmra.mrb[0].mxu0 %v580
  %v862 = vpop.f32.mrb[0].mxu0
  %v863 = vadd.f32 0.0, %v862
  %v864 = vpop.f32.mrb[0].mxu0
  %v865 = vadd.f32 0.0, %v864
  %v866 = vpop.f32.mrb[0].mxu0
  %v867 = vpop.f32.mrb[0].mxu0
  %868 = vdwg.mxu0
  %869 = vmatprep.subr.bf16.mxu0 0
  %870 = vmatpush1.bf16.msra.mxu0 %v412
  %871 = vmatprep.subr.bf16.mxu0 0
  %872 = vmatpush1.bf16.msra.mxu0 %v427
  %873 = vmatprep.subr.bf16.mxu0 0
  %874 = vmatpush1.bf16.msra.mxu0 %v442
  %875 = vmatprep.subr.bf16.mxu0 0
  %876 = vmatpush1.bf16.msra.mxu0 %v457
  %877 = vmatprep.subr.bf16.mxu0 0
  %878 = vmatpush1.bf16.msra.mxu0 %v472
  %879 = vmatprep.subr.bf16.mxu0 0
  %880 = vmatpush1.bf16.msra.mxu0 %v487
  %881 = vmatprep.subr.bf16.mxu0 0
  %882 = vmatpush1.bf16.msra.mxu0 0
  %883 = vmatprep.subr.bf16.mxu0 0
  %884 = vmatpush1.bf16.msra.mxu0 0
  %885 = vmatprep.subr.bf16.mxu0 0
  %886 = vmatpush1.bf16.msra.mxu0 0
  %887 = vmatprep.subr.bf16.mxu0 0
  %888 = vmatpush1.bf16.msra.mxu0 0
  %889 = vmatprep.subr.bf16.mxu0 0
  %890 = vmatpush1.bf16.msra.mxu0 0
  %891 = vmatprep.subr.bf16.mxu0 0
  %892 = vmatpush1.bf16.msra.mxu0 0
  %893 = vmatprep.subr.bf16.mxu0 0
  %894 = vmatpush1.bf16.msra.mxu0 0
  %895 = vmatprep.subr.bf16.mxu0 0
  %896 = vmatpush1.bf16.msra.mxu0 0
  %897 = vmatprep.subr.bf16.mxu0 0
  %898 = vmatpush1.bf16.msra.mxu0 0
  %899 = vmatprep.subr.bf16.mxu0 0
  %900 = vmatpush1.bf16.msra.mxu0 0
  %901 = vmatprep.mubr.bf16.mxu0 0
  %902 = vmatmul.mubr.bf16.gmra.mrb[0].mxu0 %v580
  %v903 = vpop.f32.mrb[0].mxu0
  %v904 = vadd.f32 0.0, %v903
  %v905 = vpop.f32.mrb[0].mxu0
  %v906 = vpop.f32.mrb[0].mxu0
  %v907 = vpop.f32.mrb[0].mxu0
  %908 = vdwg.mxu0
  %v910 = vsel %vm578, %v19, 0
  %912 = vmatprep.subr.bf16.mxu0 %v399
  %913 = vmatpush1.bf16.msra.mxu0 %v398
  %914 = vmatprep.subr.bf16.mxu0 %v414
  %915 = vmatpush1.bf16.msra.mxu0 %v413
  %916 = vmatprep.subr.bf16.mxu0 %v429
  %917 = vmatpush1.bf16.msra.mxu0 %v428
  %918 = vmatprep.subr.bf16.mxu0 %v444
  %919 = vmatpush1.bf16.msra.mxu0 %v443
  %920 = vmatprep.subr.bf16.mxu0 %v459
  %921 = vmatpush1.bf16.msra.mxu0 %v458
  %922 = vmatprep.subr.bf16.mxu0 %v474
  %923 = vmatpush1.bf16.msra.mxu0 %v473
  %924 = vmatprep.subr.bf16.mxu0 0
  %925 = vmatpush1.bf16.msra.mxu0 0
  %926 = vmatprep.subr.bf16.mxu0 0
  %927 = vmatpush1.bf16.msra.mxu0 0
  %928 = vmatprep.subr.bf16.mxu0 0
  %929 = vmatpush1.bf16.msra.mxu0 0
  %930 = vmatprep.subr.bf16.mxu0 0
  %931 = vmatpush1.bf16.msra.mxu0 0
  %932 = vmatprep.subr.bf16.mxu0 0
  %933 = vmatpush1.bf16.msra.mxu0 0
  %934 = vmatprep.subr.bf16.mxu0 0
  %935 = vmatpush1.bf16.msra.mxu0 0
  %936 = vmatprep.subr.bf16.mxu0 0
  %937 = vmatpush1.bf16.msra.mxu0 0
  %938 = vmatprep.subr.bf16.mxu0 0
  %939 = vmatpush1.bf16.msra.mxu0 0
  %940 = vmatprep.subr.bf16.mxu0 0
  %941 = vmatpush1.bf16.msra.mxu0 0
  %942 = vmatprep.subr.bf16.mxu0 0
  %943 = vmatpush1.bf16.msra.mxu0 0
  %944 = vmatprep.mubr.bf16.mxu0 0
  %945 = vmatmul.mubr.bf16.gmra.mrb[0].mxu0 %v910
  %v946 = vpop.f32.mrb[0].mxu0
  %v947 = vadd.f32 %v617, %v946
  %v948 = vpop.f32.mrb[0].mxu0
  %v949 = vadd.f32 %v619, %v948
  %v950 = vpop.f32.mrb[0].mxu0
  %v951 = vpop.f32.mrb[0].mxu0
  %952 = vdwg.mxu0
  %953 = vmatprep.subr.bf16.mxu0 %v401
  %954 = vmatpush1.bf16.msra.mxu0 %v400
  %955 = vmatprep.subr.bf16.mxu0 %v416
  %956 = vmatpush1.bf16.msra.mxu0 %v415
  %957 = vmatprep.subr.bf16.mxu0 %v431
  %958 = vmatpush1.bf16.msra.mxu0 %v430
  %959 = vmatprep.subr.bf16.mxu0 %v446
  %960 = vmatpush1.bf16.msra.mxu0 %v445
  %961 = vmatprep.subr.bf16.mxu0 %v461
  %962 = vmatpush1.bf16.msra.mxu0 %v460
  %963 = vmatprep.subr.bf16.mxu0 %v476
  %964 = vmatpush1.bf16.msra.mxu0 %v475
  %965 = vmatprep.subr.bf16.mxu0 0
  %966 = vmatpush1.bf16.msra.mxu0 0
  %967 = vmatprep.subr.bf16.mxu0 0
  %968 = vmatpush1.bf16.msra.mxu0 0
  %969 = vmatprep.subr.bf16.mxu0 0
  %970 = vmatpush1.bf16.msra.mxu0 0
  %971 = vmatprep.subr.bf16.mxu0 0
  %972 = vmatpush1.bf16.msra.mxu0 0
  %973 = vmatprep.subr.bf16.mxu0 0
  %974 = vmatpush1.bf16.msra.mxu0 0
  %975 = vmatprep.subr.bf16.mxu0 0
  %976 = vmatpush1.bf16.msra.mxu0 0
  %977 = vmatprep.subr.bf16.mxu0 0
  %978 = vmatpush1.bf16.msra.mxu0 0
  %979 = vmatprep.subr.bf16.mxu0 0
  %980 = vmatpush1.bf16.msra.mxu0 0
  %981 = vmatprep.subr.bf16.mxu0 0
  %982 = vmatpush1.bf16.msra.mxu0 0
  %983 = vmatprep.subr.bf16.mxu0 0
  %984 = vmatpush1.bf16.msra.mxu0 0
  %985 = vmatprep.mubr.bf16.mxu0 0
  %986 = vmatmul.mubr.bf16.gmra.mrb[0].mxu0 %v910
  %v987 = vpop.f32.mrb[0].mxu0
  %v988 = vadd.f32 %v658, %v987
  %v989 = vpop.f32.mrb[0].mxu0
  %v990 = vadd.f32 %v660, %v989
  %v991 = vpop.f32.mrb[0].mxu0
  %v992 = vpop.f32.mrb[0].mxu0
  %993 = vdwg.mxu0
  %994 = vmatprep.subr.bf16.mxu0 %v403
  %995 = vmatpush1.bf16.msra.mxu0 %v402
  %996 = vmatprep.subr.bf16.mxu0 %v418
  %997 = vmatpush1.bf16.msra.mxu0 %v417
  %998 = vmatprep.subr.bf16.mxu0 %v433
  %999 = vmatpush1.bf16.msra.mxu0 %v432
  %1000 = vmatprep.subr.bf16.mxu0 %v448
  %1001 = vmatpush1.bf16.msra.mxu0 %v447
  %1002 = vmatprep.subr.bf16.mxu0 %v463
  %1003 = vmatpush1.bf16.msra.mxu0 %v462
  %1004 = vmatprep.subr.bf16.mxu0 %v478
  %1005 = vmatpush1.bf16.msra.mxu0 %v477
  %1006 = vmatprep.subr.bf16.mxu0 0
  %1007 = vmatpush1.bf16.msra.mxu0 0
  %1008 = vmatprep.subr.bf16.mxu0 0
  %1009 = vmatpush1.bf16.msra.mxu0 0
  %1010 = vmatprep.subr.bf16.mxu0 0
  %1011 = vmatpush1.bf16.msra.mxu0 0
  %1012 = vmatprep.subr.bf16.mxu0 0
  %1013 = vmatpush1.bf16.msra.mxu0 0
  %1014 = vmatprep.subr.bf16.mxu0 0
  %1015 = vmatpush1.bf16.msra.mxu0 0
  %1016 = vmatprep.subr.bf16.mxu0 0
  %1017 = vmatpush1.bf16.msra.mxu0 0
  %1018 = vmatprep.subr.bf16.mxu0 0
  %1019 = vmatpush1.bf16.msra.mxu0 0
  %1020 = vmatprep.subr.bf16.mxu0 0
  %1021 = vmatpush1.bf16.msra.mxu0 0
  %1022 = vmatprep.subr.bf16.mxu0 0
  %1023 = vmatpush1.bf16.msra.mxu0 0
  %1024 = vmatprep.subr.bf16.mxu0 0
  %1025 = vmatpush1.bf16.msra.mxu0 0
  %1026 = vmatprep.mubr.bf16.mxu0 0
  %1027 = vmatmul.mubr.bf16.gmra.mrb[0].mxu0 %v910
  %v1028 = vpop.f32.mrb[0].mxu0
  %v1029 = vadd.f32 %v699, %v1028
  %v1030 = vpop.f32.mrb[0].mxu0
  %v1031 = vadd.f32 %v701, %v1030
  %v1032 = vpop.f32.mrb[0].mxu0
  %v1033 = vpop.f32.mrb[0].mxu0
  %1034 = vdwg.mxu0
  %1035 = vmatprep.subr.bf16.mxu0 %v405
  %1036 = vmatpush1.bf16.msra.mxu0 %v404
  %1037 = vmatprep.subr.bf16.mxu0 %v420
  %1038 = vmatpush1.bf16.msra.mxu0 %v419
  %1039 = vmatprep.subr.bf16.mxu0 %v435
  %1040 = vmatpush1.bf16.msra.mxu0 %v434
  %1041 = vmatprep.subr.bf16.mxu0 %v450
  %1042 = vmatpush1.bf16.msra.mxu0 %v449
  %1043 = vmatprep.subr.bf16.mxu0 %v465
  %1044 = vmatpush1.bf16.msra.mxu0 %v464
  %1045 = vmatprep.subr.bf16.mxu0 %v480
  %1046 = vmatpush1.bf16.msra.mxu0 %v479
  %1047 = vmatprep.subr.bf16.mxu0 0
  %1048 = vmatpush1.bf16.msra.mxu0 0
  %1049 = vmatprep.subr.bf16.mxu0 0
  %1050 = vmatpush1.bf16.msra.mxu0 0
  %1051 = vmatprep.subr.bf16.mxu0 0
  %1052 = vmatpush1.bf16.msra.mxu0 0
  %1053 = vmatprep.subr.bf16.mxu0 0
  %1054 = vmatpush1.bf16.msra.mxu0 0
  %1055 = vmatprep.subr.bf16.mxu0 0
  %1056 = vmatpush1.bf16.msra.mxu0 0
  %1057 = vmatprep.subr.bf16.mxu0 0
  %1058 = vmatpush1.bf16.msra.mxu0 0
  %1059 = vmatprep.subr.bf16.mxu0 0
  %1060 = vmatpush1.bf16.msra.mxu0 0
  %1061 = vmatprep.subr.bf16.mxu0 0
  %1062 = vmatpush1.bf16.msra.mxu0 0
  %1063 = vmatprep.subr.bf16.mxu0 0
  %1064 = vmatpush1.bf16.msra.mxu0 0
  %1065 = vmatprep.subr.bf16.mxu0 0
  %1066 = vmatpush1.bf16.msra.mxu0 0
  %1067 = vmatprep.mubr.bf16.mxu0 0
  %1068 = vmatmul.mubr.bf16.gmra.mrb[0].mxu0 %v910
  %v1069 = vpop.f32.mrb[0].mxu0
  %v1070 = vadd.f32 %v740, %v1069
  %v1071 = vpop.f32.mrb[0].mxu0
  %v1072 = vadd.f32 %v742, %v1071
  %v1073 = vpop.f32.mrb[0].mxu0
  %v1074 = vpop.f32.mrb[0].mxu0
  %1075 = vdwg.mxu0
  %1076 = vmatprep.subr.bf16.mxu0 %v407
  %1077 = vmatpush1.bf16.msra.mxu0 %v406
  %1078 = vmatprep.subr.bf16.mxu0 %v422
  %1079 = vmatpush1.bf16.msra.mxu0 %v421
  %1080 = vmatprep.subr.bf16.mxu0 %v437
  %1081 = vmatpush1.bf16.msra.mxu0 %v436
  %1082 = vmatprep.subr.bf16.mxu0 %v452
  %1083 = vmatpush1.bf16.msra.mxu0 %v451
  %1084 = vmatprep.subr.bf16.mxu0 %v467
  %1085 = vmatpush1.bf16.msra.mxu0 %v466
  %1086 = vmatprep.subr.bf16.mxu0 %v482
  %1087 = vmatpush1.bf16.msra.mxu0 %v481
  %1088 = vmatprep.subr.bf16.mxu0 0
  %1089 = vmatpush1.bf16.msra.mxu0 0
  %1090 = vmatprep.subr.bf16.mxu0 0
  %1091 = vmatpush1.bf16.msra.mxu0 0
  %1092 = vmatprep.subr.bf16.mxu0 0
  %1093 = vmatpush1.bf16.msra.mxu0 0
  %1094 = vmatprep.subr.bf16.mxu0 0
  %1095 = vmatpush1.bf16.msra.mxu0 0
  %1096 = vmatprep.subr.bf16.mxu0 0
  %1097 = vmatpush1.bf16.msra.mxu0 0
  %1098 = vmatprep.subr.bf16.mxu0 0
  %1099 = vmatpush1.bf16.msra.mxu0 0
  %1100 = vmatprep.subr.bf16.mxu0 0
  %1101 = vmatpush1.bf16.msra.mxu0 0
  %1102 = vmatprep.subr.bf16.mxu0 0
  %1103 = vmatpush1.bf16.msra.mxu0 0
  %1104 = vmatprep.subr.bf16.mxu0 0
  %1105 = vmatpush1.bf16.msra.mxu0 0
  %1106 = vmatprep.subr.bf16.mxu0 0
  %1107 = vmatpush1.bf16.msra.mxu0 0
  %1108 = vmatprep.mubr.bf16.mxu0 0
  %1109 = vmatmul.mubr.bf16.gmra.mrb[0].mxu0 %v910
  %v1110 = vpop.f32.mrb[0].mxu0
  %v1111 = vadd.f32 %v781, %v1110
  %v1112 = vpop.f32.mrb[0].mxu0
  %v1113 = vadd.f32 %v783, %v1112
  %v1114 = vpop.f32.mrb[0].mxu0
  %v1115 = vpop.f32.mrb[0].mxu0
  %1116 = vdwg.mxu0
  %1117 = vmatprep.subr.bf16.mxu0 %v409
  %1118 = vmatpush1.bf16.msra.mxu0 %v408
  %1119 = vmatprep.subr.bf16.mxu0 %v424
  %1120 = vmatpush1.bf16.msra.mxu0 %v423
  %1121 = vmatprep.subr.bf16.mxu0 %v439
  %1122 = vmatpush1.bf16.msra.mxu0 %v438
  %1123 = vmatprep.subr.bf16.mxu0 %v454
  %1124 = vmatpush1.bf16.msra.mxu0 %v453
  %1125 = vmatprep.subr.bf16.mxu0 %v469
  %1126 = vmatpush1.bf16.msra.mxu0 %v468
  %1127 = vmatprep.subr.bf16.mxu0 %v484
  %1128 = vmatpush1.bf16.msra.mxu0 %v483
  %1129 = vmatprep.subr.bf16.mxu0 0
  %1130 = vmatpush1.bf16.msra.mxu0 0
  %1131 = vmatprep.subr.bf16.mxu0 0
  %1132 = vmatpush1.bf16.msra.mxu0 0
  %1133 = vmatprep.subr.bf16.mxu0 0
  %1134 = vmatpush1.bf16.msra.mxu0 0
  %1135 = vmatprep.subr.bf16.mxu0 0
  %1136 = vmatpush1.bf16.msra.mxu0 0
  %1137 = vmatprep.subr.bf16.mxu0 0
  %1138 = vmatpush1.bf16.msra.mxu0 0
  %1139 = vmatprep.subr.bf16.mxu0 0
  %1140 = vmatpush1.bf16.msra.mxu0 0
  %1141 = vmatprep.subr.bf16.mxu0 0
  %1142 = vmatpush1.bf16.msra.mxu0 0
  %1143 = vmatprep.subr.bf16.mxu0 0
  %1144 = vmatpush1.bf16.msra.mxu0 0
  %1145 = vmatprep.subr.bf16.mxu0 0
  %1146 = vmatpush1.bf16.msra.mxu0 0
  %1147 = vmatprep.subr.bf16.mxu0 0
  %1148 = vmatpush1.bf16.msra.mxu0 0
  %1149 = vmatprep.mubr.bf16.mxu0 0
  %1150 = vmatmul.mubr.bf16.gmra.mrb[0].mxu0 %v910
  %v1151 = vpop.f32.mrb[0].mxu0
  %v1152 = vadd.f32 %v822, %v1151
  %v1153 = vpop.f32.mrb[0].mxu0
  %v1154 = vadd.f32 %v824, %v1153
  %v1155 = vpop.f32.mrb[0].mxu0
  %v1156 = vpop.f32.mrb[0].mxu0
  %1157 = vdwg.mxu0
  %1158 = vmatprep.subr.bf16.mxu0 %v411
  %1159 = vmatpush1.bf16.msra.mxu0 %v410
  %1160 = vmatprep.subr.bf16.mxu0 %v426
  %1161 = vmatpush1.bf16.msra.mxu0 %v425
  %1162 = vmatprep.subr.bf16.mxu0 %v441
  %1163 = vmatpush1.bf16.msra.mxu0 %v440
  %1164 = vmatprep.subr.bf16.mxu0 %v456
  %1165 = vmatpush1.bf16.msra.mxu0 %v455
  %1166 = vmatprep.subr.bf16.mxu0 %v471
  %1167 = vmatpush1.bf16.msra.mxu0 %v470
  %1168 = vmatprep.subr.bf16.mxu0 %v486
  %1169 = vmatpush1.bf16.msra.mxu0 %v485
  %1170 = vmatprep.subr.bf16.mxu0 0
  %1171 = vmatpush1.bf16.msra.mxu0 0
  %1172 = vmatprep.subr.bf16.mxu0 0
  %1173 = vmatpush1.bf16.msra.mxu0 0
  %1174 = vmatprep.subr.bf16.mxu0 0
  %1175 = vmatpush1.bf16.msra.mxu0 0
  %1176 = vmatprep.subr.bf16.mxu0 0
  %1177 = vmatpush1.bf16.msra.mxu0 0
  %1178 = vmatprep.subr.bf16.mxu0 0
  %1179 = vmatpush1.bf16.msra.mxu0 0
  %1180 = vmatprep.subr.bf16.mxu0 0
  %1181 = vmatpush1.bf16.msra.mxu0 0
  %1182 = vmatprep.subr.bf16.mxu0 0
  %1183 = vmatpush1.bf16.msra.mxu0 0
  %1184 = vmatprep.subr.bf16.mxu0 0
  %1185 = vmatpush1.bf16.msra.mxu0 0
  %1186 = vmatprep.subr.bf16.mxu0 0
  %1187 = vmatpush1.bf16.msra.mxu0 0
  %1188 = vmatprep.subr.bf16.mxu0 0
  %1189 = vmatpush1.bf16.msra.mxu0 0
  %1190 = vmatprep.mubr.bf16.mxu0 0
  %1191 = vmatmul.mubr.bf16.gmra.mrb[0].mxu0 %v910
  %v1192 = vpop.f32.mrb[0].mxu0
  %v1193 = vadd.f32 %v863, %v1192
  %v1194 = vpop.f32.mrb[0].mxu0
  %v1195 = vadd.f32 %v865, %v1194
  %v1196 = vpop.f32.mrb[0].mxu0
  %v1197 = vpop.f32.mrb[0].mxu0
  %1198 = vdwg.mxu0
  %1199 = vmatprep.subr.bf16.mxu0 0
  %1200 = vmatpush1.bf16.msra.mxu0 %v412
  %1201 = vmatprep.subr.bf16.mxu0 0
  %1202 = vmatpush1.bf16.msra.mxu0 %v427
  %1203 = vmatprep.subr.bf16.mxu0 0
  %1204 = vmatpush1.bf16.msra.mxu0 %v442
  %1205 = vmatprep.subr.bf16.mxu0 0
  %1206 = vmatpush1.bf16.msra.mxu0 %v457
  %1207 = vmatprep.subr.bf16.mxu0 0
  %1208 = vmatpush1.bf16.msra.mxu0 %v472
  %1209 = vmatprep.subr.bf16.mxu0 0
  %1210 = vmatpush1.bf16.msra.mxu0 %v487
  %1211 = vmatprep.subr.bf16.mxu0 0
  %1212 = vmatpush1.bf16.msra.mxu0 0
  %1213 = vmatprep.subr.bf16.mxu0 0
  %1214 = vmatpush1.bf16.msra.mxu0 0
  %1215 = vmatprep.subr.bf16.mxu0 0
  %1216 = vmatpush1.bf16.msra.mxu0 0
  %1217 = vmatprep.subr.bf16.mxu0 0
  %1218 = vmatpush1.bf16.msra.mxu0 0
  %1219 = vmatprep.subr.bf16.mxu0 0
  %1220 = vmatpush1.bf16.msra.mxu0 0
  %1221 = vmatprep.subr.bf16.mxu0 0
  %1222 = vmatpush1.bf16.msra.mxu0 0
  %1223 = vmatprep.subr.bf16.mxu0 0
  %1224 = vmatpush1.bf16.msra.mxu0 0
  %1225 = vmatprep.subr.bf16.mxu0 0
  %1226 = vmatpush1.bf16.msra.mxu0 0
  %1227 = vmatprep.subr.bf16.mxu0 0
  %1228 = vmatpush1.bf16.msra.mxu0 0
  %1229 = vmatprep.subr.bf16.mxu0 0
  %1230 = vmatpush1.bf16.msra.mxu0 0
  %1231 = vmatprep.mubr.bf16.mxu0 0
  %1232 = vmatmul.mubr.bf16.gmra.mrb[0].mxu0 %v910
  %v1233 = vpop.f32.mrb[0].mxu0
  %v1234 = vadd.f32 %v904, %v1233
  %v1235 = vpop.f32.mrb[0].mxu0
  %v1236 = vpop.f32.mrb[0].mxu0
  %v1237 = vpop.f32.mrb[0].mxu0
  %1238 = vdwg.mxu0
  %v1240 = vsel %vm578, %v25, 0
  %1242 = vmatprep.subr.bf16.mxu0 %v399
  %1243 = vmatpush1.bf16.msra.mxu0 %v398
  %1244 = vmatprep.subr.bf16.mxu0 %v414
  %1245 = vmatpush1.bf16.msra.mxu0 %v413
  %1246 = vmatprep.subr.bf16.mxu0 %v429
  %1247 = vmatpush1.bf16.msra.mxu0 %v428
  %1248 = vmatprep.subr.bf16.mxu0 %v444
  %1249 = vmatpush1.bf16.msra.mxu0 %v443
  %1250 = vmatprep.subr.bf16.mxu0 %v459
  %1251 = vmatpush1.bf16.msra.mxu0 %v458
  %1252 = vmatprep.subr.bf16.mxu0 %v474
  %1253 = vmatpush1.bf16.msra.mxu0 %v473
  %1254 = vmatprep.subr.bf16.mxu0 0
  %1255 = vmatpush1.bf16.msra.mxu0 0
  %1256 = vmatprep.subr.bf16.mxu0 0
  %1257 = vmatpush1.bf16.msra.mxu0 0
  %1258 = vmatprep.subr.bf16.mxu0 0
  %1259 = vmatpush1.bf16.msra.mxu0 0
  %1260 = vmatprep.subr.bf16.mxu0 0
  %1261 = vmatpush1.bf16.msra.mxu0 0
  %1262 = vmatprep.subr.bf16.mxu0 0
  %1263 = vmatpush1.bf16.msra.mxu0 0
  %1264 = vmatprep.subr.bf16.mxu0 0
  %1265 = vmatpush1.bf16.msra.mxu0 0
  %1266 = vmatprep.subr.bf16.mxu0 0
  %1267 = vmatpush1.bf16.msra.mxu0 0
  %1268 = vmatprep.subr.bf16.mxu0 0
  %1269 = vmatpush1.bf16.msra.mxu0 0
  %1270 = vmatprep.subr.bf16.mxu0 0
  %1271 = vmatpush1.bf16.msra.mxu0 0
  %1272 = vmatprep.subr.bf16.mxu0 0
  %1273 = vmatpush1.bf16.msra.mxu0 0
  %1274 = vmatprep.mubr.bf16.mxu0 0
  %1275 = vmatmul.mubr.bf16.gmra.mrb[0].mxu0 %v1240
  %v1276 = vpop.f32.mrb[0].mxu0
  %v1277 = vadd.f32 0.0, %v1276
  %v1278 = vpop.f32.mrb[0].mxu0
  %v1279 = vadd.f32 0.0, %v1278
  %v1280 = vpop.f32.mrb[0].mxu0
  %v1281 = vpop.f32.mrb[0].mxu0
  %1282 = vdwg.mxu0
  %1283 = vmatprep.subr.bf16.mxu0 %v401
  %1284 = vmatpush1.bf16.msra.mxu0 %v400
  %1285 = vmatprep.subr.bf16.mxu0 %v416
  %1286 = vmatpush1.bf16.msra.mxu0 %v415
  %1287 = vmatprep.subr.bf16.mxu0 %v431
  %1288 = vmatpush1.bf16.msra.mxu0 %v430
  %1289 = vmatprep.subr.bf16.mxu0 %v446
  %1290 = vmatpush1.bf16.msra.mxu0 %v445
  %1291 = vmatprep.subr.bf16.mxu0 %v461
  %1292 = vmatpush1.bf16.msra.mxu0 %v460
  %1293 = vmatprep.subr.bf16.mxu0 %v476
  %1294 = vmatpush1.bf16.msra.mxu0 %v475
  %1295 = vmatprep.subr.bf16.mxu0 0
  %1296 = vmatpush1.bf16.msra.mxu0 0
  %1297 = vmatprep.subr.bf16.mxu0 0
  %1298 = vmatpush1.bf16.msra.mxu0 0
  %1299 = vmatprep.subr.bf16.mxu0 0
  %1300 = vmatpush1.bf16.msra.mxu0 0
  %1301 = vmatprep.subr.bf16.mxu0 0
  %1302 = vmatpush1.bf16.msra.mxu0 0
  %1303 = vmatprep.subr.bf16.mxu0 0
  %1304 = vmatpush1.bf16.msra.mxu0 0
  %1305 = vmatprep.subr.bf16.mxu0 0
  %1306 = vmatpush1.bf16.msra.mxu0 0
  %1307 = vmatprep.subr.bf16.mxu0 0
  %1308 = vmatpush1.bf16.msra.mxu0 0
  %1309 = vmatprep.subr.bf16.mxu0 0
  %1310 = vmatpush1.bf16.msra.mxu0 0
  %1311 = vmatprep.subr.bf16.mxu0 0
  %1312 = vmatpush1.bf16.msra.mxu0 0
  %1313 = vmatprep.subr.bf16.mxu0 0
  %1314 = vmatpush1.bf16.msra.mxu0 0
  %1315 = vmatprep.mubr.bf16.mxu0 0
  %1316 = vmatmul.mubr.bf16.gmra.mrb[0].mxu0 %v1240
  %v1317 = vpop.f32.mrb[0].mxu0
  %v1318 = vadd.f32 0.0, %v1317
  %v1319 = vpop.f32.mrb[0].mxu0
  %v1320 = vadd.f32 0.0, %v1319
  %v1321 = vpop.f32.mrb[0].mxu0
  %v1322 = vpop.f32.mrb[0].mxu0
  %1323 = vdwg.mxu0
  %1324 = vmatprep.subr.bf16.mxu0 %v403
  %1325 = vmatpush1.bf16.msra.mxu0 %v402
  %1326 = vmatprep.subr.bf16.mxu0 %v418
  %1327 = vmatpush1.bf16.msra.mxu0 %v417
  %1328 = vmatprep.subr.bf16.mxu0 %v433
  %1329 = vmatpush1.bf16.msra.mxu0 %v432
  %1330 = vmatprep.subr.bf16.mxu0 %v448
  %1331 = vmatpush1.bf16.msra.mxu0 %v447
  %1332 = vmatprep.subr.bf16.mxu0 %v463
  %1333 = vmatpush1.bf16.msra.mxu0 %v462
  %1334 = vmatprep.subr.bf16.mxu0 %v478
  %1335 = vmatpush1.bf16.msra.mxu0 %v477
  %1336 = vmatprep.subr.bf16.mxu0 0
  %1337 = vmatpush1.bf16.msra.mxu0 0
  %1338 = vmatprep.subr.bf16.mxu0 0
  %1339 = vmatpush1.bf16.msra.mxu0 0
  %1340 = vmatprep.subr.bf16.mxu0 0
  %1341 = vmatpush1.bf16.msra.mxu0 0
  %1342 = vmatprep.subr.bf16.mxu0 0
  %1343 = vmatpush1.bf16.msra.mxu0 0
  %1344 = vmatprep.subr.bf16.mxu0 0
  %1345 = vmatpush1.bf16.msra.mxu0 0
  %1346 = vmatprep.subr.bf16.mxu0 0
  %1347 = vmatpush1.bf16.msra.mxu0 0
  %1348 = vmatprep.subr.bf16.mxu0 0
  %1349 = vmatpush1.bf16.msra.mxu0 0
  %1350 = vmatprep.subr.bf16.mxu0 0
  %1351 = vmatpush1.bf16.msra.mxu0 0
  %1352 = vmatprep.subr.bf16.mxu0 0
  %1353 = vmatpush1.bf16.msra.mxu0 0
  %1354 = vmatprep.subr.bf16.mxu0 0
  %1355 = vmatpush1.bf16.msra.mxu0 0
  %1356 = vmatprep.mubr.bf16.mxu0 0
  %1357 = vmatmul.mubr.bf16.gmra.mrb[0].mxu0 %v1240
  %v1358 = vpop.f32.mrb[0].mxu0
  %v1359 = vadd.f32 0.0, %v1358
  %v1360 = vpop.f32.mrb[0].mxu0
  %v1361 = vadd.f32 0.0, %v1360
  %v1362 = vpop.f32.mrb[0].mxu0
  %v1363 = vpop.f32.mrb[0].mxu0
  %1364 = vdwg.mxu0
  %1365 = vmatprep.subr.bf16.mxu0 %v405
  %1366 = vmatpush1.bf16.msra.mxu0 %v404
  %1367 = vmatprep.subr.bf16.mxu0 %v420
  %1368 = vmatpush1.bf16.msra.mxu0 %v419
  %1369 = vmatprep.subr.bf16.mxu0 %v435
  %1370 = vmatpush1.bf16.msra.mxu0 %v434
  %1371 = vmatprep.subr.bf16.mxu0 %v450
  %1372 = vmatpush1.bf16.msra.mxu0 %v449
  %1373 = vmatprep.subr.bf16.mxu0 %v465
  %1374 = vmatpush1.bf16.msra.mxu0 %v464
  %1375 = vmatprep.subr.bf16.mxu0 %v480
  %1376 = vmatpush1.bf16.msra.mxu0 %v479
  %1377 = vmatprep.subr.bf16.mxu0 0
  %1378 = vmatpush1.bf16.msra.mxu0 0
  %1379 = vmatprep.subr.bf16.mxu0 0
  %1380 = vmatpush1.bf16.msra.mxu0 0
  %1381 = vmatprep.subr.bf16.mxu0 0
  %1382 = vmatpush1.bf16.msra.mxu0 0
  %1383 = vmatprep.subr.bf16.mxu0 0
  %1384 = vmatpush1.bf16.msra.mxu0 0
  %1385 = vmatprep.subr.bf16.mxu0 0
  %1386 = vmatpush1.bf16.msra.mxu0 0
  %1387 = vmatprep.subr.bf16.mxu0 0
  %1388 = vmatpush1.bf16.msra.mxu0 0
  %1389 = vmatprep.subr.bf16.mxu0 0
  %1390 = vmatpush1.bf16.msra.mxu0 0
  %1391 = vmatprep.subr.bf16.mxu0 0
  %1392 = vmatpush1.bf16.msra.mxu0 0
  %1393 = vmatprep.subr.bf16.mxu0 0
  %1394 = vmatpush1.bf16.msra.mxu0 0
  %1395 = vmatprep.subr.bf16.mxu0 0
  %1396 = vmatpush1.bf16.msra.mxu0 0
  %1397 = vmatprep.mubr.bf16.mxu0 0
  %1398 = vmatmul.mubr.bf16.gmra.mrb[0].mxu0 %v1240
  %v1399 = vpop.f32.mrb[0].mxu0
  %v1400 = vadd.f32 0.0, %v1399
  %v1401 = vpop.f32.mrb[0].mxu0
  %v1402 = vadd.f32 0.0, %v1401
  %v1403 = vpop.f32.mrb[0].mxu0
  %v1404 = vpop.f32.mrb[0].mxu0
  %1405 = vdwg.mxu0
  %1406 = vmatprep.subr.bf16.mxu0 %v407
  %1407 = vmatpush1.bf16.msra.mxu0 %v406
  %1408 = vmatprep.subr.bf16.mxu0 %v422
  %1409 = vmatpush1.bf16.msra.mxu0 %v421
  %1410 = vmatprep.subr.bf16.mxu0 %v437
  %1411 = vmatpush1.bf16.msra.mxu0 %v436
  %1412 = vmatprep.subr.bf16.mxu0 %v452
  %1413 = vmatpush1.bf16.msra.mxu0 %v451
  %1414 = vmatprep.subr.bf16.mxu0 %v467
  %1415 = vmatpush1.bf16.msra.mxu0 %v466
  %1416 = vmatprep.subr.bf16.mxu0 %v482
  %1417 = vmatpush1.bf16.msra.mxu0 %v481
  %1418 = vmatprep.subr.bf16.mxu0 0
  %1419 = vmatpush1.bf16.msra.mxu0 0
  %1420 = vmatprep.subr.bf16.mxu0 0
  %1421 = vmatpush1.bf16.msra.mxu0 0
  %1422 = vmatprep.subr.bf16.mxu0 0
  %1423 = vmatpush1.bf16.msra.mxu0 0
  %1424 = vmatprep.subr.bf16.mxu0 0
  %1425 = vmatpush1.bf16.msra.mxu0 0
  %1426 = vmatprep.subr.bf16.mxu0 0
  %1427 = vmatpush1.bf16.msra.mxu0 0
  %1428 = vmatprep.subr.bf16.mxu0 0
  %1429 = vmatpush1.bf16.msra.mxu0 0
  %1430 = vmatprep.subr.bf16.mxu0 0
  %1431 = vmatpush1.bf16.msra.mxu0 0
  %1432 = vmatprep.subr.bf16.mxu0 0
  %1433 = vmatpush1.bf16.msra.mxu0 0
  %1434 = vmatprep.subr.bf16.mxu0 0
  %1435 = vmatpush1.bf16.msra.mxu0 0
  %1436 = vmatprep.subr.bf16.mxu0 0
  %1437 = vmatpush1.bf16.msra.mxu0 0
  %1438 = vmatprep.mubr.bf16.mxu0 0
  %1439 = vmatmul.mubr.bf16.gmra.mrb[0].mxu0 %v1240
  %v1440 = vpop.f32.mrb[0].mxu0
  %v1441 = vadd.f32 0.0, %v1440
  %v1442 = vpop.f32.mrb[0].mxu0
  %v1443 = vadd.f32 0.0, %v1442
  %v1444 = vpop.f32.mrb[0].mxu0
  %v1445 = vpop.f32.mrb[0].mxu0
  %1446 = vdwg.mxu0
  %1447 = vmatprep.subr.bf16.mxu0 %v409
  %1448 = vmatpush1.bf16.msra.mxu0 %v408
  %1449 = vmatprep.subr.bf16.mxu0 %v424
  %1450 = vmatpush1.bf16.msra.mxu0 %v423
  %1451 = vmatprep.subr.bf16.mxu0 %v439
  %1452 = vmatpush1.bf16.msra.mxu0 %v438
  %1453 = vmatprep.subr.bf16.mxu0 %v454
  %1454 = vmatpush1.bf16.msra.mxu0 %v453
  %1455 = vmatprep.subr.bf16.mxu0 %v469
  %1456 = vmatpush1.bf16.msra.mxu0 %v468
  %1457 = vmatprep.subr.bf16.mxu0 %v484
  %1458 = vmatpush1.bf16.msra.mxu0 %v483
  %1459 = vmatprep.subr.bf16.mxu0 0
  %1460 = vmatpush1.bf16.msra.mxu0 0
  %1461 = vmatprep.subr.bf16.mxu0 0
  %1462 = vmatpush1.bf16.msra.mxu0 0
  %1463 = vmatprep.subr.bf16.mxu0 0
  %1464 = vmatpush1.bf16.msra.mxu0 0
  %1465 = vmatprep.subr.bf16.mxu0 0
  %1466 = vmatpush1.bf16.msra.mxu0 0
  %1467 = vmatprep.subr.bf16.mxu0 0
  %1468 = vmatpush1.bf16.msra.mxu0 0
  %1469 = vmatprep.subr.bf16.mxu0 0
  %1470 = vmatpush1.bf16.msra.mxu0 0
  %1471 = vmatprep.subr.bf16.mxu0 0
  %1472 = vmatpush1.bf16.msra.mxu0 0
  %1473 = vmatprep.subr.bf16.mxu0 0
  %1474 = vmatpush1.bf16.msra.mxu0 0
  %1475 = vmatprep.subr.bf16.mxu0 0
  %1476 = vmatpush1.bf16.msra.mxu0 0
  %1477 = vmatprep.subr.bf16.mxu0 0
  %1478 = vmatpush1.bf16.msra.mxu0 0
  %1479 = vmatprep.mubr.bf16.mxu0 0
  %1480 = vmatmul.mubr.bf16.gmra.mrb[0].mxu0 %v1240
  %v1481 = vpop.f32.mrb[0].mxu0
  %v1482 = vadd.f32 0.0, %v1481
  %v1483 = vpop.f32.mrb[0].mxu0
  %v1484 = vadd.f32 0.0, %v1483
  %v1485 = vpop.f32.mrb[0].mxu0
  %v1486 = vpop.f32.mrb[0].mxu0
  %1487 = vdwg.mxu0
  %1488 = vmatprep.subr.bf16.mxu0 %v411
  %1489 = vmatpush1.bf16.msra.mxu0 %v410
  %1490 = vmatprep.subr.bf16.mxu0 %v426
  %1491 = vmatpush1.bf16.msra.mxu0 %v425
  %1492 = vmatprep.subr.bf16.mxu0 %v441
  %1493 = vmatpush1.bf16.msra.mxu0 %v440
  %1494 = vmatprep.subr.bf16.mxu0 %v456
  %1495 = vmatpush1.bf16.msra.mxu0 %v455
  %1496 = vmatprep.subr.bf16.mxu0 %v471
  %1497 = vmatpush1.bf16.msra.mxu0 %v470
  %1498 = vmatprep.subr.bf16.mxu0 %v486
  %1499 = vmatpush1.bf16.msra.mxu0 %v485
  %1500 = vmatprep.subr.bf16.mxu0 0
  %1501 = vmatpush1.bf16.msra.mxu0 0
  %1502 = vmatprep.subr.bf16.mxu0 0
  %1503 = vmatpush1.bf16.msra.mxu0 0
  %1504 = vmatprep.subr.bf16.mxu0 0
  %1505 = vmatpush1.bf16.msra.mxu0 0
  %1506 = vmatprep.subr.bf16.mxu0 0
  %1507 = vmatpush1.bf16.msra.mxu0 0
  %1508 = vmatprep.subr.bf16.mxu0 0
  %1509 = vmatpush1.bf16.msra.mxu0 0
  %1510 = vmatprep.subr.bf16.mxu0 0
  %1511 = vmatpush1.bf16.msra.mxu0 0
  %1512 = vmatprep.subr.bf16.mxu0 0
  %1513 = vmatpush1.bf16.msra.mxu0 0
  %1514 = vmatprep.subr.bf16.mxu0 0
  %1515 = vmatpush1.bf16.msra.mxu0 0
  %1516 = vmatprep.subr.bf16.mxu0 0
  %1517 = vmatpush1.bf16.msra.mxu0 0
  %1518 = vmatprep.subr.bf16.mxu0 0
  %1519 = vmatpush1.bf16.msra.mxu0 0
  %1520 = vmatprep.mubr.bf16.mxu0 0
  %1521 = vmatmul.mubr.bf16.gmra.mrb[0].mxu0 %v1240
  %v1522 = vpop.f32.mrb[0].mxu0
  %v1523 = vadd.f32 0.0, %v1522
  %v1524 = vpop.f32.mrb[0].mxu0
  %v1525 = vadd.f32 0.0, %v1524
  %v1526 = vpop.f32.mrb[0].mxu0
  %v1527 = vpop.f32.mrb[0].mxu0
  %1528 = vdwg.mxu0
  %1529 = vmatprep.subr.bf16.mxu0 0
  %1530 = vmatpush1.bf16.msra.mxu0 %v412
  %1531 = vmatprep.subr.bf16.mxu0 0
  %1532 = vmatpush1.bf16.msra.mxu0 %v427
  %1533 = vmatprep.subr.bf16.mxu0 0
  %1534 = vmatpush1.bf16.msra.mxu0 %v442
  %1535 = vmatprep.subr.bf16.mxu0 0
  %1536 = vmatpush1.bf16.msra.mxu0 %v457
  %1537 = vmatprep.subr.bf16.mxu0 0
  %1538 = vmatpush1.bf16.msra.mxu0 %v472
  %1539 = vmatprep.subr.bf16.mxu0 0
  %1540 = vmatpush1.bf16.msra.mxu0 %v487
  %1541 = vmatprep.subr.bf16.mxu0 0
  %1542 = vmatpush1.bf16.msra.mxu0 0
  %1543 = vmatprep.subr.bf16.mxu0 0
  %1544 = vmatpush1.bf16.msra.mxu0 0
  %1545 = vmatprep.subr.bf16.mxu0 0
  %1546 = vmatpush1.bf16.msra.mxu0 0
  %1547 = vmatprep.subr.bf16.mxu0 0
  %1548 = vmatpush1.bf16.msra.mxu0 0
  %1549 = vmatprep.subr.bf16.mxu0 0
  %1550 = vmatpush1.bf16.msra.mxu0 0
  %1551 = vmatprep.subr.bf16.mxu0 0
  %1552 = vmatpush1.bf16.msra.mxu0 0
  %1553 = vmatprep.subr.bf16.mxu0 0
  %1554 = vmatpush1.bf16.msra.mxu0 0
  %1555 = vmatprep.subr.bf16.mxu0 0
  %1556 = vmatpush1.bf16.msra.mxu0 0
  %1557 = vmatprep.subr.bf16.mxu0 0
  %1558 = vmatpush1.bf16.msra.mxu0 0
  %1559 = vmatprep.subr.bf16.mxu0 0
  %1560 = vmatpush1.bf16.msra.mxu0 0
  %1561 = vmatprep.mubr.bf16.mxu0 0
  %1562 = vmatmul.mubr.bf16.gmra.mrb[0].mxu0 %v1240
  %v1563 = vpop.f32.mrb[0].mxu0
  %v1564 = vadd.f32 0.0, %v1563
  %v1565 = vpop.f32.mrb[0].mxu0
  %v1566 = vpop.f32.mrb[0].mxu0
  %v1567 = vpop.f32.mrb[0].mxu0
  %1568 = vdwg.mxu0
  %v1569 = vadd.f32 %v947, %v1277
  %v1570 = vadd.f32 %v949, %v1279
  %v1571 = vadd.f32 %v988, %v1318
  %v1572 = vadd.f32 %v990, %v1320
  %v1573 = vadd.f32 %v1029, %v1359
  %v1574 = vadd.f32 %v1031, %v1361
  %v1575 = vadd.f32 %v1070, %v1400
  %v1576 = vadd.f32 %v1072, %v1402
  %v1577 = vadd.f32 %v1111, %v1441
  %v1578 = vadd.f32 %v1113, %v1443
  %v1579 = vadd.f32 %v1152, %v1482
  %v1580 = vadd.f32 %v1154, %v1484
  %v1581 = vadd.f32 %v1193, %v1523
  %v1582 = vadd.f32 %v1195, %v1525
  %v1583 = vadd.f32 %v1234, %v1564
  %v1584 = vld [vmem:[%s2] sm:$0xff]
  %v1585 = vld [vmem:[%s2 + $0x8] sm:$0xff]
  %v1588 = vlaneseq
  %v1589 = vshrl.u32 %v1588, 7
  %v1590 = vsub.s32 0, %v1589
  %v1591 = vrot.slane %v1584, %v1590
  %v1592 = vlaneseq
  %v1593 = vshrl.u32 %v1592, 7
  %v1594 = vsub.s32 1, %v1593
  %v1595 = vrot.slane %v1584, %v1594
  %v1596 = vlaneseq
  %v1597 = vshrl.u32 %v1596, 7
  %v1598 = vsub.s32 2, %v1597
  %v1599 = vrot.slane %v1584, %v1598
  %v1600 = vlaneseq
  %v1601 = vshrl.u32 %v1600, 7
  %v1602 = vsub.s32 3, %v1601
  %v1603 = vrot.slane %v1584, %v1602
  %v1604 = vlaneseq
  %v1605 = vshrl.u32 %v1604, 7
  %v1606 = vsub.s32 4, %v1605
  %v1607 = vrot.slane %v1584, %v1606
  %v1608 = vlaneseq
  %v1609 = vshrl.u32 %v1608, 7
  %v1610 = vsub.s32 5, %v1609
  %v1611 = vrot.slane %v1584, %v1610
  %v1612 = vlaneseq
  %v1613 = vshrl.u32 %v1612, 7
  %v1614 = vsub.s32 6, %v1613
  %v1615 = vrot.slane %v1584, %v1614
  %v1616 = vlaneseq
  %v1617 = vshrl.u32 %v1616, 7
  %v1618 = vsub.s32 7, %v1617
  %v1619 = vrot.slane %v1584, %v1618
  %v1620 = vlaneseq
  %v1621 = vshrl.u32 %v1620, 7
  %v1622 = vsub.s32 0, %v1621
  %v1623 = vrot.slane %v1585, %v1622
  %v1624 = vlaneseq
  %v1625 = vshrl.u32 %v1624, 7
  %v1626 = vsub.s32 1, %v1625
  %v1627 = vrot.slane %v1585, %v1626
  %v1628 = vlaneseq
  %v1629 = vshrl.u32 %v1628, 7
  %v1630 = vsub.s32 2, %v1629
  %v1631 = vrot.slane %v1585, %v1630
  %v1632 = vlaneseq
  %v1633 = vshrl.u32 %v1632, 7
  %v1634 = vsub.s32 3, %v1633
  %v1635 = vrot.slane %v1585, %v1634
  %v1636 = vlaneseq
  %v1637 = vshrl.u32 %v1636, 7
  %v1638 = vsub.s32 4, %v1637
  %v1639 = vrot.slane %v1585, %v1638
  %v1640 = vlaneseq
  %v1641 = vshrl.u32 %v1640, 7
  %v1642 = vsub.s32 5, %v1641
  %v1643 = vrot.slane %v1585, %v1642
  %v1644 = vlaneseq
  %v1645 = vshrl.u32 %v1644, 7
  %v1646 = vsub.s32 6, %v1645
  %v1647 = vrot.slane %v1585, %v1646
  %v1663 = vmul.f32 %v1569, %v1591
  %v1664 = vmul.f32 %v1570, %v1595
  %v1665 = vmul.f32 %v1571, %v1599
  %v1666 = vmul.f32 %v1572, %v1603
  %v1667 = vmul.f32 %v1573, %v1607
  %v1668 = vmul.f32 %v1574, %v1611
  %v1669 = vmul.f32 %v1575, %v1615
  %v1670 = vmul.f32 %v1576, %v1619
  %v1671 = vmul.f32 %v1577, %v1623
  %v1672 = vmul.f32 %v1578, %v1627
  %v1673 = vmul.f32 %v1579, %v1631
  %v1674 = vmul.f32 %v1580, %v1635
  %v1675 = vmul.f32 %v1581, %v1639
  %v1676 = vmul.f32 %v1582, %v1643
  %v1677 = vmul.f32 %v1583, %v1647
  %v1678 = vld [vmem:[%s3] sm:$0xff]
  %v1679 = vld [vmem:[%s3 + $0x8] sm:$0xff]
  %v1682 = vlaneseq
  %v1683 = vshrl.u32 %v1682, 7
  %v1684 = vsub.s32 0, %v1683
  %v1685 = vrot.slane %v1678, %v1684
  %v1686 = vlaneseq
  %v1687 = vshrl.u32 %v1686, 7
  %v1688 = vsub.s32 1, %v1687
  %v1689 = vrot.slane %v1678, %v1688
  %v1690 = vlaneseq
  %v1691 = vshrl.u32 %v1690, 7
  %v1692 = vsub.s32 2, %v1691
  %v1693 = vrot.slane %v1678, %v1692
  %v1694 = vlaneseq
  %v1695 = vshrl.u32 %v1694, 7
  %v1696 = vsub.s32 3, %v1695
  %v1697 = vrot.slane %v1678, %v1696
  %v1698 = vlaneseq
  %v1699 = vshrl.u32 %v1698, 7
  %v1700 = vsub.s32 4, %v1699
  %v1701 = vrot.slane %v1678, %v1700
  %v1702 = vlaneseq
  %v1703 = vshrl.u32 %v1702, 7
  %v1704 = vsub.s32 5, %v1703
  %v1705 = vrot.slane %v1678, %v1704
  %v1706 = vlaneseq
  %v1707 = vshrl.u32 %v1706, 7
  %v1708 = vsub.s32 6, %v1707
  %v1709 = vrot.slane %v1678, %v1708
  %v1710 = vlaneseq
  %v1711 = vshrl.u32 %v1710, 7
  %v1712 = vsub.s32 7, %v1711
  %v1713 = vrot.slane %v1678, %v1712
  %v1714 = vlaneseq
  %v1715 = vshrl.u32 %v1714, 7
  %v1716 = vsub.s32 0, %v1715
  %v1717 = vrot.slane %v1679, %v1716
  %v1718 = vlaneseq
  %v1719 = vshrl.u32 %v1718, 7
  %v1720 = vsub.s32 1, %v1719
  %v1721 = vrot.slane %v1679, %v1720
  %v1722 = vlaneseq
  %v1723 = vshrl.u32 %v1722, 7
  %v1724 = vsub.s32 2, %v1723
  %v1725 = vrot.slane %v1679, %v1724
  %v1726 = vlaneseq
  %v1727 = vshrl.u32 %v1726, 7
  %v1728 = vsub.s32 3, %v1727
  %v1729 = vrot.slane %v1679, %v1728
  %v1730 = vlaneseq
  %v1731 = vshrl.u32 %v1730, 7
  %v1732 = vsub.s32 4, %v1731
  %v1733 = vrot.slane %v1679, %v1732
  %v1734 = vlaneseq
  %v1735 = vshrl.u32 %v1734, 7
  %v1736 = vsub.s32 5, %v1735
  %v1737 = vrot.slane %v1679, %v1736
  %v1738 = vlaneseq
  %v1739 = vshrl.u32 %v1738, 7
  %v1740 = vsub.s32 6, %v1739
  %v1741 = vrot.slane %v1679, %v1740
  %v1757 = vadd.f32 %v1663, %v1685
  %v1758 = vadd.f32 %v1664, %v1689
  %v1759 = vadd.f32 %v1665, %v1693
  %v1760 = vadd.f32 %v1666, %v1697
  %v1761 = vadd.f32 %v1667, %v1701
  %v1762 = vadd.f32 %v1668, %v1705
  %v1763 = vadd.f32 %v1669, %v1709
  %v1764 = vadd.f32 %v1670, %v1713
  %v1765 = vadd.f32 %v1671, %v1717
  %v1766 = vadd.f32 %v1672, %v1721
  %v1767 = vadd.f32 %v1673, %v1725
  %v1768 = vadd.f32 %v1674, %v1729
  %v1769 = vadd.f32 %v1675, %v1733
  %v1770 = vadd.f32 %v1676, %v1737
  %v1771 = vadd.f32 %v1677, %v1741
  %v1772 = vand.u32 2147483647, %v1757
  %vm1773 = vcmp.le.f32.partialorder %v1772, 0.7853982
  %vm1774 = vcmp.lt.s32.totalorder %v1757, 0
  %v1775 = vand.u32 %v1757, 2139095040
  %v1776 = vshrl.u32 %v1775, 23
  %v1777 = vsub.s32 %v1776, 127
  %v1778 = vand.u32 2147483647, %v1757
  %v1779 = vand.u32 %v1778, 8388607
  %v1780 = vor.u32 %v1779, 8388608
  %v1781 = vsub.s32 0, %v1780
  %v1782 = vadd.s32 %v1777, 1
  %vm1783 = vcmp.gt.s32.totalorder %v1782, 0
  %v1784 = vsel %vm1783, %v1782, 0
  %v1785 = vshrl.u32 %v1784, 5
  %v1786 = vand.u32 %v1784, 31
  %v1787 = vsub.s32 32, %v1786
  %v1788 = vshrl.u32 683565275, %v1787
  %v1789 = vshll.u32 683565275, %v1786
  %v1790 = vshrl.u32 2475754826, %v1787
  %v1791 = vor.u32 %v1789, %v1790
  %v1792 = vshll.u32 2475754826, %v1786
  %v1793 = vshrl.u32 2131351028, %v1787
  %v1794 = vor.u32 %v1792, %v1793
  %v1795 = vshll.u32 2131351028, %v1786
  %v1796 = vshrl.u32 2102212464, %v1787
  %v1797 = vor.u32 %v1795, %v1796
  %v1798 = vshll.u32 2102212464, %v1786
  %v1799 = vshrl.u32 920167782, %v1787
  %v1800 = vor.u32 %v1798, %v1799
  %v1801 = vshll.u32 920167782, %v1786
  %v1802 = vshrl.u32 1326507024, %v1787
  %v1803 = vor.u32 %v1801, %v1802
  %vm1804 = vcmp.lt.s32.totalorder %v1785, 1
  %vm1805 = vcmp.lt.s32.totalorder %v1785, 2
  %vm1806 = vcmp.lt.s32.totalorder %v1785, 3
  %vm1807 = vcmp.lt.s32.totalorder %v1785, 4
  %v1808 = vsel %vm1804, %v1788, %v1791
  %v1809 = vsel %vm1807, %v1797, 2102212464
  %v1810 = vsel %vm1806, %v1794, %v1809
  %v1811 = vsel %vm1805, %v1808, %v1810
  %v1812 = vsel %vm1804, %v1791, %v1794
  %v1813 = vsel %vm1807, %v1800, 920167782
  %v1814 = vsel %vm1806, %v1797, %v1813
  %v1815 = vsel %vm1805, %v1812, %v1814
  %v1816 = vsel %vm1804, %v1794, %v1797
  %v1817 = vsel %vm1807, %v1803, 1326507024
  %v1818 = vsel %vm1806, %v1800, %v1817
  %v1819 = vsel %vm1805, %v1816, %v1818
  %v1820 = vshll.u32 %v1780, 8
  %v1821 = vmul.u32.u64.compose %v1820, %v1819
  %v1822 = vextract.low.u32 %v1821
  %v1823 = vextract.high.u32 %v1821
  %v1824 = vmul.u32.u64.compose %v1820, %v1815
  %v1825 = vextract.low.u32 %v1824
  %v1826 = vextract.high.u32 %v1824
  %v1827 = vmul.u32 %v1820, %v1811
  %v1828 = vadd.s32 %v1823, %v1825
  %vm1829 = vc.u32 %v1823, %v1825
  %v1830 = vadd.s32 %v1826, 1
  %v1831 = vsel %vm1829, %v1830, %v1826
  %v1832 = vadd.s32 %v1827, %v1831
  %v1833 = vadd.s32 %v1832, 536870912
  %v1834 = vshrl.u32 %v1833, 30
  %v1835 = vshll.u32 %v1834, 30
  %v1836 = vsub.s32 %v1832, %v1835
  %vm1837 = vcmp.lt.s32.totalorder %v1836, 0
  %v1838 = vsub.s32 0, %v1836
  %v1839 = vsel %vm1837, %v1838, %v1836
  %v1840 = vclz %v1839
  %v1841 = vsub.s32 %v1840, 2
  %vm1842 = vcmp.gt.s32.totalorder 0, %v1841
  %v1843 = vsel %vm1842, 0, %v1841
  %v1844 = vsub.s32 32, %v1843
  %v1845 = vshll.u32 %v1836, %v1843
  %v1846 = vshrl.u32 %v1828, %v1844
  %v1847 = vor.u32 %v1845, %v1846
  %v1848 = vsub.s32 4294967266, %v1843
  %v1849 = vadd.s32 %v1848, 127
  %v1850 = vshll.u32 %v1849, 23
  %v1851 = vor.u32 4788187, %v1850
  %v1852 = vand.u32 2147483647, %v1851
  %v1854 = vcvt.s32.f32 %v1847
  %v1855 = vmul.f32 %v1854, %v1852
  %v1856 = vxor.u32 %v1855, 2147483648
  %v1857 = vsel %vm1774, %v1856, %v1855
  %v1858 = vsub.s32 4, %v1834
  %v1859 = vsel %vm1774, %v1858, %v1834
  %v1860 = vsel %vm1773, %v1757, %v1857
  %v1861 = vsel %vm1773, 0, %v1859
  %v1862 = vcosq.f32.pop %v1860
  %v1863 = vsinq.f32.pop %v1860
  %vm1864 = vweird.f32 %v1757
  %v1865 = vadd.s32 %v1861, 3
  %v1866 = vand.u32 %v1865, 3
  %vm1867 = vcmp.lt.s32.totalorder %v1866, 2
  %vm1868 = vcmp.eq.s32.totalorder %v1866, 0
  %v1869 = vxor.u32 %v1863, 2147483648
  %v1870 = vsel %vm1868, %v1862, %v1869
  %vm1871 = vcmp.eq.s32.totalorder %v1866, 2
  %v1872 = vxor.u32 %v1862, 2147483648
  %v1873 = vsel %vm1871, %v1872, %v1863
  %v1874 = vsel %vm1867, %v1870, %v1873
  %v1875 = vsel %vm1864, nan, %v1874
  %v1876 = vand.u32 2147483647, %v1758
  %vm1877 = vcmp.le.f32.partialorder %v1876, 0.7853982
  %vm1878 = vcmp.lt.s32.totalorder %v1758, 0
  %v1879 = vand.u32 %v1758, 2139095040
  %v1880 = vshrl.u32 %v1879, 23
  %v1881 = vsub.s32 %v1880, 127
  %v1882 = vand.u32 2147483647, %v1758
  %v1883 = vand.u32 %v1882, 8388607
  %v1884 = vor.u32 %v1883, 8388608
  %v1885 = vsub.s32 0, %v1884
  %v1886 = vadd.s32 %v1881, 1
  %vm1887 = vcmp.gt.s32.totalorder %v1886, 0
  %v1888 = vsel %vm1887, %v1886, 0
  %v1889 = vshrl.u32 %v1888, 5
  %v1890 = vand.u32 %v1888, 31
  %v1891 = vsub.s32 32, %v1890
  %v1892 = vshrl.u32 683565275, %v1891
  %v1893 = vshll.u32 683565275, %v1890
  %v1894 = vshrl.u32 2475754826, %v1891
  %v1895 = vor.u32 %v1893, %v1894
  %v1896 = vshll.u32 2475754826, %v1890
  %v1897 = vshrl.u32 2131351028, %v1891
  %v1898 = vor.u32 %v1896, %v1897
  %v1899 = vshll.u32 2131351028, %v1890
  %v1900 = vshrl.u32 2102212464, %v1891
  %v1901 = vor.u32 %v1899, %v1900
  %v1902 = vshll.u32 2102212464, %v1890
  %v1903 = vshrl.u32 920167782, %v1891
  %v1904 = vor.u32 %v1902, %v1903
  %v1905 = vshll.u32 920167782, %v1890
  %v1906 = vshrl.u32 1326507024, %v1891
  %v1907 = vor.u32 %v1905, %v1906
  %vm1908 = vcmp.lt.s32.totalorder %v1889, 1
  %vm1909 = vcmp.lt.s32.totalorder %v1889, 2
  %vm1910 = vcmp.lt.s32.totalorder %v1889, 3
  %vm1911 = vcmp.lt.s32.totalorder %v1889, 4
  %v1912 = vsel %vm1908, %v1892, %v1895
  %v1913 = vsel %vm1911, %v1901, 2102212464
  %v1914 = vsel %vm1910, %v1898, %v1913
  %v1915 = vsel %vm1909, %v1912, %v1914
  %v1916 = vsel %vm1908, %v1895, %v1898
  %v1917 = vsel %vm1911, %v1904, 920167782
  %v1918 = vsel %vm1910, %v1901, %v1917
  %v1919 = vsel %vm1909, %v1916, %v1918
  %v1920 = vsel %vm1908, %v1898, %v1901
  %v1921 = vsel %vm1911, %v1907, 1326507024
  %v1922 = vsel %vm1910, %v1904, %v1921
  %v1923 = vsel %vm1909, %v1920, %v1922
  %v1924 = vshll.u32 %v1884, 8
  %v1925 = vmul.u32.u64.compose %v1924, %v1923
  %v1926 = vextract.low.u32 %v1925
  %v1927 = vextract.high.u32 %v1925
  %v1928 = vmul.u32.u64.compose %v1924, %v1919
  %v1929 = vextract.low.u32 %v1928
  %v1930 = vextract.high.u32 %v1928
  %v1931 = vmul.u32 %v1924, %v1915
  %v1932 = vadd.s32 %v1927, %v1929
  %vm1933 = vc.u32 %v1927, %v1929
  %v1934 = vadd.s32 %v1930, 1
  %v1935 = vsel %vm1933, %v1934, %v1930
  %v1936 = vadd.s32 %v1931, %v1935
  %v1937 = vadd.s32 %v1936, 536870912
  %v1938 = vshrl.u32 %v1937, 30
  %v1939 = vshll.u32 %v1938, 30
  %v1940 = vsub.s32 %v1936, %v1939
  %vm1941 = vcmp.lt.s32.totalorder %v1940, 0
  %v1942 = vsub.s32 0, %v1940
  %v1943 = vsel %vm1941, %v1942, %v1940
  %v1944 = vclz %v1943
  %v1945 = vsub.s32 %v1944, 2
  %vm1946 = vcmp.gt.s32.totalorder 0, %v1945
  %v1947 = vsel %vm1946, 0, %v1945
  %v1948 = vsub.s32 32, %v1947
  %v1949 = vshll.u32 %v1940, %v1947
  %v1950 = vshrl.u32 %v1932, %v1948
  %v1951 = vor.u32 %v1949, %v1950
  %v1952 = vsub.s32 4294967266, %v1947
  %v1953 = vadd.s32 %v1952, 127
  %v1954 = vshll.u32 %v1953, 23
  %v1955 = vor.u32 4788187, %v1954
  %v1956 = vand.u32 2147483647, %v1955
  %v1958 = vcvt.s32.f32 %v1951
  %v1959 = vmul.f32 %v1958, %v1956
  %v1960 = vxor.u32 %v1959, 2147483648
  %v1961 = vsel %vm1878, %v1960, %v1959
  %v1962 = vsub.s32 4, %v1938
  %v1963 = vsel %vm1878, %v1962, %v1938
  %v1964 = vsel %vm1877, %v1758, %v1961
  %v1965 = vsel %vm1877, 0, %v1963
  %v1966 = vcosq.f32.pop %v1964
  %v1967 = vsinq.f32.pop %v1964
  %vm1968 = vweird.f32 %v1758
  %v1969 = vadd.s32 %v1965, 3
  %v1970 = vand.u32 %v1969, 3
  %vm1971 = vcmp.lt.s32.totalorder %v1970, 2
  %vm1972 = vcmp.eq.s32.totalorder %v1970, 0
  %v1973 = vxor.u32 %v1967, 2147483648
  %v1974 = vsel %vm1972, %v1966, %v1973
  %vm1975 = vcmp.eq.s32.totalorder %v1970, 2
  %v1976 = vxor.u32 %v1966, 2147483648
  %v1977 = vsel %vm1975, %v1976, %v1967
  %v1978 = vsel %vm1971, %v1974, %v1977
  %v1979 = vsel %vm1968, nan, %v1978
  %v1980 = vand.u32 2147483647, %v1759
  %vm1981 = vcmp.le.f32.partialorder %v1980, 0.7853982
  %vm1982 = vcmp.lt.s32.totalorder %v1759, 0
  %v1983 = vand.u32 %v1759, 2139095040
  %v1984 = vshrl.u32 %v1983, 23
  %v1985 = vsub.s32 %v1984, 127
  %v1986 = vand.u32 2147483647, %v1759
  %v1987 = vand.u32 %v1986, 8388607
  %v1988 = vor.u32 %v1987, 8388608
  %v1989 = vsub.s32 0, %v1988
  %v1990 = vadd.s32 %v1985, 1
  %vm1991 = vcmp.gt.s32.totalorder %v1990, 0
  %v1992 = vsel %vm1991, %v1990, 0
  %v1993 = vshrl.u32 %v1992, 5
  %v1994 = vand.u32 %v1992, 31
  %v1995 = vsub.s32 32, %v1994
  %v1996 = vshrl.u32 683565275, %v1995
  %v1997 = vshll.u32 683565275, %v1994
  %v1998 = vshrl.u32 2475754826, %v1995
  %v1999 = vor.u32 %v1997, %v1998
  %v2000 = vshll.u32 2475754826, %v1994
  %v2001 = vshrl.u32 2131351028, %v1995
  %v2002 = vor.u32 %v2000, %v2001
  %v2003 = vshll.u32 2131351028, %v1994
  %v2004 = vshrl.u32 2102212464, %v1995
  %v2005 = vor.u32 %v2003, %v2004
  %v2006 = vshll.u32 2102212464, %v1994
  %v2007 = vshrl.u32 920167782, %v1995
  %v2008 = vor.u32 %v2006, %v2007
  %v2009 = vshll.u32 920167782, %v1994
  %v2010 = vshrl.u32 1326507024, %v1995
  %v2011 = vor.u32 %v2009, %v2010
  %vm2012 = vcmp.lt.s32.totalorder %v1993, 1
  %vm2013 = vcmp.lt.s32.totalorder %v1993, 2
  %vm2014 = vcmp.lt.s32.totalorder %v1993, 3
  %vm2015 = vcmp.lt.s32.totalorder %v1993, 4
  %v2016 = vsel %vm2012, %v1996, %v1999
  %v2017 = vsel %vm2015, %v2005, 2102212464
  %v2018 = vsel %vm2014, %v2002, %v2017
  %v2019 = vsel %vm2013, %v2016, %v2018
  %v2020 = vsel %vm2012, %v1999, %v2002
  %v2021 = vsel %vm2015, %v2008, 920167782
  %v2022 = vsel %vm2014, %v2005, %v2021
  %v2023 = vsel %vm2013, %v2020, %v2022
  %v2024 = vsel %vm2012, %v2002, %v2005
  %v2025 = vsel %vm2015, %v2011, 1326507024
  %v2026 = vsel %vm2014, %v2008, %v2025
  %v2027 = vsel %vm2013, %v2024, %v2026
  %v2028 = vshll.u32 %v1988, 8
  %v2029 = vmul.u32.u64.compose %v2028, %v2027
  %v2030 = vextract.low.u32 %v2029
  %v2031 = vextract.high.u32 %v2029
  %v2032 = vmul.u32.u64.compose %v2028, %v2023
  %v2033 = vextract.low.u32 %v2032
  %v2034 = vextract.high.u32 %v2032
  %v2035 = vmul.u32 %v2028, %v2019
  %v2036 = vadd.s32 %v2031, %v2033
  %vm2037 = vc.u32 %v2031, %v2033
  %v2038 = vadd.s32 %v2034, 1
  %v2039 = vsel %vm2037, %v2038, %v2034
  %v2040 = vadd.s32 %v2035, %v2039
  %v2041 = vadd.s32 %v2040, 536870912
  %v2042 = vshrl.u32 %v2041, 30
  %v2043 = vshll.u32 %v2042, 30
  %v2044 = vsub.s32 %v2040, %v2043
  %vm2045 = vcmp.lt.s32.totalorder %v2044, 0
  %v2046 = vsub.s32 0, %v2044
  %v2047 = vsel %vm2045, %v2046, %v2044
  %v2048 = vclz %v2047
  %v2049 = vsub.s32 %v2048, 2
  %vm2050 = vcmp.gt.s32.totalorder 0, %v2049
  %v2051 = vsel %vm2050, 0, %v2049
  %v2052 = vsub.s32 32, %v2051
  %v2053 = vshll.u32 %v2044, %v2051
  %v2054 = vshrl.u32 %v2036, %v2052
  %v2055 = vor.u32 %v2053, %v2054
  %v2056 = vsub.s32 4294967266, %v2051
  %v2057 = vadd.s32 %v2056, 127
  %v2058 = vshll.u32 %v2057, 23
  %v2059 = vor.u32 4788187, %v2058
  %v2060 = vand.u32 2147483647, %v2059
  %v2062 = vcvt.s32.f32 %v2055
  %v2063 = vmul.f32 %v2062, %v2060
  %v2064 = vxor.u32 %v2063, 2147483648
  %v2065 = vsel %vm1982, %v2064, %v2063
  %v2066 = vsub.s32 4, %v2042
  %v2067 = vsel %vm1982, %v2066, %v2042
  %v2068 = vsel %vm1981, %v1759, %v2065
  %v2069 = vsel %vm1981, 0, %v2067
  %v2070 = vcosq.f32.pop %v2068
  %v2071 = vsinq.f32.pop %v2068
  %vm2072 = vweird.f32 %v1759
  %v2073 = vadd.s32 %v2069, 3
  %v2074 = vand.u32 %v2073, 3
  %vm2075 = vcmp.lt.s32.totalorder %v2074, 2
  %vm2076 = vcmp.eq.s32.totalorder %v2074, 0
  %v2077 = vxor.u32 %v2071, 2147483648
  %v2078 = vsel %vm2076, %v2070, %v2077
  %vm2079 = vcmp.eq.s32.totalorder %v2074, 2
  %v2080 = vxor.u32 %v2070, 2147483648
  %v2081 = vsel %vm2079, %v2080, %v2071
  %v2082 = vsel %vm2075, %v2078, %v2081
  %v2083 = vsel %vm2072, nan, %v2082
  %v2084 = vand.u32 2147483647, %v1760
  %vm2085 = vcmp.le.f32.partialorder %v2084, 0.7853982
  %vm2086 = vcmp.lt.s32.totalorder %v1760, 0
  %v2087 = vand.u32 %v1760, 2139095040
  %v2088 = vshrl.u32 %v2087, 23
  %v2089 = vsub.s32 %v2088, 127
  %v2090 = vand.u32 2147483647, %v1760
  %v2091 = vand.u32 %v2090, 8388607
  %v2092 = vor.u32 %v2091, 8388608
  %v2093 = vsub.s32 0, %v2092
  %v2094 = vadd.s32 %v2089, 1
  %vm2095 = vcmp.gt.s32.totalorder %v2094, 0
  %v2096 = vsel %vm2095, %v2094, 0
  %v2097 = vshrl.u32 %v2096, 5
  %v2098 = vand.u32 %v2096, 31
  %v2099 = vsub.s32 32, %v2098
  %v2100 = vshrl.u32 683565275, %v2099
  %v2101 = vshll.u32 683565275, %v2098
  %v2102 = vshrl.u32 2475754826, %v2099
  %v2103 = vor.u32 %v2101, %v2102
  %v2104 = vshll.u32 2475754826, %v2098
  %v2105 = vshrl.u32 2131351028, %v2099
  %v2106 = vor.u32 %v2104, %v2105
  %v2107 = vshll.u32 2131351028, %v2098
  %v2108 = vshrl.u32 2102212464, %v2099
  %v2109 = vor.u32 %v2107, %v2108
  %v2110 = vshll.u32 2102212464, %v2098
  %v2111 = vshrl.u32 920167782, %v2099
  %v2112 = vor.u32 %v2110, %v2111
  %v2113 = vshll.u32 920167782, %v2098
  %v2114 = vshrl.u32 1326507024, %v2099
  %v2115 = vor.u32 %v2113, %v2114
  %vm2116 = vcmp.lt.s32.totalorder %v2097, 1
  %vm2117 = vcmp.lt.s32.totalorder %v2097, 2
  %vm2118 = vcmp.lt.s32.totalorder %v2097, 3
  %vm2119 = vcmp.lt.s32.totalorder %v2097, 4
  %v2120 = vsel %vm2116, %v2100, %v2103
  %v2121 = vsel %vm2119, %v2109, 2102212464
  %v2122 = vsel %vm2118, %v2106, %v2121
  %v2123 = vsel %vm2117, %v2120, %v2122
  %v2124 = vsel %vm2116, %v2103, %v2106
  %v2125 = vsel %vm2119, %v2112, 920167782
  %v2126 = vsel %vm2118, %v2109, %v2125
  %v2127 = vsel %vm2117, %v2124, %v2126
  %v2128 = vsel %vm2116, %v2106, %v2109
  %v2129 = vsel %vm2119, %v2115, 1326507024
  %v2130 = vsel %vm2118, %v2112, %v2129
  %v2131 = vsel %vm2117, %v2128, %v2130
  %v2132 = vshll.u32 %v2092, 8
  %v2133 = vmul.u32.u64.compose %v2132, %v2131
  %v2134 = vextract.low.u32 %v2133
  %v2135 = vextract.high.u32 %v2133
  %v2136 = vmul.u32.u64.compose %v2132, %v2127
  %v2137 = vextract.low.u32 %v2136
  %v2138 = vextract.high.u32 %v2136
  %v2139 = vmul.u32 %v2132, %v2123
  %v2140 = vadd.s32 %v2135, %v2137
  %vm2141 = vc.u32 %v2135, %v2137
  %v2142 = vadd.s32 %v2138, 1
  %v2143 = vsel %vm2141, %v2142, %v2138
  %v2144 = vadd.s32 %v2139, %v2143
  %v2145 = vadd.s32 %v2144, 536870912
  %v2146 = vshrl.u32 %v2145, 30
  %v2147 = vshll.u32 %v2146, 30
  %v2148 = vsub.s32 %v2144, %v2147
  %vm2149 = vcmp.lt.s32.totalorder %v2148, 0
  %v2150 = vsub.s32 0, %v2148
  %v2151 = vsel %vm2149, %v2150, %v2148
  %v2152 = vclz %v2151
  %v2153 = vsub.s32 %v2152, 2
  %vm2154 = vcmp.gt.s32.totalorder 0, %v2153
  %v2155 = vsel %vm2154, 0, %v2153
  %v2156 = vsub.s32 32, %v2155
  %v2157 = vshll.u32 %v2148, %v2155
  %v2158 = vshrl.u32 %v2140, %v2156
  %v2159 = vor.u32 %v2157, %v2158
  %v2160 = vsub.s32 4294967266, %v2155
  %v2161 = vadd.s32 %v2160, 127
  %v2162 = vshll.u32 %v2161, 23
  %v2163 = vor.u32 4788187, %v2162
  %v2164 = vand.u32 2147483647, %v2163
  %v2166 = vcvt.s32.f32 %v2159
  %v2167 = vmul.f32 %v2166, %v2164
  %v2168 = vxor.u32 %v2167, 2147483648
  %v2169 = vsel %vm2086, %v2168, %v2167
  %v2170 = vsub.s32 4, %v2146
  %v2171 = vsel %vm2086, %v2170, %v2146
  %v2172 = vsel %vm2085, %v1760, %v2169
  %v2173 = vsel %vm2085, 0, %v2171
  %v2174 = vcosq.f32.pop %v2172
  %v2175 = vsinq.f32.pop %v2172
  %vm2176 = vweird.f32 %v1760
  %v2177 = vadd.s32 %v2173, 3
  %v2178 = vand.u32 %v2177, 3
  %vm2179 = vcmp.lt.s32.totalorder %v2178, 2
  %vm2180 = vcmp.eq.s32.totalorder %v2178, 0
  %v2181 = vxor.u32 %v2175, 2147483648
  %v2182 = vsel %vm2180, %v2174, %v2181
  %vm2183 = vcmp.eq.s32.totalorder %v2178, 2
  %v2184 = vxor.u32 %v2174, 2147483648
  %v2185 = vsel %vm2183, %v2184, %v2175
  %v2186 = vsel %vm2179, %v2182, %v2185
  %v2187 = vsel %vm2176, nan, %v2186
  %v2188 = vand.u32 2147483647, %v1761
  %vm2189 = vcmp.le.f32.partialorder %v2188, 0.7853982
  %vm2190 = vcmp.lt.s32.totalorder %v1761, 0
  %v2191 = vand.u32 %v1761, 2139095040
  %v2192 = vshrl.u32 %v2191, 23
  %v2193 = vsub.s32 %v2192, 127
  %v2194 = vand.u32 2147483647, %v1761
  %v2195 = vand.u32 %v2194, 8388607
  %v2196 = vor.u32 %v2195, 8388608
  %v2197 = vsub.s32 0, %v2196
  %v2198 = vadd.s32 %v2193, 1
  %vm2199 = vcmp.gt.s32.totalorder %v2198, 0
  %v2200 = vsel %vm2199, %v2198, 0
  %v2201 = vshrl.u32 %v2200, 5
  %v2202 = vand.u32 %v2200, 31
  %v2203 = vsub.s32 32, %v2202
  %v2204 = vshrl.u32 683565275, %v2203
  %v2205 = vshll.u32 683565275, %v2202
  %v2206 = vshrl.u32 2475754826, %v2203
  %v2207 = vor.u32 %v2205, %v2206
  %v2208 = vshll.u32 2475754826, %v2202
  %v2209 = vshrl.u32 2131351028, %v2203
  %v2210 = vor.u32 %v2208, %v2209
  %v2211 = vshll.u32 2131351028, %v2202
  %v2212 = vshrl.u32 2102212464, %v2203
  %v2213 = vor.u32 %v2211, %v2212
  %v2214 = vshll.u32 2102212464, %v2202
  %v2215 = vshrl.u32 920167782, %v2203
  %v2216 = vor.u32 %v2214, %v2215
  %v2217 = vshll.u32 920167782, %v2202
  %v2218 = vshrl.u32 1326507024, %v2203
  %v2219 = vor.u32 %v2217, %v2218
  %vm2220 = vcmp.lt.s32.totalorder %v2201, 1
  %vm2221 = vcmp.lt.s32.totalorder %v2201, 2
  %vm2222 = vcmp.lt.s32.totalorder %v2201, 3
  %vm2223 = vcmp.lt.s32.totalorder %v2201, 4
  %v2224 = vsel %vm2220, %v2204, %v2207
  %v2225 = vsel %vm2223, %v2213, 2102212464
  %v2226 = vsel %vm2222, %v2210, %v2225
  %v2227 = vsel %vm2221, %v2224, %v2226
  %v2228 = vsel %vm2220, %v2207, %v2210
  %v2229 = vsel %vm2223, %v2216, 920167782
  %v2230 = vsel %vm2222, %v2213, %v2229
  %v2231 = vsel %vm2221, %v2228, %v2230
  %v2232 = vsel %vm2220, %v2210, %v2213
  %v2233 = vsel %vm2223, %v2219, 1326507024
  %v2234 = vsel %vm2222, %v2216, %v2233
  %v2235 = vsel %vm2221, %v2232, %v2234
  %v2236 = vshll.u32 %v2196, 8
  %v2237 = vmul.u32.u64.compose %v2236, %v2235
  %v2238 = vextract.low.u32 %v2237
  %v2239 = vextract.high.u32 %v2237
  %v2240 = vmul.u32.u64.compose %v2236, %v2231
  %v2241 = vextract.low.u32 %v2240
  %v2242 = vextract.high.u32 %v2240
  %v2243 = vmul.u32 %v2236, %v2227
  %v2244 = vadd.s32 %v2239, %v2241
  %vm2245 = vc.u32 %v2239, %v2241
  %v2246 = vadd.s32 %v2242, 1
  %v2247 = vsel %vm2245, %v2246, %v2242
  %v2248 = vadd.s32 %v2243, %v2247
  %v2249 = vadd.s32 %v2248, 536870912
  %v2250 = vshrl.u32 %v2249, 30
  %v2251 = vshll.u32 %v2250, 30
  %v2252 = vsub.s32 %v2248, %v2251
  %vm2253 = vcmp.lt.s32.totalorder %v2252, 0
  %v2254 = vsub.s32 0, %v2252
  %v2255 = vsel %vm2253, %v2254, %v2252
  %v2256 = vclz %v2255
  %v2257 = vsub.s32 %v2256, 2
  %vm2258 = vcmp.gt.s32.totalorder 0, %v2257
  %v2259 = vsel %vm2258, 0, %v2257
  %v2260 = vsub.s32 32, %v2259
  %v2261 = vshll.u32 %v2252, %v2259
  %v2262 = vshrl.u32 %v2244, %v2260
  %v2263 = vor.u32 %v2261, %v2262
  %v2264 = vsub.s32 4294967266, %v2259
  %v2265 = vadd.s32 %v2264, 127
  %v2266 = vshll.u32 %v2265, 23
  %v2267 = vor.u32 4788187, %v2266
  %v2268 = vand.u32 2147483647, %v2267
  %v2270 = vcvt.s32.f32 %v2263
  %v2271 = vmul.f32 %v2270, %v2268
  %v2272 = vxor.u32 %v2271, 2147483648
  %v2273 = vsel %vm2190, %v2272, %v2271
  %v2274 = vsub.s32 4, %v2250
  %v2275 = vsel %vm2190, %v2274, %v2250
  %v2276 = vsel %vm2189, %v1761, %v2273
  %v2277 = vsel %vm2189, 0, %v2275
  %v2278 = vcosq.f32.pop %v2276
  %v2279 = vsinq.f32.pop %v2276
  %vm2280 = vweird.f32 %v1761
  %v2281 = vadd.s32 %v2277, 3
  %v2282 = vand.u32 %v2281, 3
  %vm2283 = vcmp.lt.s32.totalorder %v2282, 2
  %vm2284 = vcmp.eq.s32.totalorder %v2282, 0
  %v2285 = vxor.u32 %v2279, 2147483648
  %v2286 = vsel %vm2284, %v2278, %v2285
  %vm2287 = vcmp.eq.s32.totalorder %v2282, 2
  %v2288 = vxor.u32 %v2278, 2147483648
  %v2289 = vsel %vm2287, %v2288, %v2279
  %v2290 = vsel %vm2283, %v2286, %v2289
  %v2291 = vsel %vm2280, nan, %v2290
  %v2292 = vand.u32 2147483647, %v1762
  %vm2293 = vcmp.le.f32.partialorder %v2292, 0.7853982
  %vm2294 = vcmp.lt.s32.totalorder %v1762, 0
  %v2295 = vand.u32 %v1762, 2139095040
  %v2296 = vshrl.u32 %v2295, 23
  %v2297 = vsub.s32 %v2296, 127
  %v2298 = vand.u32 2147483647, %v1762
  %v2299 = vand.u32 %v2298, 8388607
  %v2300 = vor.u32 %v2299, 8388608
  %v2301 = vsub.s32 0, %v2300
  %v2302 = vadd.s32 %v2297, 1
  %vm2303 = vcmp.gt.s32.totalorder %v2302, 0
  %v2304 = vsel %vm2303, %v2302, 0
  %v2305 = vshrl.u32 %v2304, 5
  %v2306 = vand.u32 %v2304, 31
  %v2307 = vsub.s32 32, %v2306
  %v2308 = vshrl.u32 683565275, %v2307
  %v2309 = vshll.u32 683565275, %v2306
  %v2310 = vshrl.u32 2475754826, %v2307
  %v2311 = vor.u32 %v2309, %v2310
  %v2312 = vshll.u32 2475754826, %v2306
  %v2313 = vshrl.u32 2131351028, %v2307
  %v2314 = vor.u32 %v2312, %v2313
  %v2315 = vshll.u32 2131351028, %v2306
  %v2316 = vshrl.u32 2102212464, %v2307
  %v2317 = vor.u32 %v2315, %v2316
  %v2318 = vshll.u32 2102212464, %v2306
  %v2319 = vshrl.u32 920167782, %v2307
  %v2320 = vor.u32 %v2318, %v2319
  %v2321 = vshll.u32 920167782, %v2306
  %v2322 = vshrl.u32 1326507024, %v2307
  %v2323 = vor.u32 %v2321, %v2322
  %vm2324 = vcmp.lt.s32.totalorder %v2305, 1
  %vm2325 = vcmp.lt.s32.totalorder %v2305, 2
  %vm2326 = vcmp.lt.s32.totalorder %v2305, 3
  %vm2327 = vcmp.lt.s32.totalorder %v2305, 4
  %v2328 = vsel %vm2324, %v2308, %v2311
  %v2329 = vsel %vm2327, %v2317, 2102212464
  %v2330 = vsel %vm2326, %v2314, %v2329
  %v2331 = vsel %vm2325, %v2328, %v2330
  %v2332 = vsel %vm2324, %v2311, %v2314
  %v2333 = vsel %vm2327, %v2320, 920167782
  %v2334 = vsel %vm2326, %v2317, %v2333
  %v2335 = vsel %vm2325, %v2332, %v2334
  %v2336 = vsel %vm2324, %v2314, %v2317
  %v2337 = vsel %vm2327, %v2323, 1326507024
  %v2338 = vsel %vm2326, %v2320, %v2337
  %v2339 = vsel %vm2325, %v2336, %v2338
  %v2340 = vshll.u32 %v2300, 8
  %v2341 = vmul.u32.u64.compose %v2340, %v2339
  %v2342 = vextract.low.u32 %v2341
  %v2343 = vextract.high.u32 %v2341
  %v2344 = vmul.u32.u64.compose %v2340, %v2335
  %v2345 = vextract.low.u32 %v2344
  %v2346 = vextract.high.u32 %v2344
  %v2347 = vmul.u32 %v2340, %v2331
  %v2348 = vadd.s32 %v2343, %v2345
  %vm2349 = vc.u32 %v2343, %v2345
  %v2350 = vadd.s32 %v2346, 1
  %v2351 = vsel %vm2349, %v2350, %v2346
  %v2352 = vadd.s32 %v2347, %v2351
  %v2353 = vadd.s32 %v2352, 536870912
  %v2354 = vshrl.u32 %v2353, 30
  %v2355 = vshll.u32 %v2354, 30
  %v2356 = vsub.s32 %v2352, %v2355
  %vm2357 = vcmp.lt.s32.totalorder %v2356, 0
  %v2358 = vsub.s32 0, %v2356
  %v2359 = vsel %vm2357, %v2358, %v2356
  %v2360 = vclz %v2359
  %v2361 = vsub.s32 %v2360, 2
  %vm2362 = vcmp.gt.s32.totalorder 0, %v2361
  %v2363 = vsel %vm2362, 0, %v2361
  %v2364 = vsub.s32 32, %v2363
  %v2365 = vshll.u32 %v2356, %v2363
  %v2366 = vshrl.u32 %v2348, %v2364
  %v2367 = vor.u32 %v2365, %v2366
  %v2368 = vsub.s32 4294967266, %v2363
  %v2369 = vadd.s32 %v2368, 127
  %v2370 = vshll.u32 %v2369, 23
  %v2371 = vor.u32 4788187, %v2370
  %v2372 = vand.u32 2147483647, %v2371
  %v2374 = vcvt.s32.f32 %v2367
  %v2375 = vmul.f32 %v2374, %v2372
  %v2376 = vxor.u32 %v2375, 2147483648
  %v2377 = vsel %vm2294, %v2376, %v2375
  %v2378 = vsub.s32 4, %v2354
  %v2379 = vsel %vm2294, %v2378, %v2354
  %v2380 = vsel %vm2293, %v1762, %v2377
  %v2381 = vsel %vm2293, 0, %v2379
  %v2382 = vcosq.f32.pop %v2380
  %v2383 = vsinq.f32.pop %v2380
  %vm2384 = vweird.f32 %v1762
  %v2385 = vadd.s32 %v2381, 3
  %v2386 = vand.u32 %v2385, 3
  %vm2387 = vcmp.lt.s32.totalorder %v2386, 2
  %vm2388 = vcmp.eq.s32.totalorder %v2386, 0
  %v2389 = vxor.u32 %v2383, 2147483648
  %v2390 = vsel %vm2388, %v2382, %v2389
  %vm2391 = vcmp.eq.s32.totalorder %v2386, 2
  %v2392 = vxor.u32 %v2382, 2147483648
  %v2393 = vsel %vm2391, %v2392, %v2383
  %v2394 = vsel %vm2387, %v2390, %v2393
  %v2395 = vsel %vm2384, nan, %v2394
  %v2396 = vand.u32 2147483647, %v1763
  %vm2397 = vcmp.le.f32.partialorder %v2396, 0.7853982
  %vm2398 = vcmp.lt.s32.totalorder %v1763, 0
  %v2399 = vand.u32 %v1763, 2139095040
  %v2400 = vshrl.u32 %v2399, 23
  %v2401 = vsub.s32 %v2400, 127
  %v2402 = vand.u32 2147483647, %v1763
  %v2403 = vand.u32 %v2402, 8388607
  %v2404 = vor.u32 %v2403, 8388608
  %v2405 = vsub.s32 0, %v2404
  %v2406 = vadd.s32 %v2401, 1
  %vm2407 = vcmp.gt.s32.totalorder %v2406, 0
  %v2408 = vsel %vm2407, %v2406, 0
  %v2409 = vshrl.u32 %v2408, 5
  %v2410 = vand.u32 %v2408, 31
  %v2411 = vsub.s32 32, %v2410
  %v2412 = vshrl.u32 683565275, %v2411
  %v2413 = vshll.u32 683565275, %v2410
  %v2414 = vshrl.u32 2475754826, %v2411
  %v2415 = vor.u32 %v2413, %v2414
  %v2416 = vshll.u32 2475754826, %v2410
  %v2417 = vshrl.u32 2131351028, %v2411
  %v2418 = vor.u32 %v2416, %v2417
  %v2419 = vshll.u32 2131351028, %v2410
  %v2420 = vshrl.u32 2102212464, %v2411
  %v2421 = vor.u32 %v2419, %v2420
  %v2422 = vshll.u32 2102212464, %v2410
  %v2423 = vshrl.u32 920167782, %v2411
  %v2424 = vor.u32 %v2422, %v2423
  %v2425 = vshll.u32 920167782, %v2410
  %v2426 = vshrl.u32 1326507024, %v2411
  %v2427 = vor.u32 %v2425, %v2426
  %vm2428 = vcmp.lt.s32.totalorder %v2409, 1
  %vm2429 = vcmp.lt.s32.totalorder %v2409, 2
  %vm2430 = vcmp.lt.s32.totalorder %v2409, 3
  %vm2431 = vcmp.lt.s32.totalorder %v2409, 4
  %v2432 = vsel %vm2428, %v2412, %v2415
  %v2433 = vsel %vm2431, %v2421, 2102212464
  %v2434 = vsel %vm2430, %v2418, %v2433
  %v2435 = vsel %vm2429, %v2432, %v2434
  %v2436 = vsel %vm2428, %v2415, %v2418
  %v2437 = vsel %vm2431, %v2424, 920167782
  %v2438 = vsel %vm2430, %v2421, %v2437
  %v2439 = vsel %vm2429, %v2436, %v2438
  %v2440 = vsel %vm2428, %v2418, %v2421
  %v2441 = vsel %vm2431, %v2427, 1326507024
  %v2442 = vsel %vm2430, %v2424, %v2441
  %v2443 = vsel %vm2429, %v2440, %v2442
  %v2444 = vshll.u32 %v2404, 8
  %v2445 = vmul.u32.u64.compose %v2444, %v2443
  %v2446 = vextract.low.u32 %v2445
  %v2447 = vextract.high.u32 %v2445
  %v2448 = vmul.u32.u64.compose %v2444, %v2439
  %v2449 = vextract.low.u32 %v2448
  %v2450 = vextract.high.u32 %v2448
  %v2451 = vmul.u32 %v2444, %v2435
  %v2452 = vadd.s32 %v2447, %v2449
  %vm2453 = vc.u32 %v2447, %v2449
  %v2454 = vadd.s32 %v2450, 1
  %v2455 = vsel %vm2453, %v2454, %v2450
  %v2456 = vadd.s32 %v2451, %v2455
  %v2457 = vadd.s32 %v2456, 536870912
  %v2458 = vshrl.u32 %v2457, 30
  %v2459 = vshll.u32 %v2458, 30
  %v2460 = vsub.s32 %v2456, %v2459
  %vm2461 = vcmp.lt.s32.totalorder %v2460, 0
  %v2462 = vsub.s32 0, %v2460
  %v2463 = vsel %vm2461, %v2462, %v2460
  %v2464 = vclz %v2463
  %v2465 = vsub.s32 %v2464, 2
  %vm2466 = vcmp.gt.s32.totalorder 0, %v2465
  %v2467 = vsel %vm2466, 0, %v2465
  %v2468 = vsub.s32 32, %v2467
  %v2469 = vshll.u32 %v2460, %v2467
  %v2470 = vshrl.u32 %v2452, %v2468
  %v2471 = vor.u32 %v2469, %v2470
  %v2472 = vsub.s32 4294967266, %v2467
  %v2473 = vadd.s32 %v2472, 127
  %v2474 = vshll.u32 %v2473, 23
  %v2475 = vor.u32 4788187, %v2474
  %v2476 = vand.u32 2147483647, %v2475
  %v2478 = vcvt.s32.f32 %v2471
  %v2479 = vmul.f32 %v2478, %v2476
  %v2480 = vxor.u32 %v2479, 2147483648
  %v2481 = vsel %vm2398, %v2480, %v2479
  %v2482 = vsub.s32 4, %v2458
  %v2483 = vsel %vm2398, %v2482, %v2458
  %v2484 = vsel %vm2397, %v1763, %v2481
  %v2485 = vsel %vm2397, 0, %v2483
  %v2486 = vcosq.f32.pop %v2484
  %v2487 = vsinq.f32.pop %v2484
  %vm2488 = vweird.f32 %v1763
  %v2489 = vadd.s32 %v2485, 3
  %v2490 = vand.u32 %v2489, 3
  %vm2491 = vcmp.lt.s32.totalorder %v2490, 2
  %vm2492 = vcmp.eq.s32.totalorder %v2490, 0
  %v2493 = vxor.u32 %v2487, 2147483648
  %v2494 = vsel %vm2492, %v2486, %v2493
  %vm2495 = vcmp.eq.s32.totalorder %v2490, 2
  %v2496 = vxor.u32 %v2486, 2147483648
  %v2497 = vsel %vm2495, %v2496, %v2487
  %v2498 = vsel %vm2491, %v2494, %v2497
  %v2499 = vsel %vm2488, nan, %v2498
  %v2500 = vand.u32 2147483647, %v1764
  %vm2501 = vcmp.le.f32.partialorder %v2500, 0.7853982
  %vm2502 = vcmp.lt.s32.totalorder %v1764, 0
  %v2503 = vand.u32 %v1764, 2139095040
  %v2504 = vshrl.u32 %v2503, 23
  %v2505 = vsub.s32 %v2504, 127
  %v2506 = vand.u32 2147483647, %v1764
  %v2507 = vand.u32 %v2506, 8388607
  %v2508 = vor.u32 %v2507, 8388608
  %v2509 = vsub.s32 0, %v2508
  %v2510 = vadd.s32 %v2505, 1
  %vm2511 = vcmp.gt.s32.totalorder %v2510, 0
  %v2512 = vsel %vm2511, %v2510, 0
  %v2513 = vshrl.u32 %v2512, 5
  %v2514 = vand.u32 %v2512, 31
  %v2515 = vsub.s32 32, %v2514
  %v2516 = vshrl.u32 683565275, %v2515
  %v2517 = vshll.u32 683565275, %v2514
  %v2518 = vshrl.u32 2475754826, %v2515
  %v2519 = vor.u32 %v2517, %v2518
  %v2520 = vshll.u32 2475754826, %v2514
  %v2521 = vshrl.u32 2131351028, %v2515
  %v2522 = vor.u32 %v2520, %v2521
  %v2523 = vshll.u32 2131351028, %v2514
  %v2524 = vshrl.u32 2102212464, %v2515
  %v2525 = vor.u32 %v2523, %v2524
  %v2526 = vshll.u32 2102212464, %v2514
  %v2527 = vshrl.u32 920167782, %v2515
  %v2528 = vor.u32 %v2526, %v2527
  %v2529 = vshll.u32 920167782, %v2514
  %v2530 = vshrl.u32 1326507024, %v2515
  %v2531 = vor.u32 %v2529, %v2530
  %vm2532 = vcmp.lt.s32.totalorder %v2513, 1
  %vm2533 = vcmp.lt.s32.totalorder %v2513, 2
  %vm2534 = vcmp.lt.s32.totalorder %v2513, 3
  %vm2535 = vcmp.lt.s32.totalorder %v2513, 4
  %v2536 = vsel %vm2532, %v2516, %v2519
  %v2537 = vsel %vm2535, %v2525, 2102212464
  %v2538 = vsel %vm2534, %v2522, %v2537
  %v2539 = vsel %vm2533, %v2536, %v2538
  %v2540 = vsel %vm2532, %v2519, %v2522
  %v2541 = vsel %vm2535, %v2528, 920167782
  %v2542 = vsel %vm2534, %v2525, %v2541
  %v2543 = vsel %vm2533, %v2540, %v2542
  %v2544 = vsel %vm2532, %v2522, %v2525
  %v2545 = vsel %vm2535, %v2531, 1326507024
  %v2546 = vsel %vm2534, %v2528, %v2545
  %v2547 = vsel %vm2533, %v2544, %v2546
  %v2548 = vshll.u32 %v2508, 8
  %v2549 = vmul.u32.u64.compose %v2548, %v2547
  %v2550 = vextract.low.u32 %v2549
  %v2551 = vextract.high.u32 %v2549
  %v2552 = vmul.u32.u64.compose %v2548, %v2543
  %v2553 = vextract.low.u32 %v2552
  %v2554 = vextract.high.u32 %v2552
  %v2555 = vmul.u32 %v2548, %v2539
  %v2556 = vadd.s32 %v2551, %v2553
  %vm2557 = vc.u32 %v2551, %v2553
  %v2558 = vadd.s32 %v2554, 1
  %v2559 = vsel %vm2557, %v2558, %v2554
  %v2560 = vadd.s32 %v2555, %v2559
  %v2561 = vadd.s32 %v2560, 536870912
  %v2562 = vshrl.u32 %v2561, 30
  %v2563 = vshll.u32 %v2562, 30
  %v2564 = vsub.s32 %v2560, %v2563
  %vm2565 = vcmp.lt.s32.totalorder %v2564, 0
  %v2566 = vsub.s32 0, %v2564
  %v2567 = vsel %vm2565, %v2566, %v2564
  %v2568 = vclz %v2567
  %v2569 = vsub.s32 %v2568, 2
  %vm2570 = vcmp.gt.s32.totalorder 0, %v2569
  %v2571 = vsel %vm2570, 0, %v2569
  %v2572 = vsub.s32 32, %v2571
  %v2573 = vshll.u32 %v2564, %v2571
  %v2574 = vshrl.u32 %v2556, %v2572
  %v2575 = vor.u32 %v2573, %v2574
  %v2576 = vsub.s32 4294967266, %v2571
  %v2577 = vadd.s32 %v2576, 127
  %v2578 = vshll.u32 %v2577, 23
  %v2579 = vor.u32 4788187, %v2578
  %v2580 = vand.u32 2147483647, %v2579
  %v2582 = vcvt.s32.f32 %v2575
  %v2583 = vmul.f32 %v2582, %v2580
  %v2584 = vxor.u32 %v2583, 2147483648
  %v2585 = vsel %vm2502, %v2584, %v2583
  %v2586 = vsub.s32 4, %v2562
  %v2587 = vsel %vm2502, %v2586, %v2562
  %v2588 = vsel %vm2501, %v1764, %v2585
  %v2589 = vsel %vm2501, 0, %v2587
  %v2590 = vcosq.f32.pop %v2588
  %v2591 = vsinq.f32.pop %v2588
  %vm2592 = vweird.f32 %v1764
  %v2593 = vadd.s32 %v2589, 3
  %v2594 = vand.u32 %v2593, 3
  %vm2595 = vcmp.lt.s32.totalorder %v2594, 2
  %vm2596 = vcmp.eq.s32.totalorder %v2594, 0
  %v2597 = vxor.u32 %v2591, 2147483648
  %v2598 = vsel %vm2596, %v2590, %v2597
  %vm2599 = vcmp.eq.s32.totalorder %v2594, 2
  %v2600 = vxor.u32 %v2590, 2147483648
  %v2601 = vsel %vm2599, %v2600, %v2591
  %v2602 = vsel %vm2595, %v2598, %v2601
  %v2603 = vsel %vm2592, nan, %v2602
  %v2604 = vand.u32 2147483647, %v1765
  %vm2605 = vcmp.le.f32.partialorder %v2604, 0.7853982
  %vm2606 = vcmp.lt.s32.totalorder %v1765, 0
  %v2607 = vand.u32 %v1765, 2139095040
  %v2608 = vshrl.u32 %v2607, 23
  %v2609 = vsub.s32 %v2608, 127
  %v2610 = vand.u32 2147483647, %v1765
  %v2611 = vand.u32 %v2610, 8388607
  %v2612 = vor.u32 %v2611, 8388608
  %v2613 = vsub.s32 0, %v2612
  %v2614 = vadd.s32 %v2609, 1
  %vm2615 = vcmp.gt.s32.totalorder %v2614, 0
  %v2616 = vsel %vm2615, %v2614, 0
  %v2617 = vshrl.u32 %v2616, 5
  %v2618 = vand.u32 %v2616, 31
  %v2619 = vsub.s32 32, %v2618
  %v2620 = vshrl.u32 683565275, %v2619
  %v2621 = vshll.u32 683565275, %v2618
  %v2622 = vshrl.u32 2475754826, %v2619
  %v2623 = vor.u32 %v2621, %v2622
  %v2624 = vshll.u32 2475754826, %v2618
  %v2625 = vshrl.u32 2131351028, %v2619
  %v2626 = vor.u32 %v2624, %v2625
  %v2627 = vshll.u32 2131351028, %v2618
  %v2628 = vshrl.u32 2102212464, %v2619
  %v2629 = vor.u32 %v2627, %v2628
  %v2630 = vshll.u32 2102212464, %v2618
  %v2631 = vshrl.u32 920167782, %v2619
  %v2632 = vor.u32 %v2630, %v2631
  %v2633 = vshll.u32 920167782, %v2618
  %v2634 = vshrl.u32 1326507024, %v2619
  %v2635 = vor.u32 %v2633, %v2634
  %vm2636 = vcmp.lt.s32.totalorder %v2617, 1
  %vm2637 = vcmp.lt.s32.totalorder %v2617, 2
  %vm2638 = vcmp.lt.s32.totalorder %v2617, 3
  %vm2639 = vcmp.lt.s32.totalorder %v2617, 4
  %v2640 = vsel %vm2636, %v2620, %v2623
  %v2641 = vsel %vm2639, %v2629, 2102212464
  %v2642 = vsel %vm2638, %v2626, %v2641
  %v2643 = vsel %vm2637, %v2640, %v2642
  %v2644 = vsel %vm2636, %v2623, %v2626
  %v2645 = vsel %vm2639, %v2632, 920167782
  %v2646 = vsel %vm2638, %v2629, %v2645
  %v2647 = vsel %vm2637, %v2644, %v2646
  %v2648 = vsel %vm2636, %v2626, %v2629
  %v2649 = vsel %vm2639, %v2635, 1326507024
  %v2650 = vsel %vm2638, %v2632, %v2649
  %v2651 = vsel %vm2637, %v2648, %v2650
  %v2652 = vshll.u32 %v2612, 8
  %v2653 = vmul.u32.u64.compose %v2652, %v2651
  %v2654 = vextract.low.u32 %v2653
  %v2655 = vextract.high.u32 %v2653
  %v2656 = vmul.u32.u64.compose %v2652, %v2647
  %v2657 = vextract.low.u32 %v2656
  %v2658 = vextract.high.u32 %v2656
  %v2659 = vmul.u32 %v2652, %v2643
  %v2660 = vadd.s32 %v2655, %v2657
  %vm2661 = vc.u32 %v2655, %v2657
  %v2662 = vadd.s32 %v2658, 1
  %v2663 = vsel %vm2661, %v2662, %v2658
  %v2664 = vadd.s32 %v2659, %v2663
  %v2665 = vadd.s32 %v2664, 536870912
  %v2666 = vshrl.u32 %v2665, 30
  %v2667 = vshll.u32 %v2666, 30
  %v2668 = vsub.s32 %v2664, %v2667
  %vm2669 = vcmp.lt.s32.totalorder %v2668, 0
  %v2670 = vsub.s32 0, %v2668
  %v2671 = vsel %vm2669, %v2670, %v2668
  %v2672 = vclz %v2671
  %v2673 = vsub.s32 %v2672, 2
  %vm2674 = vcmp.gt.s32.totalorder 0, %v2673
  %v2675 = vsel %vm2674, 0, %v2673
  %v2676 = vsub.s32 32, %v2675
  %v2677 = vshll.u32 %v2668, %v2675
  %v2678 = vshrl.u32 %v2660, %v2676
  %v2679 = vor.u32 %v2677, %v2678
  %v2680 = vsub.s32 4294967266, %v2675
  %v2681 = vadd.s32 %v2680, 127
  %v2682 = vshll.u32 %v2681, 23
  %v2683 = vor.u32 4788187, %v2682
  %v2684 = vand.u32 2147483647, %v2683
  %v2686 = vcvt.s32.f32 %v2679
  %v2687 = vmul.f32 %v2686, %v2684
  %v2688 = vxor.u32 %v2687, 2147483648
  %v2689 = vsel %vm2606, %v2688, %v2687
  %v2690 = vsub.s32 4, %v2666
  %v2691 = vsel %vm2606, %v2690, %v2666
  %v2692 = vsel %vm2605, %v1765, %v2689
  %v2693 = vsel %vm2605, 0, %v2691
  %v2694 = vcosq.f32.pop %v2692
  %v2695 = vsinq.f32.pop %v2692
  %vm2696 = vweird.f32 %v1765
  %v2697 = vadd.s32 %v2693, 3
  %v2698 = vand.u32 %v2697, 3
  %vm2699 = vcmp.lt.s32.totalorder %v2698, 2
  %vm2700 = vcmp.eq.s32.totalorder %v2698, 0
  %v2701 = vxor.u32 %v2695, 2147483648
  %v2702 = vsel %vm2700, %v2694, %v2701
  %vm2703 = vcmp.eq.s32.totalorder %v2698, 2
  %v2704 = vxor.u32 %v2694, 2147483648
  %v2705 = vsel %vm2703, %v2704, %v2695
  %v2706 = vsel %vm2699, %v2702, %v2705
  %v2707 = vsel %vm2696, nan, %v2706
  %v2708 = vand.u32 2147483647, %v1766
  %vm2709 = vcmp.le.f32.partialorder %v2708, 0.7853982
  %vm2710 = vcmp.lt.s32.totalorder %v1766, 0
  %v2711 = vand.u32 %v1766, 2139095040
  %v2712 = vshrl.u32 %v2711, 23
  %v2713 = vsub.s32 %v2712, 127
  %v2714 = vand.u32 2147483647, %v1766
  %v2715 = vand.u32 %v2714, 8388607
  %v2716 = vor.u32 %v2715, 8388608
  %v2717 = vsub.s32 0, %v2716
  %v2718 = vadd.s32 %v2713, 1
  %vm2719 = vcmp.gt.s32.totalorder %v2718, 0
  %v2720 = vsel %vm2719, %v2718, 0
  %v2721 = vshrl.u32 %v2720, 5
  %v2722 = vand.u32 %v2720, 31
  %v2723 = vsub.s32 32, %v2722
  %v2724 = vshrl.u32 683565275, %v2723
  %v2725 = vshll.u32 683565275, %v2722
  %v2726 = vshrl.u32 2475754826, %v2723
  %v2727 = vor.u32 %v2725, %v2726
  %v2728 = vshll.u32 2475754826, %v2722
  %v2729 = vshrl.u32 2131351028, %v2723
  %v2730 = vor.u32 %v2728, %v2729
  %v2731 = vshll.u32 2131351028, %v2722
  %v2732 = vshrl.u32 2102212464, %v2723
  %v2733 = vor.u32 %v2731, %v2732
  %v2734 = vshll.u32 2102212464, %v2722
  %v2735 = vshrl.u32 920167782, %v2723
  %v2736 = vor.u32 %v2734, %v2735
  %v2737 = vshll.u32 920167782, %v2722
  %v2738 = vshrl.u32 1326507024, %v2723
  %v2739 = vor.u32 %v2737, %v2738
  %vm2740 = vcmp.lt.s32.totalorder %v2721, 1
  %vm2741 = vcmp.lt.s32.totalorder %v2721, 2
  %vm2742 = vcmp.lt.s32.totalorder %v2721, 3
  %vm2743 = vcmp.lt.s32.totalorder %v2721, 4
  %v2744 = vsel %vm2740, %v2724, %v2727
  %v2745 = vsel %vm2743, %v2733, 2102212464
  %v2746 = vsel %vm2742, %v2730, %v2745
  %v2747 = vsel %vm2741, %v2744, %v2746
  %v2748 = vsel %vm2740, %v2727, %v2730
  %v2749 = vsel %vm2743, %v2736, 920167782
  %v2750 = vsel %vm2742, %v2733, %v2749
  %v2751 = vsel %vm2741, %v2748, %v2750
  %v2752 = vsel %vm2740, %v2730, %v2733
  %v2753 = vsel %vm2743, %v2739, 1326507024
  %v2754 = vsel %vm2742, %v2736, %v2753
  %v2755 = vsel %vm2741, %v2752, %v2754
  %v2756 = vshll.u32 %v2716, 8
  %v2757 = vmul.u32.u64.compose %v2756, %v2755
  %v2758 = vextract.low.u32 %v2757
  %v2759 = vextract.high.u32 %v2757
  %v2760 = vmul.u32.u64.compose %v2756, %v2751
  %v2761 = vextract.low.u32 %v2760
  %v2762 = vextract.high.u32 %v2760
  %v2763 = vmul.u32 %v2756, %v2747
  %v2764 = vadd.s32 %v2759, %v2761
  %vm2765 = vc.u32 %v2759, %v2761
  %v2766 = vadd.s32 %v2762, 1
  %v2767 = vsel %vm2765, %v2766, %v2762
  %v2768 = vadd.s32 %v2763, %v2767
  %v2769 = vadd.s32 %v2768, 536870912
  %v2770 = vshrl.u32 %v2769, 30
  %v2771 = vshll.u32 %v2770, 30
  %v2772 = vsub.s32 %v2768, %v2771
  %vm2773 = vcmp.lt.s32.totalorder %v2772, 0
  %v2774 = vsub.s32 0, %v2772
  %v2775 = vsel %vm2773, %v2774, %v2772
  %v2776 = vclz %v2775
  %v2777 = vsub.s32 %v2776, 2
  %vm2778 = vcmp.gt.s32.totalorder 0, %v2777
  %v2779 = vsel %vm2778, 0, %v2777
  %v2780 = vsub.s32 32, %v2779
  %v2781 = vshll.u32 %v2772, %v2779
  %v2782 = vshrl.u32 %v2764, %v2780
  %v2783 = vor.u32 %v2781, %v2782
  %v2784 = vsub.s32 4294967266, %v2779
  %v2785 = vadd.s32 %v2784, 127
  %v2786 = vshll.u32 %v2785, 23
  %v2787 = vor.u32 4788187, %v2786
  %v2788 = vand.u32 2147483647, %v2787
  %v2790 = vcvt.s32.f32 %v2783
  %v2791 = vmul.f32 %v2790, %v2788
  %v2792 = vxor.u32 %v2791, 2147483648
  %v2793 = vsel %vm2710, %v2792, %v2791
  %v2794 = vsub.s32 4, %v2770
  %v2795 = vsel %vm2710, %v2794, %v2770
  %v2796 = vsel %vm2709, %v1766, %v2793
  %v2797 = vsel %vm2709, 0, %v2795
  %v2798 = vcosq.f32.pop %v2796
  %v2799 = vsinq.f32.pop %v2796
  %vm2800 = vweird.f32 %v1766
  %v2801 = vadd.s32 %v2797, 3
  %v2802 = vand.u32 %v2801, 3
  %vm2803 = vcmp.lt.s32.totalorder %v2802, 2
  %vm2804 = vcmp.eq.s32.totalorder %v2802, 0
  %v2805 = vxor.u32 %v2799, 2147483648
  %v2806 = vsel %vm2804, %v2798, %v2805
  %vm2807 = vcmp.eq.s32.totalorder %v2802, 2
  %v2808 = vxor.u32 %v2798, 2147483648
  %v2809 = vsel %vm2807, %v2808, %v2799
  %v2810 = vsel %vm2803, %v2806, %v2809
  %v2811 = vsel %vm2800, nan, %v2810
  %v2812 = vand.u32 2147483647, %v1767
  %vm2813 = vcmp.le.f32.partialorder %v2812, 0.7853982
  %vm2814 = vcmp.lt.s32.totalorder %v1767, 0
  %v2815 = vand.u32 %v1767, 2139095040
  %v2816 = vshrl.u32 %v2815, 23
  %v2817 = vsub.s32 %v2816, 127
  %v2818 = vand.u32 2147483647, %v1767
  %v2819 = vand.u32 %v2818, 8388607
  %v2820 = vor.u32 %v2819, 8388608
  %v2821 = vsub.s32 0, %v2820
  %v2822 = vadd.s32 %v2817, 1
  %vm2823 = vcmp.gt.s32.totalorder %v2822, 0
  %v2824 = vsel %vm2823, %v2822, 0
  %v2825 = vshrl.u32 %v2824, 5
  %v2826 = vand.u32 %v2824, 31
  %v2827 = vsub.s32 32, %v2826
  %v2828 = vshrl.u32 683565275, %v2827
  %v2829 = vshll.u32 683565275, %v2826
  %v2830 = vshrl.u32 2475754826, %v2827
  %v2831 = vor.u32 %v2829, %v2830
  %v2832 = vshll.u32 2475754826, %v2826
  %v2833 = vshrl.u32 2131351028, %v2827
  %v2834 = vor.u32 %v2832, %v2833
  %v2835 = vshll.u32 2131351028, %v2826
  %v2836 = vshrl.u32 2102212464, %v2827
  %v2837 = vor.u32 %v2835, %v2836
  %v2838 = vshll.u32 2102212464, %v2826
  %v2839 = vshrl.u32 920167782, %v2827
  %v2840 = vor.u32 %v2838, %v2839
  %v2841 = vshll.u32 920167782, %v2826
  %v2842 = vshrl.u32 1326507024, %v2827
  %v2843 = vor.u32 %v2841, %v2842
  %vm2844 = vcmp.lt.s32.totalorder %v2825, 1
  %vm2845 = vcmp.lt.s32.totalorder %v2825, 2
  %vm2846 = vcmp.lt.s32.totalorder %v2825, 3
  %vm2847 = vcmp.lt.s32.totalorder %v2825, 4
  %v2848 = vsel %vm2844, %v2828, %v2831
  %v2849 = vsel %vm2847, %v2837, 2102212464
  %v2850 = vsel %vm2846, %v2834, %v2849
  %v2851 = vsel %vm2845, %v2848, %v2850
  %v2852 = vsel %vm2844, %v2831, %v2834
  %v2853 = vsel %vm2847, %v2840, 920167782
  %v2854 = vsel %vm2846, %v2837, %v2853
  %v2855 = vsel %vm2845, %v2852, %v2854
  %v2856 = vsel %vm2844, %v2834, %v2837
  %v2857 = vsel %vm2847, %v2843, 1326507024
  %v2858 = vsel %vm2846, %v2840, %v2857
  %v2859 = vsel %vm2845, %v2856, %v2858
  %v2860 = vshll.u32 %v2820, 8
  %v2861 = vmul.u32.u64.compose %v2860, %v2859
  %v2862 = vextract.low.u32 %v2861
  %v2863 = vextract.high.u32 %v2861
  %v2864 = vmul.u32.u64.compose %v2860, %v2855
  %v2865 = vextract.low.u32 %v2864
  %v2866 = vextract.high.u32 %v2864
  %v2867 = vmul.u32 %v2860, %v2851
  %v2868 = vadd.s32 %v2863, %v2865
  %vm2869 = vc.u32 %v2863, %v2865
  %v2870 = vadd.s32 %v2866, 1
  %v2871 = vsel %vm2869, %v2870, %v2866
  %v2872 = vadd.s32 %v2867, %v2871
  %v2873 = vadd.s32 %v2872, 536870912
  %v2874 = vshrl.u32 %v2873, 30
  %v2875 = vshll.u32 %v2874, 30
  %v2876 = vsub.s32 %v2872, %v2875
  %vm2877 = vcmp.lt.s32.totalorder %v2876, 0
  %v2878 = vsub.s32 0, %v2876
  %v2879 = vsel %vm2877, %v2878, %v2876
  %v2880 = vclz %v2879
  %v2881 = vsub.s32 %v2880, 2
  %vm2882 = vcmp.gt.s32.totalorder 0, %v2881
  %v2883 = vsel %vm2882, 0, %v2881
  %v2884 = vsub.s32 32, %v2883
  %v2885 = vshll.u32 %v2876, %v2883
  %v2886 = vshrl.u32 %v2868, %v2884
  %v2887 = vor.u32 %v2885, %v2886
  %v2888 = vsub.s32 4294967266, %v2883
  %v2889 = vadd.s32 %v2888, 127
  %v2890 = vshll.u32 %v2889, 23
  %v2891 = vor.u32 4788187, %v2890
  %v2892 = vand.u32 2147483647, %v2891
  %v2894 = vcvt.s32.f32 %v2887
  %v2895 = vmul.f32 %v2894, %v2892
  %v2896 = vxor.u32 %v2895, 2147483648
  %v2897 = vsel %vm2814, %v2896, %v2895
  %v2898 = vsub.s32 4, %v2874
  %v2899 = vsel %vm2814, %v2898, %v2874
  %v2900 = vsel %vm2813, %v1767, %v2897
  %v2901 = vsel %vm2813, 0, %v2899
  %v2902 = vcosq.f32.pop %v2900
  %v2903 = vsinq.f32.pop %v2900
  %vm2904 = vweird.f32 %v1767
  %v2905 = vadd.s32 %v2901, 3
  %v2906 = vand.u32 %v2905, 3
  %vm2907 = vcmp.lt.s32.totalorder %v2906, 2
  %vm2908 = vcmp.eq.s32.totalorder %v2906, 0
  %v2909 = vxor.u32 %v2903, 2147483648
  %v2910 = vsel %vm2908, %v2902, %v2909
  %vm2911 = vcmp.eq.s32.totalorder %v2906, 2
  %v2912 = vxor.u32 %v2902, 2147483648
  %v2913 = vsel %vm2911, %v2912, %v2903
  %v2914 = vsel %vm2907, %v2910, %v2913
  %v2915 = vsel %vm2904, nan, %v2914
  %v2916 = vand.u32 2147483647, %v1768
  %vm2917 = vcmp.le.f32.partialorder %v2916, 0.7853982
  %vm2918 = vcmp.lt.s32.totalorder %v1768, 0
  %v2919 = vand.u32 %v1768, 2139095040
  %v2920 = vshrl.u32 %v2919, 23
  %v2921 = vsub.s32 %v2920, 127
  %v2922 = vand.u32 2147483647, %v1768
  %v2923 = vand.u32 %v2922, 8388607
  %v2924 = vor.u32 %v2923, 8388608
  %v2925 = vsub.s32 0, %v2924
  %v2926 = vadd.s32 %v2921, 1
  %vm2927 = vcmp.gt.s32.totalorder %v2926, 0
  %v2928 = vsel %vm2927, %v2926, 0
  %v2929 = vshrl.u32 %v2928, 5
  %v2930 = vand.u32 %v2928, 31
  %v2931 = vsub.s32 32, %v2930
  %v2932 = vshrl.u32 683565275, %v2931
  %v2933 = vshll.u32 683565275, %v2930
  %v2934 = vshrl.u32 2475754826, %v2931
  %v2935 = vor.u32 %v2933, %v2934
  %v2936 = vshll.u32 2475754826, %v2930
  %v2937 = vshrl.u32 2131351028, %v2931
  %v2938 = vor.u32 %v2936, %v2937
  %v2939 = vshll.u32 2131351028, %v2930
  %v2940 = vshrl.u32 2102212464, %v2931
  %v2941 = vor.u32 %v2939, %v2940
  %v2942 = vshll.u32 2102212464, %v2930
  %v2943 = vshrl.u32 920167782, %v2931
  %v2944 = vor.u32 %v2942, %v2943
  %v2945 = vshll.u32 920167782, %v2930
  %v2946 = vshrl.u32 1326507024, %v2931
  %v2947 = vor.u32 %v2945, %v2946
  %vm2948 = vcmp.lt.s32.totalorder %v2929, 1
  %vm2949 = vcmp.lt.s32.totalorder %v2929, 2
  %vm2950 = vcmp.lt.s32.totalorder %v2929, 3
  %vm2951 = vcmp.lt.s32.totalorder %v2929, 4
  %v2952 = vsel %vm2948, %v2932, %v2935
  %v2953 = vsel %vm2951, %v2941, 2102212464
  %v2954 = vsel %vm2950, %v2938, %v2953
  %v2955 = vsel %vm2949, %v2952, %v2954
  %v2956 = vsel %vm2948, %v2935, %v2938
  %v2957 = vsel %vm2951, %v2944, 920167782
  %v2958 = vsel %vm2950, %v2941, %v2957
  %v2959 = vsel %vm2949, %v2956, %v2958
  %v2960 = vsel %vm2948, %v2938, %v2941
  %v2961 = vsel %vm2951, %v2947, 1326507024
  %v2962 = vsel %vm2950, %v2944, %v2961
  %v2963 = vsel %vm2949, %v2960, %v2962
  %v2964 = vshll.u32 %v2924, 8
  %v2965 = vmul.u32.u64.compose %v2964, %v2963
  %v2966 = vextract.low.u32 %v2965
  %v2967 = vextract.high.u32 %v2965
  %v2968 = vmul.u32.u64.compose %v2964, %v2959
  %v2969 = vextract.low.u32 %v2968
  %v2970 = vextract.high.u32 %v2968
  %v2971 = vmul.u32 %v2964, %v2955
  %v2972 = vadd.s32 %v2967, %v2969
  %vm2973 = vc.u32 %v2967, %v2969
  %v2974 = vadd.s32 %v2970, 1
  %v2975 = vsel %vm2973, %v2974, %v2970
  %v2976 = vadd.s32 %v2971, %v2975
  %v2977 = vadd.s32 %v2976, 536870912
  %v2978 = vshrl.u32 %v2977, 30
  %v2979 = vshll.u32 %v2978, 30
  %v2980 = vsub.s32 %v2976, %v2979
  %vm2981 = vcmp.lt.s32.totalorder %v2980, 0
  %v2982 = vsub.s32 0, %v2980
  %v2983 = vsel %vm2981, %v2982, %v2980
  %v2984 = vclz %v2983
  %v2985 = vsub.s32 %v2984, 2
  %vm2986 = vcmp.gt.s32.totalorder 0, %v2985
  %v2987 = vsel %vm2986, 0, %v2985
  %v2988 = vsub.s32 32, %v2987
  %v2989 = vshll.u32 %v2980, %v2987
  %v2990 = vshrl.u32 %v2972, %v2988
  %v2991 = vor.u32 %v2989, %v2990
  %v2992 = vsub.s32 4294967266, %v2987
  %v2993 = vadd.s32 %v2992, 127
  %v2994 = vshll.u32 %v2993, 23
  %v2995 = vor.u32 4788187, %v2994
  %v2996 = vand.u32 2147483647, %v2995
  %v2998 = vcvt.s32.f32 %v2991
  %v2999 = vmul.f32 %v2998, %v2996
  %v3000 = vxor.u32 %v2999, 2147483648
  %v3001 = vsel %vm2918, %v3000, %v2999
  %v3002 = vsub.s32 4, %v2978
  %v3003 = vsel %vm2918, %v3002, %v2978
  %v3004 = vsel %vm2917, %v1768, %v3001
  %v3005 = vsel %vm2917, 0, %v3003
  %v3006 = vcosq.f32.pop %v3004
  %v3007 = vsinq.f32.pop %v3004
  %vm3008 = vweird.f32 %v1768
  %v3009 = vadd.s32 %v3005, 3
  %v3010 = vand.u32 %v3009, 3
  %vm3011 = vcmp.lt.s32.totalorder %v3010, 2
  %vm3012 = vcmp.eq.s32.totalorder %v3010, 0
  %v3013 = vxor.u32 %v3007, 2147483648
  %v3014 = vsel %vm3012, %v3006, %v3013
  %vm3015 = vcmp.eq.s32.totalorder %v3010, 2
  %v3016 = vxor.u32 %v3006, 2147483648
  %v3017 = vsel %vm3015, %v3016, %v3007
  %v3018 = vsel %vm3011, %v3014, %v3017
  %v3019 = vsel %vm3008, nan, %v3018
  %v3020 = vand.u32 2147483647, %v1769
  %vm3021 = vcmp.le.f32.partialorder %v3020, 0.7853982
  %vm3022 = vcmp.lt.s32.totalorder %v1769, 0
  %v3023 = vand.u32 %v1769, 2139095040
  %v3024 = vshrl.u32 %v3023, 23
  %v3025 = vsub.s32 %v3024, 127
  %v3026 = vand.u32 2147483647, %v1769
  %v3027 = vand.u32 %v3026, 8388607
  %v3028 = vor.u32 %v3027, 8388608
  %v3029 = vsub.s32 0, %v3028
  %v3030 = vadd.s32 %v3025, 1
  %vm3031 = vcmp.gt.s32.totalorder %v3030, 0
  %v3032 = vsel %vm3031, %v3030, 0
  %v3033 = vshrl.u32 %v3032, 5
  %v3034 = vand.u32 %v3032, 31
  %v3035 = vsub.s32 32, %v3034
  %v3036 = vshrl.u32 683565275, %v3035
  %v3037 = vshll.u32 683565275, %v3034
  %v3038 = vshrl.u32 2475754826, %v3035
  %v3039 = vor.u32 %v3037, %v3038
  %v3040 = vshll.u32 2475754826, %v3034
  %v3041 = vshrl.u32 2131351028, %v3035
  %v3042 = vor.u32 %v3040, %v3041
  %v3043 = vshll.u32 2131351028, %v3034
  %v3044 = vshrl.u32 2102212464, %v3035
  %v3045 = vor.u32 %v3043, %v3044
  %v3046 = vshll.u32 2102212464, %v3034
  %v3047 = vshrl.u32 920167782, %v3035
  %v3048 = vor.u32 %v3046, %v3047
  %v3049 = vshll.u32 920167782, %v3034
  %v3050 = vshrl.u32 1326507024, %v3035
  %v3051 = vor.u32 %v3049, %v3050
  %vm3052 = vcmp.lt.s32.totalorder %v3033, 1
  %vm3053 = vcmp.lt.s32.totalorder %v3033, 2
  %vm3054 = vcmp.lt.s32.totalorder %v3033, 3
  %vm3055 = vcmp.lt.s32.totalorder %v3033, 4
  %v3056 = vsel %vm3052, %v3036, %v3039
  %v3057 = vsel %vm3055, %v3045, 2102212464
  %v3058 = vsel %vm3054, %v3042, %v3057
  %v3059 = vsel %vm3053, %v3056, %v3058
  %v3060 = vsel %vm3052, %v3039, %v3042
  %v3061 = vsel %vm3055, %v3048, 920167782
  %v3062 = vsel %vm3054, %v3045, %v3061
  %v3063 = vsel %vm3053, %v3060, %v3062
  %v3064 = vsel %vm3052, %v3042, %v3045
  %v3065 = vsel %vm3055, %v3051, 1326507024
  %v3066 = vsel %vm3054, %v3048, %v3065
  %v3067 = vsel %vm3053, %v3064, %v3066
  %v3068 = vshll.u32 %v3028, 8
  %v3069 = vmul.u32.u64.compose %v3068, %v3067
  %v3070 = vextract.low.u32 %v3069
  %v3071 = vextract.high.u32 %v3069
  %v3072 = vmul.u32.u64.compose %v3068, %v3063
  %v3073 = vextract.low.u32 %v3072
  %v3074 = vextract.high.u32 %v3072
  %v3075 = vmul.u32 %v3068, %v3059
  %v3076 = vadd.s32 %v3071, %v3073
  %vm3077 = vc.u32 %v3071, %v3073
  %v3078 = vadd.s32 %v3074, 1
  %v3079 = vsel %vm3077, %v3078, %v3074
  %v3080 = vadd.s32 %v3075, %v3079
  %v3081 = vadd.s32 %v3080, 536870912
  %v3082 = vshrl.u32 %v3081, 30
  %v3083 = vshll.u32 %v3082, 30
  %v3084 = vsub.s32 %v3080, %v3083
  %vm3085 = vcmp.lt.s32.totalorder %v3084, 0
  %v3086 = vsub.s32 0, %v3084
  %v3087 = vsel %vm3085, %v3086, %v3084
  %v3088 = vclz %v3087
  %v3089 = vsub.s32 %v3088, 2
  %vm3090 = vcmp.gt.s32.totalorder 0, %v3089
  %v3091 = vsel %vm3090, 0, %v3089
  %v3092 = vsub.s32 32, %v3091
  %v3093 = vshll.u32 %v3084, %v3091
  %v3094 = vshrl.u32 %v3076, %v3092
  %v3095 = vor.u32 %v3093, %v3094
  %v3096 = vsub.s32 4294967266, %v3091
  %v3097 = vadd.s32 %v3096, 127
  %v3098 = vshll.u32 %v3097, 23
  %v3099 = vor.u32 4788187, %v3098
  %v3100 = vand.u32 2147483647, %v3099
  %v3102 = vcvt.s32.f32 %v3095
  %v3103 = vmul.f32 %v3102, %v3100
  %v3104 = vxor.u32 %v3103, 2147483648
  %v3105 = vsel %vm3022, %v3104, %v3103
  %v3106 = vsub.s32 4, %v3082
  %v3107 = vsel %vm3022, %v3106, %v3082
  %v3108 = vsel %vm3021, %v1769, %v3105
  %v3109 = vsel %vm3021, 0, %v3107
  %v3110 = vcosq.f32.pop %v3108
  %v3111 = vsinq.f32.pop %v3108
  %vm3112 = vweird.f32 %v1769
  %v3113 = vadd.s32 %v3109, 3
  %v3114 = vand.u32 %v3113, 3
  %vm3115 = vcmp.lt.s32.totalorder %v3114, 2
  %vm3116 = vcmp.eq.s32.totalorder %v3114, 0
  %v3117 = vxor.u32 %v3111, 2147483648
  %v3118 = vsel %vm3116, %v3110, %v3117
  %vm3119 = vcmp.eq.s32.totalorder %v3114, 2
  %v3120 = vxor.u32 %v3110, 2147483648
  %v3121 = vsel %vm3119, %v3120, %v3111
  %v3122 = vsel %vm3115, %v3118, %v3121
  %v3123 = vsel %vm3112, nan, %v3122
  %v3124 = vand.u32 2147483647, %v1770
  %vm3125 = vcmp.le.f32.partialorder %v3124, 0.7853982
  %vm3126 = vcmp.lt.s32.totalorder %v1770, 0
  %v3127 = vand.u32 %v1770, 2139095040
  %v3128 = vshrl.u32 %v3127, 23
  %v3129 = vsub.s32 %v3128, 127
  %v3130 = vand.u32 2147483647, %v1770
  %v3131 = vand.u32 %v3130, 8388607
  %v3132 = vor.u32 %v3131, 8388608
  %v3133 = vsub.s32 0, %v3132
  %v3134 = vadd.s32 %v3129, 1
  %vm3135 = vcmp.gt.s32.totalorder %v3134, 0
  %v3136 = vsel %vm3135, %v3134, 0
  %v3137 = vshrl.u32 %v3136, 5
  %v3138 = vand.u32 %v3136, 31
  %v3139 = vsub.s32 32, %v3138
  %v3140 = vshrl.u32 683565275, %v3139
  %v3141 = vshll.u32 683565275, %v3138
  %v3142 = vshrl.u32 2475754826, %v3139
  %v3143 = vor.u32 %v3141, %v3142
  %v3144 = vshll.u32 2475754826, %v3138
  %v3145 = vshrl.u32 2131351028, %v3139
  %v3146 = vor.u32 %v3144, %v3145
  %v3147 = vshll.u32 2131351028, %v3138
  %v3148 = vshrl.u32 2102212464, %v3139
  %v3149 = vor.u32 %v3147, %v3148
  %v3150 = vshll.u32 2102212464, %v3138
  %v3151 = vshrl.u32 920167782, %v3139
  %v3152 = vor.u32 %v3150, %v3151
  %v3153 = vshll.u32 920167782, %v3138
  %v3154 = vshrl.u32 1326507024, %v3139
  %v3155 = vor.u32 %v3153, %v3154
  %vm3156 = vcmp.lt.s32.totalorder %v3137, 1
  %vm3157 = vcmp.lt.s32.totalorder %v3137, 2
  %vm3158 = vcmp.lt.s32.totalorder %v3137, 3
  %vm3159 = vcmp.lt.s32.totalorder %v3137, 4
  %v3160 = vsel %vm3156, %v3140, %v3143
  %v3161 = vsel %vm3159, %v3149, 2102212464
  %v3162 = vsel %vm3158, %v3146, %v3161
  %v3163 = vsel %vm3157, %v3160, %v3162
  %v3164 = vsel %vm3156, %v3143, %v3146
  %v3165 = vsel %vm3159, %v3152, 920167782
  %v3166 = vsel %vm3158, %v3149, %v3165
  %v3167 = vsel %vm3157, %v3164, %v3166
  %v3168 = vsel %vm3156, %v3146, %v3149
  %v3169 = vsel %vm3159, %v3155, 1326507024
  %v3170 = vsel %vm3158, %v3152, %v3169
  %v3171 = vsel %vm3157, %v3168, %v3170
  %v3172 = vshll.u32 %v3132, 8
  %v3173 = vmul.u32.u64.compose %v3172, %v3171
  %v3174 = vextract.low.u32 %v3173
  %v3175 = vextract.high.u32 %v3173
  %v3176 = vmul.u32.u64.compose %v3172, %v3167
  %v3177 = vextract.low.u32 %v3176
  %v3178 = vextract.high.u32 %v3176
  %v3179 = vmul.u32 %v3172, %v3163
  %v3180 = vadd.s32 %v3175, %v3177
  %vm3181 = vc.u32 %v3175, %v3177
  %v3182 = vadd.s32 %v3178, 1
  %v3183 = vsel %vm3181, %v3182, %v3178
  %v3184 = vadd.s32 %v3179, %v3183
  %v3185 = vadd.s32 %v3184, 536870912
  %v3186 = vshrl.u32 %v3185, 30
  %v3187 = vshll.u32 %v3186, 30
  %v3188 = vsub.s32 %v3184, %v3187
  %vm3189 = vcmp.lt.s32.totalorder %v3188, 0
  %v3190 = vsub.s32 0, %v3188
  %v3191 = vsel %vm3189, %v3190, %v3188
  %v3192 = vclz %v3191
  %v3193 = vsub.s32 %v3192, 2
  %vm3194 = vcmp.gt.s32.totalorder 0, %v3193
  %v3195 = vsel %vm3194, 0, %v3193
  %v3196 = vsub.s32 32, %v3195
  %v3197 = vshll.u32 %v3188, %v3195
  %v3198 = vshrl.u32 %v3180, %v3196
  %v3199 = vor.u32 %v3197, %v3198
  %v3200 = vsub.s32 4294967266, %v3195
  %v3201 = vadd.s32 %v3200, 127
  %v3202 = vshll.u32 %v3201, 23
  %v3203 = vor.u32 4788187, %v3202
  %v3204 = vand.u32 2147483647, %v3203
  %v3206 = vcvt.s32.f32 %v3199
  %v3207 = vmul.f32 %v3206, %v3204
  %v3208 = vxor.u32 %v3207, 2147483648
  %v3209 = vsel %vm3126, %v3208, %v3207
  %v3210 = vsub.s32 4, %v3186
  %v3211 = vsel %vm3126, %v3210, %v3186
  %v3212 = vsel %vm3125, %v1770, %v3209
  %v3213 = vsel %vm3125, 0, %v3211
  %v3214 = vcosq.f32.pop %v3212
  %v3215 = vsinq.f32.pop %v3212
  %vm3216 = vweird.f32 %v1770
  %v3217 = vadd.s32 %v3213, 3
  %v3218 = vand.u32 %v3217, 3
  %vm3219 = vcmp.lt.s32.totalorder %v3218, 2
  %vm3220 = vcmp.eq.s32.totalorder %v3218, 0
  %v3221 = vxor.u32 %v3215, 2147483648
  %v3222 = vsel %vm3220, %v3214, %v3221
  %vm3223 = vcmp.eq.s32.totalorder %v3218, 2
  %v3224 = vxor.u32 %v3214, 2147483648
  %v3225 = vsel %vm3223, %v3224, %v3215
  %v3226 = vsel %vm3219, %v3222, %v3225
  %v3227 = vsel %vm3216, nan, %v3226
  %v3228 = vand.u32 2147483647, %v1771
  %vm3229 = vcmp.le.f32.partialorder %v3228, 0.7853982
  %vm3230 = vcmp.lt.s32.totalorder %v1771, 0
  %v3231 = vand.u32 %v1771, 2139095040
  %v3232 = vshrl.u32 %v3231, 23
  %v3233 = vsub.s32 %v3232, 127
  %v3234 = vand.u32 2147483647, %v1771
  %v3235 = vand.u32 %v3234, 8388607
  %v3236 = vor.u32 %v3235, 8388608
  %v3237 = vsub.s32 0, %v3236
  %v3238 = vadd.s32 %v3233, 1
  %vm3239 = vcmp.gt.s32.totalorder %v3238, 0
  %v3240 = vsel %vm3239, %v3238, 0
  %v3241 = vshrl.u32 %v3240, 5
  %v3242 = vand.u32 %v3240, 31
  %v3243 = vsub.s32 32, %v3242
  %v3244 = vshrl.u32 683565275, %v3243
  %v3245 = vshll.u32 683565275, %v3242
  %v3246 = vshrl.u32 2475754826, %v3243
  %v3247 = vor.u32 %v3245, %v3246
  %v3248 = vshll.u32 2475754826, %v3242
  %v3249 = vshrl.u32 2131351028, %v3243
  %v3250 = vor.u32 %v3248, %v3249
  %v3251 = vshll.u32 2131351028, %v3242
  %v3252 = vshrl.u32 2102212464, %v3243
  %v3253 = vor.u32 %v3251, %v3252
  %v3254 = vshll.u32 2102212464, %v3242
  %v3255 = vshrl.u32 920167782, %v3243
  %v3256 = vor.u32 %v3254, %v3255
  %v3257 = vshll.u32 920167782, %v3242
  %v3258 = vshrl.u32 1326507024, %v3243
  %v3259 = vor.u32 %v3257, %v3258
  %vm3260 = vcmp.lt.s32.totalorder %v3241, 1
  %vm3261 = vcmp.lt.s32.totalorder %v3241, 2
  %vm3262 = vcmp.lt.s32.totalorder %v3241, 3
  %vm3263 = vcmp.lt.s32.totalorder %v3241, 4
  %v3264 = vsel %vm3260, %v3244, %v3247
  %v3265 = vsel %vm3263, %v3253, 2102212464
  %v3266 = vsel %vm3262, %v3250, %v3265
  %v3267 = vsel %vm3261, %v3264, %v3266
  %v3268 = vsel %vm3260, %v3247, %v3250
  %v3269 = vsel %vm3263, %v3256, 920167782
  %v3270 = vsel %vm3262, %v3253, %v3269
  %v3271 = vsel %vm3261, %v3268, %v3270
  %v3272 = vsel %vm3260, %v3250, %v3253
  %v3273 = vsel %vm3263, %v3259, 1326507024
  %v3274 = vsel %vm3262, %v3256, %v3273
  %v3275 = vsel %vm3261, %v3272, %v3274
  %v3276 = vshll.u32 %v3236, 8
  %v3277 = vmul.u32.u64.compose %v3276, %v3275
  %v3278 = vextract.low.u32 %v3277
  %v3279 = vextract.high.u32 %v3277
  %v3280 = vmul.u32.u64.compose %v3276, %v3271
  %v3281 = vextract.low.u32 %v3280
  %v3282 = vextract.high.u32 %v3280
  %v3283 = vmul.u32 %v3276, %v3267
  %v3284 = vadd.s32 %v3279, %v3281
  %vm3285 = vc.u32 %v3279, %v3281
  %v3286 = vadd.s32 %v3282, 1
  %v3287 = vsel %vm3285, %v3286, %v3282
  %v3288 = vadd.s32 %v3283, %v3287
  %v3289 = vadd.s32 %v3288, 536870912
  %v3290 = vshrl.u32 %v3289, 30
  %v3291 = vshll.u32 %v3290, 30
  %v3292 = vsub.s32 %v3288, %v3291
  %vm3293 = vcmp.lt.s32.totalorder %v3292, 0
  %v3294 = vsub.s32 0, %v3292
  %v3295 = vsel %vm3293, %v3294, %v3292
  %v3296 = vclz %v3295
  %v3297 = vsub.s32 %v3296, 2
  %vm3298 = vcmp.gt.s32.totalorder 0, %v3297
  %v3299 = vsel %vm3298, 0, %v3297
  %v3300 = vsub.s32 32, %v3299
  %v3301 = vshll.u32 %v3292, %v3299
  %v3302 = vshrl.u32 %v3284, %v3300
  %v3303 = vor.u32 %v3301, %v3302
  %v3304 = vsub.s32 4294967266, %v3299
  %v3305 = vadd.s32 %v3304, 127
  %v3306 = vshll.u32 %v3305, 23
  %v3307 = vor.u32 4788187, %v3306
  %v3308 = vand.u32 2147483647, %v3307
  %v3310 = vcvt.s32.f32 %v3303
  %v3311 = vmul.f32 %v3310, %v3308
  %v3312 = vxor.u32 %v3311, 2147483648
  %v3313 = vsel %vm3230, %v3312, %v3311
  %v3314 = vsub.s32 4, %v3290
  %v3315 = vsel %vm3230, %v3314, %v3290
  %v3316 = vsel %vm3229, %v1771, %v3313
  %v3317 = vsel %vm3229, 0, %v3315
  %v3318 = vcosq.f32.pop %v3316
  %v3319 = vsinq.f32.pop %v3316
  %vm3320 = vweird.f32 %v1771
  %v3321 = vadd.s32 %v3317, 3
  %v3322 = vand.u32 %v3321, 3
  %vm3323 = vcmp.lt.s32.totalorder %v3322, 2
  %vm3324 = vcmp.eq.s32.totalorder %v3322, 0
  %v3325 = vxor.u32 %v3319, 2147483648
  %v3326 = vsel %vm3324, %v3318, %v3325
  %vm3327 = vcmp.eq.s32.totalorder %v3322, 2
  %v3328 = vxor.u32 %v3318, 2147483648
  %v3329 = vsel %vm3327, %v3328, %v3319
  %v3330 = vsel %vm3323, %v3326, %v3329
  %v3331 = vsel %vm3320, nan, %v3330
  %v3347 = vcombine.low %v1875, %v1979
  %v3348 = vcombine.low %v2083, %v2187
  %v3349 = vcombine.low %v2291, %v2395
  %v3350 = vcombine.low %v2499, %v2603
  %v3352 = vunpack.c.l.s4 1966171168
  %v3353 = vunpack.c.0.s8 %v3352
  %v3354 = vlaneseq
  %v3355 = vshrl.u32 %v3354, 7
  %v3356 = vsub.s32 %v3353, %v3355
  %v3357 = vrot.slane %v3347, %v3356
  %v3359 = vunpack.c.l.s4 1966171168
  %v3360 = vunpack.c.0.s8 %v3359
  %v3361 = vlaneseq
  %v3362 = vshrl.u32 %v3361, 7
  %v3363 = vsub.s32 %v3360, %v3362
  %v3364 = vrot.slane %v3348, %v3363
  %v3366 = vunpack.c.l.s4 1966171168
  %v3367 = vunpack.c.0.s8 %v3366
  %v3368 = vlaneseq
  %v3369 = vshrl.u32 %v3368, 7
  %v3370 = vsub.s32 %v3367, %v3369
  %v3371 = vrot.slane %v3349, %v3370
  %v3373 = vunpack.c.l.s4 1966171168
  %v3374 = vunpack.c.0.s8 %v3373
  %v3375 = vlaneseq
  %v3376 = vshrl.u32 %v3375, 7
  %v3377 = vsub.s32 %v3374, %v3376
  %v3378 = vrot.slane %v3350, %v3377
  %v3379 = vcombine.low %v3357, %v3364
  %v3380 = vcombine.low %v3371, %v3378
  %v3382 = vunpack.c.l.s4 1966171168
  %v3383 = vunpack.c.0.s8 %v3382
  %v3384 = vlaneseq
  %v3385 = vshrl.u32 %v3384, 7
  %v3386 = vsub.s32 %v3383, %v3385
  %v3387 = vrot.slane %v3379, %v3386
  %v3389 = vunpack.c.l.s4 1966171168
  %v3390 = vunpack.c.0.s8 %v3389
  %v3391 = vlaneseq
  %v3392 = vshrl.u32 %v3391, 7
  %v3393 = vsub.s32 %v3390, %v3392
  %v3394 = vrot.slane %v3380, %v3393
  %v3395 = vcombine.low %v3387, %v3394
  %v3396 = vcombine.low %v2707, %v2811
  %v3397 = vcombine.low %v2915, %v3019
  %v3398 = vcombine.low %v3123, %v3227
  %v3400 = vunpack.c.l.s4 1966171168
  %v3401 = vunpack.c.0.s8 %v3400
  %v3402 = vlaneseq
  %v3403 = vshrl.u32 %v3402, 7
  %v3404 = vsub.s32 %v3401, %v3403
  %v3405 = vrot.slane %v3396, %v3404
  %v3407 = vunpack.c.l.s4 1966171168
  %v3408 = vunpack.c.0.s8 %v3407
  %v3409 = vlaneseq
  %v3410 = vshrl.u32 %v3409, 7
  %v3411 = vsub.s32 %v3408, %v3410
  %v3412 = vrot.slane %v3397, %v3411
  %v3414 = vunpack.c.l.s4 1966171168
  %v3415 = vunpack.c.0.s8 %v3414
  %v3416 = vlaneseq
  %v3417 = vshrl.u32 %v3416, 7
  %v3418 = vsub.s32 %v3415, %v3417
  %v3419 = vrot.slane %v3398, %v3418
  %v3421 = vunpack.c.l.s4 1966171168
  %v3422 = vunpack.c.0.s8 %v3421
  %v3423 = vlaneseq
  %v3424 = vshrl.u32 %v3423, 7
  %v3425 = vsub.s32 %v3422, %v3424
  %v3426 = vrot.slane %v3331, %v3425
  %v3427 = vcombine.low %v3405, %v3412
  %v3428 = vcombine.low %v3419, %v3426
  %v3430 = vunpack.c.l.s4 1966171168
  %v3431 = vunpack.c.0.s8 %v3430
  %v3432 = vlaneseq
  %v3433 = vshrl.u32 %v3432, 7
  %v3434 = vsub.s32 %v3431, %v3433
  %v3435 = vrot.slane %v3427, %v3434
  %v3437 = vunpack.c.l.s4 1966171168
  %v3438 = vunpack.c.0.s8 %v3437
  %v3439 = vlaneseq
  %v3440 = vshrl.u32 %v3439, 7
  %v3441 = vsub.s32 %v3438, %v3440
  %v3442 = vrot.slane %v3428, %v3441
  %v3443 = vcombine.low %v3435, %v3442
  %3446 = vst [vmem:[%s4] sm:$0xff] %v3395
  %v3447 = vlaneseq
  %vm3448 = vcmp.ge.s32.totalorder %v3447, 0
  %vm3449 = vcmp.lt.s32.totalorder %v3447, 896
  %vm3450 = vmand %vm3448, %vm3449
  %3451 = vst.msk [vmem:[%s4 + $0x8] sm:$0x7f] %vm3450, %v3443
  // Predicated region
  $region18: #{position_embedder.1} parent=0 // pred_check
    _
  $region19: #{position_embedder.1} parent=0 // pred_check_branch
    %3453 = sbr.rel (0) target = $region21
  $region20: #{position_embedder.1} parent=0 // pred_region
    _
  $region21: #{position_embedder.1} parent=0 // pred_fallthru
    _
  // Predicated region
  $region22: #{position_embedder.1} parent=0 // pred_check
    _
  $region23: #{position_embedder.1} parent=0 // pred_check_branch
    %3455 = sbr.rel (0) target = $region25
  $region24: #{position_embedder.1} parent=0 // pred_region
    _
  $region25: #{position_embedder.1} parent=0 // pred_fallthru
    _

</llo_original>
